<compile_context>
chip_gen: v7x
topology: tpu7x:2x2x1
jax: 0.10.0
libtpu: 0.0.40
codegen_flags: <defaults>
</compile_context>

<pallas_src>
import functools
import math

import jax
import jax.numpy as jnp
from jax.experimental import pallas as pl
from jax.experimental.pallas import tpu as pltpu


_VMEM_LIMIT = 32 * 1024 * 1024   # safe on v5e/v6e (128 MiB) and v7x (64 MiB)
_TM_CAP = 256                    # row-tile cap   (multiple of 8)
_TN_CAP = 512                    # col-tile cap   (multiple of 128)
_TK_CAP = 1024                   # K-tile cap     (multiple of 128)


def _round_up(x, m):
    return (x + m - 1) // m * m


def _pick_tile(dim, cap, quantum):
    """Largest quantum-aligned tile <= cap that divides `dim`, else full dim."""
    if dim <= cap:
        return dim
    t = (cap // quantum) * quantum
    while t >= quantum:
        if dim % t == 0:
            return t
        t -= quantum
    return dim


# --------------------------- in-kernel helpers ------------------------------

def _erf(x):
    # Abramowitz & Stegun 7.1.26, |err| <= 1.5e-7 (fp32-level), built only from
    # ops with guaranteed Mosaic lowerings (exp/abs/where/mul/div).  Keeps
    # nn.GELU()'s exact (erf-based) semantics to fp32 accuracy.
    a1, a2, a3, a4, a5 = (0.254829592, -0.284496736, 1.421413741,
                          -1.453152027, 1.061405429)
    p = 0.3275911
    sgn = jnp.where(x >= 0.0, 1.0, -1.0)
    ax = jnp.abs(x)
    t = 1.0 / (1.0 + p * ax)
    poly = ((((a5 * t + a4) * t + a3) * t + a2) * t + a1) * t
    return sgn * (1.0 - poly * jnp.exp(-ax * ax))


def _gelu_exact(x):
    return 0.5 * x * (1.0 + _erf(x * 0.7071067811865476))


# ------------------------- fused linear (matmul) kernel ----------------------

def _make_linear_kernel(*, ln, gelu, residual):
    """y = [LN(x)] @ W + b [, GELU] [, + residual].

    Ref order: x, [ln_gamma, ln_beta], W(bf16), bias, [residual], out, acc.
    Grid is (nm, nn, nk); the fp32 accumulator lives in VMEM scratch, is
    initialized with the broadcast bias at k==0 and finalized at k==nk-1.
    """
    def kernel(*refs):
        i = 0
        x_ref = refs[i]; i += 1
        if ln:
            g_ref, bln_ref = refs[i], refs[i + 1]; i += 2
        w_ref, b_ref = refs[i], refs[i + 1]; i += 2
        if residual:
            res_ref = refs[i]; i += 1
        o_ref, acc_ref = refs[i], refs[i + 1]

        k = pl.program_id(2)
        nk = pl.num_programs(2)

        x = x_ref[...]                                   # fp32 activations
        if ln:
            mean = jnp.mean(x, axis=-1, keepdims=True)
            xc = x - mean
            var = jnp.mean(xc * xc, axis=-1, keepdims=True)
            x = xc * jax.lax.rsqrt(var + 1e-5) * g_ref[...] + bln_ref[...]

        @pl.when(k == 0)
        def _init():
            acc_ref[...] = jnp.broadcast_to(b_ref[...], acc_ref.shape)

        # bf16 MXU operands, fp32 accumulation.
        acc_ref[...] += jnp.dot(x.astype(jnp.bfloat16), w_ref[...],
                                preferred_element_type=jnp.float32)

        @pl.when(k == nk - 1)
        def _fin():
            y = acc_ref[...]
            if gelu:
                y = _gelu_exact(y)
            if residual:
                y = y + res_ref[...]
            o_ref[...] = y.astype(o_ref.dtype)

    return kernel


def fused_linear(x2d, w, b, *, ln=None, gelu=False, residual=None):
    """x2d (M,K) fp32, w (K,N) bf16, b (N,) fp32 -> (M,N) fp32."""
    m, kdim = x2d.shape
    n = w.shape[1]

    # M tiling (zero-pad rows only when tiling kicks in).
    if m <= _TM_CAP:
        mp, tm = m, m
    else:
        mp, tm = _round_up(m, _TM_CAP), _TM_CAP
    nm = mp // tm

    tn = _pick_tile(n, _TN_CAP, 128)
    nn_blk = n // tn

    # LayerNorm needs the whole feature row -> K stays in one block.
    tk = kdim if ln is not None else _pick_tile(kdim, _TK_CAP, 128)
    nk = kdim // tk

    x_in, res = x2d, residual
    if mp != m:
        x_in = jnp.pad(x_in, ((0, mp - m), (0, 0)))
        if res is not None:
            res = jnp.pad(res, ((0, mp - m), (0, 0)))

    in_specs = [pl.BlockSpec((tm, tk), lambda i, j, k: (i, k))]
    args = [x_in]
    if ln is not None:
        g, bln = ln
        in_specs += [pl.BlockSpec((1, tk), lambda i, j, k: (0, k)),
                     pl.BlockSpec((1, tk), lambda i, j, k: (0, k))]
        args += [g.reshape(1, kdim).astype(jnp.float32),
                 bln.reshape(1, kdim).astype(jnp.float32)]
    in_specs += [pl.BlockSpec((tk, tn), lambda i, j, k: (k, j)),
                 pl.BlockSpec((1, tn), lambda i, j, k: (0, j))]
    args += [w, b.reshape(1, n).astype(jnp.float32)]
    if res is not None:
        in_specs.append(pl.BlockSpec((tm, tn), lambda i, j, k: (i, j)))
        args.append(res)

    out = pl.pallas_call(
        _make_linear_kernel(ln=ln is not None, gelu=gelu,
                            residual=res is not None),
        grid=(nm, nn_blk, nk),
        in_specs=in_specs,
        out_specs=pl.BlockSpec((tm, tn), lambda i, j, k: (i, j)),
        out_shape=jax.ShapeDtypeStruct((mp, n), jnp.float32),
        scratch_shapes=[pltpu.VMEM((tm, tn), jnp.float32)],
        compiler_params=pltpu.CompilerParams(
            dimension_semantics=("parallel", "parallel", "arbitrary"),
            vmem_limit_bytes=_VMEM_LIMIT),
    )(*args)
    return out[:m] if mp != m else out


def linear3d(x, w, b, *, ln=None, gelu=False, residual=None):
    bsz, s, _ = x.shape
    res2 = residual.reshape(bsz * s, -1) if residual is not None else None
    y = fused_linear(x.reshape(bsz * s, -1), w, b, ln=ln, gelu=gelu,
                     residual=res2)
    return y.reshape(bsz, s, -1)


# ----------------------------- attention kernels -----------------------------

def _mha_core(q, k, v, o_ref):
    # q: (nh, Sq, dh), k/v: (nh, Sk, dh); q already carries the 1/sqrt(dh) scale
    # (folded into the Q projection).  bf16 MXU operands, fp32 softmax.
    qb = q.astype(jnp.bfloat16)
    kb = k.astype(jnp.bfloat16)
    vb = v.astype(jnp.bfloat16)
    s = jnp.einsum('hqd,hkd->hqk', qb, kb, preferred_element_type=jnp.float32)
    m = jnp.max(s, axis=-1, keepdims=True)
    p = jnp.exp(s - m)
    denom = jnp.sum(p, axis=-1, keepdims=True)
    p = p * pl.reciprocal(denom, approx=True)
    o = jnp.einsum('hqk,hkd->hqd', p.astype(jnp.bfloat16), vb,
                   preferred_element_type=jnp.float32)
    o_ref[0] = o.astype(o_ref.dtype)


def _make_self_attn_kernel(nh):
    def kernel(qkv_ref, o_ref):
        qkv = qkv_ref[0]                      # (3*nh, Sq, dh)
        _mha_core(qkv[:nh], qkv[nh:2 * nh], qkv[2 * nh:], o_ref)
    return kernel


def _make_cross_attn_kernel(nh):
    def kernel(q_ref, kv_ref, o_ref):
        kv = kv_ref[0]                        # (2*nh, Sk, dh)
        _mha_core(q_ref[0], kv[:nh], kv[nh:], o_ref)
    return kernel


# TODO(synk): the (B,S,nh,dh)->(B,nh,S,dh) head relayouts below are still XLA
# transposes (2-3 small HBM passes per MHA instead of 4 before); fully fusing
# them would require an in-kernel relayout of the fused-QKV output.

def pallas_self_attention(qkv, num_heads):
    b, s, d3 = qkv.shape
    d = d3 // 3
    dh = d // num_heads
    qkv_h = qkv.reshape(b, s, 3 * num_heads, dh).transpose(0, 2, 1, 3)
    out = pl.pallas_call(
        _make_self_attn_kernel(num_heads),
        grid=(b,),
        in_specs=[pl.BlockSpec((1, 3 * num_heads, s, dh),
                               lambda i: (i, 0, 0, 0))],
        out_specs=pl.BlockSpec((1, num_heads, s, dh), lambda i: (i, 0, 0, 0)),
        out_shape=jax.ShapeDtypeStruct((b, num_heads, s, dh), jnp.float32),
        compiler_params=pltpu.CompilerParams(
            dimension_semantics=("parallel",),
            vmem_limit_bytes=_VMEM_LIMIT),
    )(qkv_h)
    return out.transpose(0, 2, 1, 3).reshape(b, s, d)


def pallas_cross_attention(q, kv, num_heads):
    b, sq, d = q.shape
    sk = kv.shape[1]
    dh = d // num_heads
    q_h = q.reshape(b, sq, num_heads, dh).transpose(0, 2, 1, 3)
    kv_h = kv.reshape(b, sk, 2 * num_heads, dh).transpose(0, 2, 1, 3)
    out = pl.pallas_call(
        _make_cross_attn_kernel(num_heads),
        grid=(b,),
        in_specs=[pl.BlockSpec((1, num_heads, sq, dh), lambda i: (i, 0, 0, 0)),
                  pl.BlockSpec((1, 2 * num_heads, sk, dh),
                               lambda i: (i, 0, 0, 0))],
        out_specs=pl.BlockSpec((1, num_heads, sq, dh), lambda i: (i, 0, 0, 0)),
        out_shape=jax.ShapeDtypeStruct((b, num_heads, sq, dh), jnp.float32),
        compiler_params=pltpu.CompilerParams(
            dimension_semantics=("parallel",),
            vmem_limit_bytes=_VMEM_LIMIT),
    )(q_h, kv_h)
    return out.transpose(0, 2, 1, 3).reshape(b, sq, d)


# --------------------------------- model ------------------------------------

def decoder_block(x, memory, p, num_heads):
    if 'xq_w' in p:                                   # use_context branch
        # LN1 fused into the (scaled) Q projection; LN_kv fused into the
        # composed (to_k o Wk | to_v o Wv) projection.
        q = linear3d(x, p['xq_w'], p['xq_b'], ln=(p['norm1_g'], p['norm1_b']))
        kv = linear3d(memory, p['xkv_w'], p['xkv_b'],
                      ln=(p['norm1_kv_g'], p['norm1_kv_b']))
        attn = pallas_cross_attention(q, kv, num_heads)
        # out-proj with residual fused; drop_path(eval) == identity.
        x = linear3d(attn, p['xo_w'], p['xo_b'], residual=x)

    # Self-attention: LN2 fused into the fused QKV projection (scale and the
    # +1e-8 query perturbation are folded into the Q weight/bias).
    qkv = linear3d(x, p['sqkv_w'], p['sqkv_b'], ln=(p['norm2_g'], p['norm2_b']))
    attn = pallas_self_attention(qkv, num_heads)
    x = linear3d(attn, p['so_w'], p['so_b'], residual=x)

    # MLP: LN3 + fc1 + exact GELU in one call; fc2 + residual in another.
    h = linear3d(x, p['fc1_w'], p['fc1_b'],
                 ln=(p['norm3_g'], p['norm3_b']), gelu=True)
    x = linear3d(h, p['fc2_w'], p['fc2_b'], residual=x)
    return x


def vit_context_forward(params, x, context, *, patch_size, num_heads):
    bsz, c, hh, ww = x.shape
    gh, gw = hh // patch_size, ww // patch_size
    d = params['pos_embed'].shape[-1]

    # PatchEmbed: Conv2d(k=stride=patch) == im2col reshape + Pallas matmul.
    patches = x.reshape(bsz, c, gh, patch_size, gw, patch_size)
    patches = patches.transpose(0, 2, 4, 1, 3, 5).reshape(
        bsz * gh * gw, c * patch_size * patch_size)
    tokens = fused_linear(patches, params['patch_w'],
                          params['patch_b']).reshape(bsz, gh * gw, d)

    tokens = tokens + params['pos_embed'][:, 1:, :]
    cls = params['cls_token'] + params['pos_embed'][:, :1, :]
    h = jnp.concatenate([jnp.broadcast_to(cls, (bsz, 1, d)), tokens], axis=1)

    for bp in params['blocks']:
        h = decoder_block(h, context, bp, num_heads)

    # global_pool == False: final LayerNorm fused into the head projection of
    # the CLS token (norm is per-token, so slicing first is identical).
    return fused_linear(h[:, 0, :], params['head_w'], params['head_b'],
                        ln=(params['norm_g'], params['norm_b']))


# --------------------------- parameter init / prep ---------------------------

def _xavier_uniform(key, fan_in, fan_out):
    limit = math.sqrt(6.0 / (fan_in + fan_out))
    return jax.random.uniform(key, (fan_in, fan_out), jnp.float32, -limit, limit)


def _init_mha(key, d_model):
    ks = jax.random.split(key, 4)
    z = jnp.zeros((d_model,), jnp.float32)
    return dict(
        wq=_xavier_uniform(ks[0], d_model, d_model), bq=z,
        wk=_xavier_uniform(ks[1], d_model, d_model), bk=z,
        wv=_xavier_uniform(ks[2], d_model, d_model), bv=z,
        wo=_xavier_uniform(ks[3], d_model, d_model), bo=z,
    )


def _init_block(key, d_model, context_dim, mlp_ratio, use_context):
    hidden = int(mlp_ratio * d_model)
    ks = jax.random.split(key, 6)
    p = dict(
        use_context=use_context,
        norm2_g=jnp.ones((d_model,), jnp.float32),
        norm2_b=jnp.zeros((d_model,), jnp.float32),
        norm3_g=jnp.ones((d_model,), jnp.float32),
        norm3_b=jnp.zeros((d_model,), jnp.float32),
        self_attn=_init_mha(ks[0], d_model),
        fc1_w=_xavier_uniform(ks[1], d_model, hidden),
        fc1_b=jnp.zeros((hidden,), jnp.float32),
        fc2_w=_xavier_uniform(ks[2], hidden, d_model),
        fc2_b=jnp.zeros((d_model,), jnp.float32),
    )
    if use_context:
        p.update(
            norm1_g=jnp.ones((d_model,), jnp.float32),
            norm1_b=jnp.zeros((d_model,), jnp.float32),
            norm1_kv_g=jnp.ones((context_dim,), jnp.float32),
            norm1_kv_b=jnp.zeros((context_dim,), jnp.float32),
            to_k_w=_xavier_uniform(ks[3], context_dim, d_model),
            to_k_b=jnp.zeros((d_model,), jnp.float32),
            to_v_w=_xavier_uniform(ks[4], context_dim, d_model),
            to_v_b=jnp.zeros((d_model,), jnp.float32),
            cross_attn=_init_mha(ks[5], d_model),
        )
    return p


def init_vit_context(key, *, img_size, patch_size, in_chans, num_classes,
                     embed_dim, depth, num_heads, mlp_ratio, context_dim,
                     use_context_layer):
    del num_heads
    num_patches = (img_size // patch_size) ** 2
    embed_len = num_patches + 1
    ks = jax.random.split(key, depth + 5)
    patch_dim = in_chans * patch_size * patch_size
    lim = 1.0 / math.sqrt(patch_dim)
    return dict(
        patch_w=jax.random.uniform(ks[0], (patch_dim, embed_dim), jnp.float32,
                                   -lim, lim),
        patch_b=jax.random.uniform(ks[1], (embed_dim,), jnp.float32, -lim, lim),
        cls_token=1e-6 * jax.random.normal(ks[2], (1, 1, embed_dim), jnp.float32),
        pos_embed=0.02 * jax.random.normal(ks[3], (1, embed_len, embed_dim),
                                           jnp.float32),
        norm_g=jnp.ones((embed_dim,), jnp.float32),
        norm_b=jnp.zeros((embed_dim,), jnp.float32),
        head_w=_xavier_uniform(ks[4], embed_dim, num_classes),
        head_b=jnp.zeros((num_classes,), jnp.float32),
        blocks=[_init_block(ks[5 + i], embed_dim, context_dim, mlp_ratio,
                            use_context=(i >= depth - use_context_layer))
                for i in range(depth)],
    )


def prepare_params(raw, *, num_heads):
    """Fold scales/eps into weights, fuse projections, cast matmul weights to bf16."""
    d = raw['pos_embed'].shape[-1]
    dh = d // num_heads
    scale = 1.0 / math.sqrt(dh)
    bf = lambda w: w.astype(jnp.bfloat16)

    blocks = []
    for rb in raw['blocks']:
        sa = rb['self_attn']
        pb = dict(
            norm2_g=rb['norm2_g'], norm2_b=rb['norm2_b'],
            norm3_g=rb['norm3_g'], norm3_b=rb['norm3_b'],
            # fused QKV; 1/sqrt(dh) and the +1e-8 query offset folded into Q.
            sqkv_w=bf(jnp.concatenate([sa['wq'] * scale, sa['wk'], sa['wv']],
                                      axis=1)),
            sqkv_b=jnp.concatenate(
                [(sa['bq'] + 1e-8 * sa['wq'].sum(axis=0)) * scale,
                 sa['bk'], sa['bv']]),
            so_w=bf(sa['wo']), so_b=sa['bo'],
            fc1_w=bf(rb['fc1_w']), fc1_b=rb['fc1_b'],
            fc2_w=bf(rb['fc2_w']), fc2_b=rb['fc2_b'],
        )
        if rb['use_context']:
            ca = rb['cross_attn']
            # compose to_k/to_v with the MHA K/V in-projections (exact fold).
            k_w = rb['to_k_w'] @ ca['wk']
            k_b = rb['to_k_b'] @ ca['wk'] + ca['bk']
            v_w = rb['to_v_w'] @ ca['wv']
            v_b = rb['to_v_b'] @ ca['wv'] + ca['bv']
            pb.update(
                norm1_g=rb['norm1_g'], norm1_b=rb['norm1_b'],
                norm1_kv_g=rb['norm1_kv_g'], norm1_kv_b=rb['norm1_kv_b'],
                xq_w=bf(ca['wq'] * scale), xq_b=ca['bq'] * scale,
                xkv_w=bf(jnp.concatenate([k_w, v_w], axis=1)),
                xkv_b=jnp.concatenate([k_b, v_b]),
                xo_w=bf(ca['wo']), xo_b=ca['bo'],
            )
        blocks.append(pb)

    return dict(
        patch_w=bf(raw['patch_w']), patch_b=raw['patch_b'],
        cls_token=raw['cls_token'], pos_embed=raw['pos_embed'],
        norm_g=raw['norm_g'], norm_b=raw['norm_b'],
        head_w=bf(raw['head_w']), head_b=raw['head_b'],
        blocks=blocks,
    )


# --------------------------------- main --------------------------------------

if __name__ == "__main__":
    key = jax.random.PRNGKey(0)
    k_param, k_x, k_ctx = jax.random.split(key, 3)

    cfg = dict(img_size=32, patch_size=8, in_chans=3, num_classes=10,
               embed_dim=32, depth=2, num_heads=4, mlp_ratio=4.0,
               context_dim=48, use_context_layer=2)   # all blocks use context

    raw = init_vit_context(k_param, **cfg)
    params = prepare_params(raw, num_heads=cfg['num_heads'])

    x = jax.random.normal(k_x, (2, 3, 32, 32), jnp.float32)          # NCHW
    context = jax.random.normal(k_ctx, (2, 8, cfg['context_dim']), jnp.float32)

    fwd = jax.jit(functools.partial(vit_context_forward,
                                    patch_size=cfg['patch_size'],
                                    num_heads=cfg['num_heads']))
    out = jax.block_until_ready(fwd(params, x, context))

    assert out.shape == (2, cfg['num_classes'])
    assert bool(jnp.all(jnp.isfinite(out)))
    print("KERNEL_OK")
</pallas_src>

<mosaic_0001>
module attributes {stable_mosaic.version = 11 : i64} {
  func.func @kernel(%arg0: i32, %arg1: i32, %arg2: i32, %arg3: memref<32x192xf32, #tpu.memory_space<vmem>>, %arg4: memref<192x32xbf16, #tpu.memory_space<vmem>>, %arg5: memref<1x32xf32, #tpu.memory_space<vmem>>, %arg6: memref<32x32xf32, #tpu.memory_space<vmem>>, %arg7: memref<32x32xf32, #tpu.memory_space<vmem>>) attributes {dimension_semantics = [#tpu.dimension_semantics<parallel>, #tpu.dimension_semantics<parallel>, #tpu.dimension_semantics<arbitrary>], iteration_bounds = array<i64: 1, 1, 1>, scalar_prefetch = 0 : i64, scratch_operands = 1 : i64, tpu.core_type = #tpu.core_type<tc>, window_params = [{transform_indices = @transform_0, window_bounds = array<i64: 32, 192>}, {transform_indices = @transform_1, window_bounds = array<i64: 192, 32>}, {transform_indices = @transform_2, window_bounds = array<i64: 1, 32>}, {transform_indices = @transform_3, window_bounds = array<i64: 32, 32>}]} {
    %c0 = arith.constant 0 : index
    %c0_0 = arith.constant 0 : index
    %0 = vector.load %arg3[%c0, %c0_0] : memref<32x192xf32, #tpu.memory_space<vmem>>, vector<32x192xf32>
    %c0_i32 = arith.constant 0 : i32
    %1 = arith.cmpi eq, %arg2, %c0_i32 : i32
    %2 = arith.extui %1 : i1 to i32
    %c0_i32_1 = arith.constant 0 : i32
    %3 = arith.cmpi ne, %2, %c0_i32_1 : i32
    scf.if %3 {
      %c0_10 = arith.constant 0 : index
      %c0_11 = arith.constant 0 : index
      %13 = vector.load %arg5[%c0_10, %c0_11] : memref<1x32xf32, #tpu.memory_space<vmem>>, vector<1x32xf32>
      %14 = vector.shape_cast %13 : vector<1x32xf32> to vector<1x32xf32>
      %15 = vector.broadcast %14 : vector<1x32xf32> to vector<32x32xf32>
      %c0_12 = arith.constant 0 : index
      %c0_13 = arith.constant 0 : index
      %16 = vector.load %arg7[%c0_12, %c0_13] : memref<32x32xf32, #tpu.memory_space<vmem>>, vector<32x32xf32>
      tpu.vector_store %arg7[%c0_12, %c0_13], %15 {strides = array<i32>} : memref<32x32xf32, #tpu.memory_space<vmem>>, vector<32x32xf32>,
    } else {
    }
    %c0_2 = arith.constant 0 : index
    %c0_3 = arith.constant 0 : index
    %4 = vector.load %arg7[%c0_2, %c0_3] : memref<32x32xf32, #tpu.memory_space<vmem>>, vector<32x32xf32>
    %5 = arith.truncf %0 : vector<32x192xf32> to vector<32x192xbf16>
    %c0_4 = arith.constant 0 : index
    %c0_5 = arith.constant 0 : index
    %6 = vector.load %arg4[%c0_4, %c0_5] : memref<192x32xbf16, #tpu.memory_space<vmem>>, vector<192x32xbf16>
    %cst = arith.constant dense<0.000000e+00> : vector<32x32xf32>
    %7 = tpu.matmul %5, %6, %cst {dimension_numbers = #tpu.dot_dimension_numbers<[1], [0], [0], [1], [0, 0, 1, 1], [], []>} : vector<32x192xbf16>, vector<192x32xbf16>, vector<32x32xf32> -> vector<32x32xf32>
    %8 = arith.addf %4, %7 : vector<32x32xf32>
    %c0_6 = arith.constant 0 : index
    %c0_7 = arith.constant 0 : index
    %9 = vector.load %arg7[%c0_6, %c0_7] : memref<32x32xf32, #tpu.memory_space<vmem>>, vector<32x32xf32>
    tpu.vector_store %arg7[%c0_6, %c0_7], %8 {strides = array<i32>} : memref<32x32xf32, #tpu.memory_space<vmem>>, vector<32x32xf32>,
    %c0_i32_8 = arith.constant 0 : i32
    %10 = arith.cmpi eq, %arg2, %c0_i32_8 : i32
    %11 = arith.extui %10 : i1 to i32
    %c0_i32_9 = arith.constant 0 : i32
    %12 = arith.cmpi ne, %11, %c0_i32_9 : i32
    scf.if %12 {
      %c0_10 = arith.constant 0 : index
      %c0_11 = arith.constant 0 : index
      %13 = vector.load %arg7[%c0_10, %c0_11] : memref<32x32xf32, #tpu.memory_space<vmem>>, vector<32x32xf32>
      %c0_12 = arith.constant 0 : index
      %c0_13 = arith.constant 0 : index
      %14 = vector.load %arg6[%c0_12, %c0_13] : memref<32x32xf32, #tpu.memory_space<vmem>>, vector<32x32xf32>
      tpu.vector_store %arg6[%c0_12, %c0_13], %13 {strides = array<i32>} : memref<32x32xf32, #tpu.memory_space<vmem>>, vector<32x32xf32>,
    } else {
    }
    return
  }
  func.func @transform_0(%arg0: i32, %arg1: i32, %arg2: i32) -> (i32, i32) {
    %c0_i32 = arith.constant 0 : i32
    return %arg0, %arg2 : i32, i32
  }
  func.func @transform_1(%arg0: i32, %arg1: i32, %arg2: i32) -> (i32, i32) {
    %c0_i32 = arith.constant 0 : i32
    return %arg2, %arg1 : i32, i32
  }
  func.func @transform_2(%arg0: i32, %arg1: i32, %arg2: i32) -> (i32, i32) {
    %c0_i32 = arith.constant 0 : i32
    %c0_i32_0 = arith.constant 0 : i32
    return %c0_i32, %arg1 : i32, i32
  }
  func.func @transform_3(%arg0: i32, %arg1: i32, %arg2: i32) -> (i32, i32) {
    %c0_i32 = arith.constant 0 : i32
    return %arg0, %arg1 : i32, i32
  }
}

module attributes {stable_mosaic.version = 11 : i64} {
  func.func @kernel(%arg0: i32, %arg1: i32, %arg2: i32, %arg3: memref<34x32xf32, #tpu.memory_space<vmem>>, %arg4: memref<1x32xf32, #tpu.memory_space<vmem>>, %arg5: memref<1x32xf32, #tpu.memory_space<vmem>>, %arg6: memref<32x32xbf16, #tpu.memory_space<vmem>>, %arg7: memref<1x32xf32, #tpu.memory_space<vmem>>, %arg8: memref<34x32xf32, #tpu.memory_space<vmem>>, %arg9: memref<34x32xf32, #tpu.memory_space<vmem>>) attributes {dimension_semantics = [#tpu.dimension_semantics<parallel>, #tpu.dimension_semantics<parallel>, #tpu.dimension_semantics<arbitrary>], iteration_bounds = array<i64: 1, 1, 1>, scalar_prefetch = 0 : i64, scratch_operands = 1 : i64, tpu.core_type = #tpu.core_type<tc>, window_params = [{transform_indices = @transform_0, window_bounds = array<i64: 34, 32>}, {transform_indices = @transform_1, window_bounds = array<i64: 1, 32>}, {transform_indices = @transform_2, window_bounds = array<i64: 1, 32>}, {transform_indices = @transform_3, window_bounds = array<i64: 32, 32>}, {transform_indices = @transform_4, window_bounds = array<i64: 1, 32>}, {transform_indices = @transform_5, window_bounds = array<i64: 34, 32>}]} {
    %c0 = arith.constant 0 : index
    %c0_0 = arith.constant 0 : index
    %0 = vector.load %arg3[%c0, %c0_0] : memref<34x32xf32, #tpu.memory_space<vmem>>, vector<34x32xf32>
    %cst = arith.constant dense<0.000000e+00> : vector<34xf32>
    %1 = vector.multi_reduction <add>, %0, %cst [1] : vector<34x32xf32> to vector<34xf32>
    %2 = vector.shape_cast %1 : vector<34xf32> to vector<34x1xf32>
    %cst_1 = arith.constant 3.200000e+01 : f32
    %3 = vector.broadcast %cst_1 : f32 to vector<34x1xf32>
    %4 = arith.divf %2, %3 : vector<34x1xf32>
    %5 = vector.broadcast %4 : vector<34x1xf32> to vector<34x32xf32>
    %6 = arith.subf %0, %5 : vector<34x32xf32>
    %7 = arith.mulf %6, %6 : vector<34x32xf32>
    %cst_2 = arith.constant dense<0.000000e+00> : vector<34xf32>
    %8 = vector.multi_reduction <add>, %7, %cst_2 [1] : vector<34x32xf32> to vector<34xf32>
    %9 = vector.shape_cast %8 : vector<34xf32> to vector<34x1xf32>
    %cst_3 = arith.constant 3.200000e+01 : f32
    %10 = vector.broadcast %cst_3 : f32 to vector<34x1xf32>
    %11 = arith.divf %9, %10 : vector<34x1xf32>
    %cst_4 = arith.constant 9.99999974E-6 : f32
    %12 = vector.broadcast %cst_4 : f32 to vector<34x1xf32>
    %13 = arith.addf %11, %12 : vector<34x1xf32>
    %14 = math.rsqrt %13 : vector<34x1xf32>
    %15 = vector.broadcast %14 : vector<34x1xf32> to vector<34x32xf32>
    %16 = arith.mulf %6, %15 : vector<34x32xf32>
    %c0_5 = arith.constant 0 : index
    %c0_6 = arith.constant 0 : index
    %17 = vector.load %arg4[%c0_5, %c0_6] : memref<1x32xf32, #tpu.memory_space<vmem>>, vector<1x32xf32>
    %18 = vector.broadcast %17 : vector<1x32xf32> to vector<34x32xf32>
    %19 = arith.mulf %16, %18 : vector<34x32xf32>
    %c0_7 = arith.constant 0 : index
    %c0_8 = arith.constant 0 : index
    %20 = vector.load %arg5[%c0_7, %c0_8] : memref<1x32xf32, #tpu.memory_space<vmem>>, vector<1x32xf32>
    %21 = vector.broadcast %20 : vector<1x32xf32> to vector<34x32xf32>
    %22 = arith.addf %19, %21 : vector<34x32xf32>
    %c0_i32 = arith.constant 0 : i32
    %23 = arith.cmpi eq, %arg2, %c0_i32 : i32
    %24 = arith.extui %23 : i1 to i32
    %c0_i32_9 = arith.constant 0 : i32
    %25 = arith.cmpi ne, %24, %c0_i32_9 : i32
    scf.if %25 {
      %c0_19 = arith.constant 0 : index
      %c0_20 = arith.constant 0 : index
      %35 = vector.load %arg7[%c0_19, %c0_20] : memref<1x32xf32, #tpu.memory_space<vmem>>, vector<1x32xf32>
      %36 = vector.shape_cast %35 : vector<1x32xf32> to vector<1x32xf32>
      %37 = vector.broadcast %36 : vector<1x32xf32> to vector<34x32xf32>
      %c0_21 = arith.constant 0 : index
      %c0_22 = arith.constant 0 : index
      %38 = vector.load %arg9[%c0_21, %c0_22] : memref<34x32xf32, #tpu.memory_space<vmem>>, vector<34x32xf32>
      tpu.vector_store %arg9[%c0_21, %c0_22], %37 {strides = array<i32>} : memref<34x32xf32, #tpu.memory_space<vmem>>, vector<34x32xf32>,
    } else {
    }
    %c0_10 = arith.constant 0 : index
    %c0_11 = arith.constant 0 : index
    %26 = vector.load %arg9[%c0_10, %c0_11] : memref<34x32xf32, #tpu.memory_space<vmem>>, vector<34x32xf32>
    %27 = arith.truncf %22 : vector<34x32xf32> to vector<34x32xbf16>
    %c0_12 = arith.constant 0 : index
    %c0_13 = arith.constant 0 : index
    %28 = vector.load %arg6[%c0_12, %c0_13] : memref<32x32xbf16, #tpu.memory_space<vmem>>, vector<32x32xbf16>
    %cst_14 = arith.constant dense<0.000000e+00> : vector<34x32xf32>
    %29 = tpu.matmul %27, %28, %cst_14 {dimension_numbers = #tpu.dot_dimension_numbers<[1], [0], [0], [1], [0, 0, 1, 1], [], []>} : vector<34x32xbf16>, vector<32x32xbf16>, vector<34x32xf32> -> vector<34x32xf32>
    %30 = arith.addf %26, %29 : vector<34x32xf32>
    %c0_15 = arith.constant 0 : index
    %c0_16 = arith.constant 0 : index
    %31 = vector.load %arg9[%c0_15, %c0_16] : memref<34x32xf32, #tpu.memory_space<vmem>>, vector<34x32xf32>
    tpu.vector_store %arg9[%c0_15, %c0_16], %30 {strides = array<i32>} : memref<34x32xf32, #tpu.memory_space<vmem>>, vector<34x32xf32>,
    %c0_i32_17 = arith.constant 0 : i32
    %32 = arith.cmpi eq, %arg2, %c0_i32_17 : i32
    %33 = arith.extui %32 : i1 to i32
    %c0_i32_18 = arith.constant 0 : i32
    %34 = arith.cmpi ne, %33, %c0_i32_18 : i32
    scf.if %34 {
      %c0_19 = arith.constant 0 : index
      %c0_20 = arith.constant 0 : index
      %35 = vector.load %arg9[%c0_19, %c0_20] : memref<34x32xf32, #tpu.memory_space<vmem>>, vector<34x32xf32>
      %c0_21 = arith.constant 0 : index
      %c0_22 = arith.constant 0 : index
      %36 = vector.load %arg8[%c0_21, %c0_22] : memref<34x32xf32, #tpu.memory_space<vmem>>, vector<34x32xf32>
      tpu.vector_store %arg8[%c0_21, %c0_22], %35 {strides = array<i32>} : memref<34x32xf32, #tpu.memory_space<vmem>>, vector<34x32xf32>,
    } else {
    }
    return
  }
  func.func @transform_0(%arg0: i32, %arg1: i32, %arg2: i32) -> (i32, i32) {
    %c0_i32 = arith.constant 0 : i32
    return %arg0, %arg2 : i32, i32
  }
  func.func @transform_1(%arg0: i32, %arg1: i32, %arg2: i32) -> (i32, i32) {
    %c0_i32 = arith.constant 0 : i32
    %c0_i32_0 = arith.constant 0 : i32
    return %c0_i32, %arg2 : i32, i32
  }
  func.func @transform_2(%arg0: i32, %arg1: i32, %arg2: i32) -> (i32, i32) {
    %c0_i32 = arith.constant 0 : i32
    %c0_i32_0 = arith.constant 0 : i32
    return %c0_i32, %arg2 : i32, i32
  }
  func.func @transform_3(%arg0: i32, %arg1: i32, %arg2: i32) -> (i32, i32) {
    %c0_i32 = arith.constant 0 : i32
    return %arg2, %arg1 : i32, i32
  }
  func.func @transform_4(%arg0: i32, %arg1: i32, %arg2: i32) -> (i32, i32) {
    %c0_i32 = arith.constant 0 : i32
    %c0_i32_0 = arith.constant 0 : i32
    return %c0_i32, %arg1 : i32, i32
  }
  func.func @transform_5(%arg0: i32, %arg1: i32, %arg2: i32) -> (i32, i32) {
    %c0_i32 = arith.constant 0 : i32
    return %arg0, %arg1 : i32, i32
  }
}

module attributes {stable_mosaic.version = 11 : i64} {
  func.func @kernel(%arg0: i32, %arg1: i32, %arg2: i32, %arg3: memref<16x48xf32, #tpu.memory_space<vmem>>, %arg4: memref<1x48xf32, #tpu.memory_space<vmem>>, %arg5: memref<1x48xf32, #tpu.memory_space<vmem>>, %arg6: memref<48x64xbf16, #tpu.memory_space<vmem>>, %arg7: memref<1x64xf32, #tpu.memory_space<vmem>>, %arg8: memref<16x64xf32, #tpu.memory_space<vmem>>, %arg9: memref<16x64xf32, #tpu.memory_space<vmem>>) attributes {dimension_semantics = [#tpu.dimension_semantics<parallel>, #tpu.dimension_semantics<parallel>, #tpu.dimension_semantics<arbitrary>], iteration_bounds = array<i64: 1, 1, 1>, scalar_prefetch = 0 : i64, scratch_operands = 1 : i64, tpu.core_type = #tpu.core_type<tc>, window_params = [{transform_indices = @transform_0, window_bounds = array<i64: 16, 48>}, {transform_indices = @transform_1, window_bounds = array<i64: 1, 48>}, {transform_indices = @transform_2, window_bounds = array<i64: 1, 48>}, {transform_indices = @transform_3, window_bounds = array<i64: 48, 64>}, {transform_indices = @transform_4, window_bounds = array<i64: 1, 64>}, {transform_indices = @transform_5, window_bounds = array<i64: 16, 64>}]} {
    %c0 = arith.constant 0 : index
    %c0_0 = arith.constant 0 : index
    %0 = vector.load %arg3[%c0, %c0_0] : memref<16x48xf32, #tpu.memory_space<vmem>>, vector<16x48xf32>
    %cst = arith.constant dense<0.000000e+00> : vector<16xf32>
    %1 = vector.multi_reduction <add>, %0, %cst [1] : vector<16x48xf32> to vector<16xf32>
    %2 = vector.shape_cast %1 : vector<16xf32> to vector<16x1xf32>
    %cst_1 = arith.constant 4.800000e+01 : f32
    %3 = vector.broadcast %cst_1 : f32 to vector<16x1xf32>
    %4 = arith.divf %2, %3 : vector<16x1xf32>
    %5 = vector.broadcast %4 : vector<16x1xf32> to vector<16x48xf32>
    %6 = arith.subf %0, %5 : vector<16x48xf32>
    %7 = arith.mulf %6, %6 : vector<16x48xf32>
    %cst_2 = arith.constant dense<0.000000e+00> : vector<16xf32>
    %8 = vector.multi_reduction <add>, %7, %cst_2 [1] : vector<16x48xf32> to vector<16xf32>
    %9 = vector.shape_cast %8 : vector<16xf32> to vector<16x1xf32>
    %cst_3 = arith.constant 4.800000e+01 : f32
    %10 = vector.broadcast %cst_3 : f32 to vector<16x1xf32>
    %11 = arith.divf %9, %10 : vector<16x1xf32>
    %cst_4 = arith.constant 9.99999974E-6 : f32
    %12 = vector.broadcast %cst_4 : f32 to vector<16x1xf32>
    %13 = arith.addf %11, %12 : vector<16x1xf32>
    %14 = math.rsqrt %13 : vector<16x1xf32>
    %15 = vector.broadcast %14 : vector<16x1xf32> to vector<16x48xf32>
    %16 = arith.mulf %6, %15 : vector<16x48xf32>
    %c0_5 = arith.constant 0 : index
    %c0_6 = arith.constant 0 : index
    %17 = vector.load %arg4[%c0_5, %c0_6] : memref<1x48xf32, #tpu.memory_space<vmem>>, vector<1x48xf32>
    %18 = vector.broadcast %17 : vector<1x48xf32> to vector<16x48xf32>
    %19 = arith.mulf %16, %18 : vector<16x48xf32>
    %c0_7 = arith.constant 0 : index
    %c0_8 = arith.constant 0 : index
    %20 = vector.load %arg5[%c0_7, %c0_8] : memref<1x48xf32, #tpu.memory_space<vmem>>, vector<1x48xf32>
    %21 = vector.broadcast %20 : vector<1x48xf32> to vector<16x48xf32>
    %22 = arith.addf %19, %21 : vector<16x48xf32>
    %c0_i32 = arith.constant 0 : i32
    %23 = arith.cmpi eq, %arg2, %c0_i32 : i32
    %24 = arith.extui %23 : i1 to i32
    %c0_i32_9 = arith.constant 0 : i32
    %25 = arith.cmpi ne, %24, %c0_i32_9 : i32
    scf.if %25 {
      %c0_19 = arith.constant 0 : index
      %c0_20 = arith.constant 0 : index
      %35 = vector.load %arg7[%c0_19, %c0_20] : memref<1x64xf32, #tpu.memory_space<vmem>>, vector<1x64xf32>
      %36 = vector.shape_cast %35 : vector<1x64xf32> to vector<1x64xf32>
      %37 = vector.broadcast %36 : vector<1x64xf32> to vector<16x64xf32>
      %c0_21 = arith.constant 0 : index
      %c0_22 = arith.constant 0 : index
      %38 = vector.load %arg9[%c0_21, %c0_22] : memref<16x64xf32, #tpu.memory_space<vmem>>, vector<16x64xf32>
      tpu.vector_store %arg9[%c0_21, %c0_22], %37 {strides = array<i32>} : memref<16x64xf32, #tpu.memory_space<vmem>>, vector<16x64xf32>,
    } else {
    }
    %c0_10 = arith.constant 0 : index
    %c0_11 = arith.constant 0 : index
    %26 = vector.load %arg9[%c0_10, %c0_11] : memref<16x64xf32, #tpu.memory_space<vmem>>, vector<16x64xf32>
    %27 = arith.truncf %22 : vector<16x48xf32> to vector<16x48xbf16>
    %c0_12 = arith.constant 0 : index
    %c0_13 = arith.constant 0 : index
    %28 = vector.load %arg6[%c0_12, %c0_13] : memref<48x64xbf16, #tpu.memory_space<vmem>>, vector<48x64xbf16>
    %cst_14 = arith.constant dense<0.000000e+00> : vector<16x64xf32>
    %29 = tpu.matmul %27, %28, %cst_14 {dimension_numbers = #tpu.dot_dimension_numbers<[1], [0], [0], [1], [0, 0, 1, 1], [], []>} : vector<16x48xbf16>, vector<48x64xbf16>, vector<16x64xf32> -> vector<16x64xf32>
    %30 = arith.addf %26, %29 : vector<16x64xf32>
    %c0_15 = arith.constant 0 : index
    %c0_16 = arith.constant 0 : index
    %31 = vector.load %arg9[%c0_15, %c0_16] : memref<16x64xf32, #tpu.memory_space<vmem>>, vector<16x64xf32>
    tpu.vector_store %arg9[%c0_15, %c0_16], %30 {strides = array<i32>} : memref<16x64xf32, #tpu.memory_space<vmem>>, vector<16x64xf32>,
    %c0_i32_17 = arith.constant 0 : i32
    %32 = arith.cmpi eq, %arg2, %c0_i32_17 : i32
    %33 = arith.extui %32 : i1 to i32
    %c0_i32_18 = arith.constant 0 : i32
    %34 = arith.cmpi ne, %33, %c0_i32_18 : i32
    scf.if %34 {
      %c0_19 = arith.constant 0 : index
      %c0_20 = arith.constant 0 : index
      %35 = vector.load %arg9[%c0_19, %c0_20] : memref<16x64xf32, #tpu.memory_space<vmem>>, vector<16x64xf32>
      %c0_21 = arith.constant 0 : index
      %c0_22 = arith.constant 0 : index
      %36 = vector.load %arg8[%c0_21, %c0_22] : memref<16x64xf32, #tpu.memory_space<vmem>>, vector<16x64xf32>
      tpu.vector_store %arg8[%c0_21, %c0_22], %35 {strides = array<i32>} : memref<16x64xf32, #tpu.memory_space<vmem>>, vector<16x64xf32>,
    } else {
    }
    return
  }
  func.func @transform_0(%arg0: i32, %arg1: i32, %arg2: i32) -> (i32, i32) {
    %c0_i32 = arith.constant 0 : i32
    return %arg0, %arg2 : i32, i32
  }
  func.func @transform_1(%arg0: i32, %arg1: i32, %arg2: i32) -> (i32, i32) {
    %c0_i32 = arith.constant 0 : i32
    %c0_i32_0 = arith.constant 0 : i32
    return %c0_i32, %arg2 : i32, i32
  }
  func.func @transform_2(%arg0: i32, %arg1: i32, %arg2: i32) -> (i32, i32) {
    %c0_i32 = arith.constant 0 : i32
    %c0_i32_0 = arith.constant 0 : i32
    return %c0_i32, %arg2 : i32, i32
  }
  func.func @transform_3(%arg0: i32, %arg1: i32, %arg2: i32) -> (i32, i32) {
    %c0_i32 = arith.constant 0 : i32
    return %arg2, %arg1 : i32, i32
  }
  func.func @transform_4(%arg0: i32, %arg1: i32, %arg2: i32) -> (i32, i32) {
    %c0_i32 = arith.constant 0 : i32
    %c0_i32_0 = arith.constant 0 : i32
    return %c0_i32, %arg1 : i32, i32
  }
  func.func @transform_5(%arg0: i32, %arg1: i32, %arg2: i32) -> (i32, i32) {
    %c0_i32 = arith.constant 0 : i32
    return %arg0, %arg1 : i32, i32
  }
}

module attributes {stable_mosaic.version = 11 : i64} {
  func.func @kernel(%arg0: i32, %arg1: memref<1x4x17x8xf32, #tpu.memory_space<vmem>>, %arg2: memref<1x8x8x8xf32, #tpu.memory_space<vmem>>, %arg3: memref<1x4x17x8xf32, #tpu.memory_space<vmem>>) attributes {dimension_semantics = [#tpu.dimension_semantics<parallel>], iteration_bounds = array<i64: 2>, scalar_prefetch = 0 : i64, scratch_operands = 0 : i64, tpu.core_type = #tpu.core_type<tc>, window_params = [{transform_indices = @transform_0, window_bounds = array<i64: 1, 4, 17, 8>}, {transform_indices = @transform_1, window_bounds = array<i64: 1, 8, 8, 8>}, {transform_indices = @transform_2, window_bounds = array<i64: 1, 4, 17, 8>}]} {
    %c0 = arith.constant 0 : index
    %c0_0 = arith.constant 0 : index
    %c0_1 = arith.constant 0 : index
    %c0_2 = arith.constant 0 : index
    %0 = vector.load %arg2[%c0, %c0_0, %c0_1, %c0_2] : memref<1x8x8x8xf32, #tpu.memory_space<vmem>>, vector<1x8x8x8xf32>
    %1 = vector.shape_cast %0 : vector<1x8x8x8xf32> to vector<8x8x8xf32>
    %c0_3 = arith.constant 0 : index
    %c0_4 = arith.constant 0 : index
    %c0_5 = arith.constant 0 : index
    %c0_6 = arith.constant 0 : index
    %2 = vector.load %arg1[%c0_3, %c0_4, %c0_5, %c0_6] : memref<1x4x17x8xf32, #tpu.memory_space<vmem>>, vector<1x4x17x8xf32>
    %3 = vector.shape_cast %2 : vector<1x4x17x8xf32> to vector<4x17x8xf32>
    %4 = vector.extract_strided_slice %1 {offsets = [0, 0, 0], sizes = [4, 8, 8], strides = [1, 1, 1]} : vector<8x8x8xf32> to vector<4x8x8xf32>
    %5 = vector.extract_strided_slice %1 {offsets = [4, 0, 0], sizes = [4, 8, 8], strides = [1, 1, 1]} : vector<8x8x8xf32> to vector<4x8x8xf32>
    %6 = arith.truncf %3 : vector<4x17x8xf32> to vector<4x17x8xbf16>
    %7 = arith.truncf %4 : vector<4x8x8xf32> to vector<4x8x8xbf16>
    %8 = arith.truncf %5 : vector<4x8x8xf32> to vector<4x8x8xbf16>
    "tpu.trace_start"() <{level = 10 : i32, message = "hqd,hkd->hqk"}> : () -> ()
    %cst = arith.constant dense<0.000000e+00> : vector<4x17x8xf32>
    %9 = tpu.matmul %6, %7, %cst {dimension_numbers = #tpu.dot_dimension_numbers<[2], [2], [1], [1], [0, 0, 0, 1, 1, 1], [0], [0]>} : vector<4x17x8xbf16>, vector<4x8x8xbf16>, vector<4x17x8xf32> -> vector<4x17x8xf32>
    "tpu.trace_stop"() : () -> ()
    %cst_7 = arith.constant dense<0xFF800000> : vector<4x17xf32>
    %10 = vector.multi_reduction <maximumf>, %9, %cst_7 [2] : vector<4x17x8xf32> to vector<4x17xf32>
    %11 = vector.shape_cast %10 : vector<4x17xf32> to vector<4x17x1xf32>
    %12 = vector.broadcast %11 : vector<4x17x1xf32> to vector<4x17x8xf32>
    %13 = arith.subf %9, %12 : vector<4x17x8xf32>
    %14 = math.exp %13 : vector<4x17x8xf32>
    %cst_8 = arith.constant dense<0.000000e+00> : vector<4x17xf32>
    %15 = vector.multi_reduction <add>, %14, %cst_8 [2] : vector<4x17x8xf32> to vector<4x17xf32>
    %16 = vector.shape_cast %15 : vector<4x17xf32> to vector<4x17x1xf32>
    %17 = tpu.reciprocal %16 {approx = true} : vector<4x17x1xf32> -> vector<4x17x1xf32>
    %18 = vector.broadcast %17 : vector<4x17x1xf32> to vector<4x17x8xf32>
    %19 = arith.mulf %14, %18 : vector<4x17x8xf32>
    %20 = arith.truncf %19 : vector<4x17x8xf32> to vector<4x17x8xbf16>
    "tpu.trace_start"() <{level = 10 : i32, message = "hqk,hkd->hqd"}> : () -> ()
    %cst_9 = arith.constant dense<0.000000e+00> : vector<4x17x8xf32>
    %21 = tpu.matmul %20, %8, %cst_9 {dimension_numbers = #tpu.dot_dimension_numbers<[2], [1], [1], [2], [0, 0, 0, 1, 1, 2], [0], [0]>} : vector<4x17x8xbf16>, vector<4x8x8xbf16>, vector<4x17x8xf32> -> vector<4x17x8xf32>
    "tpu.trace_stop"() : () -> ()
    %c0_10 = arith.constant 0 : index
    %c0_11 = arith.constant 0 : index
    %c0_12 = arith.constant 0 : index
    %c0_13 = arith.constant 0 : index
    %22 = vector.load %arg3[%c0_10, %c0_11, %c0_12, %c0_13] : memref<1x4x17x8xf32, #tpu.memory_space<vmem>>, vector<1x4x17x8xf32>
    %23 = vector.shape_cast %22 : vector<1x4x17x8xf32> to vector<4x17x8xf32>
    %24 = vector.shape_cast %21 : vector<4x17x8xf32> to vector<1x4x17x8xf32>
    tpu.vector_store %arg3[%c0_10, %c0_11, %c0_12, %c0_13], %24 {strides = array<i32>} : memref<1x4x17x8xf32, #tpu.memory_space<vmem>>, vector<1x4x17x8xf32>,
    return
  }
  func.func @transform_0(%arg0: i32) -> (i32, i32, i32, i32) {
    %c0_i32 = arith.constant 0 : i32
    %c0_i32_0 = arith.constant 0 : i32
    %c0_i32_1 = arith.constant 0 : i32
    %c0_i32_2 = arith.constant 0 : i32
    return %arg0, %c0_i32, %c0_i32_0, %c0_i32_1 : i32, i32, i32, i32
  }
  func.func @transform_1(%arg0: i32) -> (i32, i32, i32, i32) {
    %c0_i32 = arith.constant 0 : i32
    %c0_i32_0 = arith.constant 0 : i32
    %c0_i32_1 = arith.constant 0 : i32
    %c0_i32_2 = arith.constant 0 : i32
    return %arg0, %c0_i32, %c0_i32_0, %c0_i32_1 : i32, i32, i32, i32
  }
  func.func @transform_2(%arg0: i32) -> (i32, i32, i32, i32) {
    %c0_i32 = arith.constant 0 : i32
    %c0_i32_0 = arith.constant 0 : i32
    %c0_i32_1 = arith.constant 0 : i32
    %c0_i32_2 = arith.constant 0 : i32
    return %arg0, %c0_i32, %c0_i32_0, %c0_i32_1 : i32, i32, i32, i32
  }
}

module attributes {stable_mosaic.version = 11 : i64} {
  func.func @kernel(%arg0: i32, %arg1: i32, %arg2: i32, %arg3: memref<34x32xf32, #tpu.memory_space<vmem>>, %arg4: memref<32x32xbf16, #tpu.memory_space<vmem>>, %arg5: memref<1x32xf32, #tpu.memory_space<vmem>>, %arg6: memref<34x32xf32, #tpu.memory_space<vmem>>, %arg7: memref<34x32xf32, #tpu.memory_space<vmem>>, %arg8: memref<34x32xf32, #tpu.memory_space<vmem>>) attributes {dimension_semantics = [#tpu.dimension_semantics<parallel>, #tpu.dimension_semantics<parallel>, #tpu.dimension_semantics<arbitrary>], iteration_bounds = array<i64: 1, 1, 1>, scalar_prefetch = 0 : i64, scratch_operands = 1 : i64, tpu.core_type = #tpu.core_type<tc>, window_params = [{transform_indices = @transform_0, window_bounds = array<i64: 34, 32>}, {transform_indices = @transform_1, window_bounds = array<i64: 32, 32>}, {transform_indices = @transform_2, window_bounds = array<i64: 1, 32>}, {transform_indices = @transform_3, window_bounds = array<i64: 34, 32>}, {transform_indices = @transform_4, window_bounds = array<i64: 34, 32>}]} {
    %c0 = arith.constant 0 : index
    %c0_0 = arith.constant 0 : index
    %0 = vector.load %arg3[%c0, %c0_0] : memref<34x32xf32, #tpu.memory_space<vmem>>, vector<34x32xf32>
    %c0_i32 = arith.constant 0 : i32
    %1 = arith.cmpi eq, %arg2, %c0_i32 : i32
    %2 = arith.extui %1 : i1 to i32
    %c0_i32_1 = arith.constant 0 : i32
    %3 = arith.cmpi ne, %2, %c0_i32_1 : i32
    scf.if %3 {
      %c0_10 = arith.constant 0 : index
      %c0_11 = arith.constant 0 : index
      %13 = vector.load %arg5[%c0_10, %c0_11] : memref<1x32xf32, #tpu.memory_space<vmem>>, vector<1x32xf32>
      %14 = vector.shape_cast %13 : vector<1x32xf32> to vector<1x32xf32>
      %15 = vector.broadcast %14 : vector<1x32xf32> to vector<34x32xf32>
      %c0_12 = arith.constant 0 : index
      %c0_13 = arith.constant 0 : index
      %16 = vector.load %arg8[%c0_12, %c0_13] : memref<34x32xf32, #tpu.memory_space<vmem>>, vector<34x32xf32>
      tpu.vector_store %arg8[%c0_12, %c0_13], %15 {strides = array<i32>} : memref<34x32xf32, #tpu.memory_space<vmem>>, vector<34x32xf32>,
    } else {
    }
    %c0_2 = arith.constant 0 : index
    %c0_3 = arith.constant 0 : index
    %4 = vector.load %arg8[%c0_2, %c0_3] : memref<34x32xf32, #tpu.memory_space<vmem>>, vector<34x32xf32>
    %5 = arith.truncf %0 : vector<34x32xf32> to vector<34x32xbf16>
    %c0_4 = arith.constant 0 : index
    %c0_5 = arith.constant 0 : index
    %6 = vector.load %arg4[%c0_4, %c0_5] : memref<32x32xbf16, #tpu.memory_space<vmem>>, vector<32x32xbf16>
    %cst = arith.constant dense<0.000000e+00> : vector<34x32xf32>
    %7 = tpu.matmul %5, %6, %cst {dimension_numbers = #tpu.dot_dimension_numbers<[1], [0], [0], [1], [0, 0, 1, 1], [], []>} : vector<34x32xbf16>, vector<32x32xbf16>, vector<34x32xf32> -> vector<34x32xf32>
    %8 = arith.addf %4, %7 : vector<34x32xf32>
    %c0_6 = arith.constant 0 : index
    %c0_7 = arith.constant 0 : index
    %9 = vector.load %arg8[%c0_6, %c0_7] : memref<34x32xf32, #tpu.memory_space<vmem>>, vector<34x32xf32>
    tpu.vector_store %arg8[%c0_6, %c0_7], %8 {strides = array<i32>} : memref<34x32xf32, #tpu.memory_space<vmem>>, vector<34x32xf32>,
    %c0_i32_8 = arith.constant 0 : i32
    %10 = arith.cmpi eq, %arg2, %c0_i32_8 : i32
    %11 = arith.extui %10 : i1 to i32
    %c0_i32_9 = arith.constant 0 : i32
    %12 = arith.cmpi ne, %11, %c0_i32_9 : i32
    scf.if %12 {
      %c0_10 = arith.constant 0 : index
      %c0_11 = arith.constant 0 : index
      %13 = vector.load %arg8[%c0_10, %c0_11] : memref<34x32xf32, #tpu.memory_space<vmem>>, vector<34x32xf32>
      %c0_12 = arith.constant 0 : index
      %c0_13 = arith.constant 0 : index
      %14 = vector.load %arg6[%c0_12, %c0_13] : memref<34x32xf32, #tpu.memory_space<vmem>>, vector<34x32xf32>
      %15 = arith.addf %13, %14 : vector<34x32xf32>
      %c0_14 = arith.constant 0 : index
      %c0_15 = arith.constant 0 : index
      %16 = vector.load %arg7[%c0_14, %c0_15] : memref<34x32xf32, #tpu.memory_space<vmem>>, vector<34x32xf32>
      tpu.vector_store %arg7[%c0_14, %c0_15], %15 {strides = array<i32>} : memref<34x32xf32, #tpu.memory_space<vmem>>, vector<34x32xf32>,
    } else {
    }
    return
  }
  func.func @transform_0(%arg0: i32, %arg1: i32, %arg2: i32) -> (i32, i32) {
    %c0_i32 = arith.constant 0 : i32
    return %arg0, %arg2 : i32, i32
  }
  func.func @transform_1(%arg0: i32, %arg1: i32, %arg2: i32) -> (i32, i32) {
    %c0_i32 = arith.constant 0 : i32
    return %arg2, %arg1 : i32, i32
  }
  func.func @transform_2(%arg0: i32, %arg1: i32, %arg2: i32) -> (i32, i32) {
    %c0_i32 = arith.constant 0 : i32
    %c0_i32_0 = arith.constant 0 : i32
    return %c0_i32, %arg1 : i32, i32
  }
  func.func @transform_3(%arg0: i32, %arg1: i32, %arg2: i32) -> (i32, i32) {
    %c0_i32 = arith.constant 0 : i32
    return %arg0, %arg1 : i32, i32
  }
  func.func @transform_4(%arg0: i32, %arg1: i32, %arg2: i32) -> (i32, i32) {
    %c0_i32 = arith.constant 0 : i32
    return %arg0, %arg1 : i32, i32
  }
}

module attributes {stable_mosaic.version = 11 : i64} {
  func.func @kernel(%arg0: i32, %arg1: i32, %arg2: i32, %arg3: memref<34x32xf32, #tpu.memory_space<vmem>>, %arg4: memref<1x32xf32, #tpu.memory_space<vmem>>, %arg5: memref<1x32xf32, #tpu.memory_space<vmem>>, %arg6: memref<32x96xbf16, #tpu.memory_space<vmem>>, %arg7: memref<1x96xf32, #tpu.memory_space<vmem>>, %arg8: memref<34x96xf32, #tpu.memory_space<vmem>>, %arg9: memref<34x96xf32, #tpu.memory_space<vmem>>) attributes {dimension_semantics = [#tpu.dimension_semantics<parallel>, #tpu.dimension_semantics<parallel>, #tpu.dimension_semantics<arbitrary>], iteration_bounds = array<i64: 1, 1, 1>, scalar_prefetch = 0 : i64, scratch_operands = 1 : i64, tpu.core_type = #tpu.core_type<tc>, window_params = [{transform_indices = @transform_0, window_bounds = array<i64: 34, 32>}, {transform_indices = @transform_1, window_bounds = array<i64: 1, 32>}, {transform_indices = @transform_2, window_bounds = array<i64: 1, 32>}, {transform_indices = @transform_3, window_bounds = array<i64: 32, 96>}, {transform_indices = @transform_4, window_bounds = array<i64: 1, 96>}, {transform_indices = @transform_5, window_bounds = array<i64: 34, 96>}]} {
    %c0 = arith.constant 0 : index
    %c0_0 = arith.constant 0 : index
    %0 = vector.load %arg3[%c0, %c0_0] : memref<34x32xf32, #tpu.memory_space<vmem>>, vector<34x32xf32>
    %cst = arith.constant dense<0.000000e+00> : vector<34xf32>
    %1 = vector.multi_reduction <add>, %0, %cst [1] : vector<34x32xf32> to vector<34xf32>
    %2 = vector.shape_cast %1 : vector<34xf32> to vector<34x1xf32>
    %cst_1 = arith.constant 3.200000e+01 : f32
    %3 = vector.broadcast %cst_1 : f32 to vector<34x1xf32>
    %4 = arith.divf %2, %3 : vector<34x1xf32>
    %5 = vector.broadcast %4 : vector<34x1xf32> to vector<34x32xf32>
    %6 = arith.subf %0, %5 : vector<34x32xf32>
    %7 = arith.mulf %6, %6 : vector<34x32xf32>
    %cst_2 = arith.constant dense<0.000000e+00> : vector<34xf32>
    %8 = vector.multi_reduction <add>, %7, %cst_2 [1] : vector<34x32xf32> to vector<34xf32>
    %9 = vector.shape_cast %8 : vector<34xf32> to vector<34x1xf32>
    %cst_3 = arith.constant 3.200000e+01 : f32
    %10 = vector.broadcast %cst_3 : f32 to vector<34x1xf32>
    %11 = arith.divf %9, %10 : vector<34x1xf32>
    %cst_4 = arith.constant 9.99999974E-6 : f32
    %12 = vector.broadcast %cst_4 : f32 to vector<34x1xf32>
    %13 = arith.addf %11, %12 : vector<34x1xf32>
    %14 = math.rsqrt %13 : vector<34x1xf32>
    %15 = vector.broadcast %14 : vector<34x1xf32> to vector<34x32xf32>
    %16 = arith.mulf %6, %15 : vector<34x32xf32>
    %c0_5 = arith.constant 0 : index
    %c0_6 = arith.constant 0 : index
    %17 = vector.load %arg4[%c0_5, %c0_6] : memref<1x32xf32, #tpu.memory_space<vmem>>, vector<1x32xf32>
    %18 = vector.broadcast %17 : vector<1x32xf32> to vector<34x32xf32>
    %19 = arith.mulf %16, %18 : vector<34x32xf32>
    %c0_7 = arith.constant 0 : index
    %c0_8 = arith.constant 0 : index
    %20 = vector.load %arg5[%c0_7, %c0_8] : memref<1x32xf32, #tpu.memory_space<vmem>>, vector<1x32xf32>
    %21 = vector.broadcast %20 : vector<1x32xf32> to vector<34x32xf32>
    %22 = arith.addf %19, %21 : vector<34x32xf32>
    %c0_i32 = arith.constant 0 : i32
    %23 = arith.cmpi eq, %arg2, %c0_i32 : i32
    %24 = arith.extui %23 : i1 to i32
    %c0_i32_9 = arith.constant 0 : i32
    %25 = arith.cmpi ne, %24, %c0_i32_9 : i32
    scf.if %25 {
      %c0_19 = arith.constant 0 : index
      %c0_20 = arith.constant 0 : index
      %35 = vector.load %arg7[%c0_19, %c0_20] : memref<1x96xf32, #tpu.memory_space<vmem>>, vector<1x96xf32>
      %36 = vector.shape_cast %35 : vector<1x96xf32> to vector<1x96xf32>
      %37 = vector.broadcast %36 : vector<1x96xf32> to vector<34x96xf32>
      %c0_21 = arith.constant 0 : index
      %c0_22 = arith.constant 0 : index
      %38 = vector.load %arg9[%c0_21, %c0_22] : memref<34x96xf32, #tpu.memory_space<vmem>>, vector<34x96xf32>
      tpu.vector_store %arg9[%c0_21, %c0_22], %37 {strides = array<i32>} : memref<34x96xf32, #tpu.memory_space<vmem>>, vector<34x96xf32>,
    } else {
    }
    %c0_10 = arith.constant 0 : index
    %c0_11 = arith.constant 0 : index
    %26 = vector.load %arg9[%c0_10, %c0_11] : memref<34x96xf32, #tpu.memory_space<vmem>>, vector<34x96xf32>
    %27 = arith.truncf %22 : vector<34x32xf32> to vector<34x32xbf16>
    %c0_12 = arith.constant 0 : index
    %c0_13 = arith.constant 0 : index
    %28 = vector.load %arg6[%c0_12, %c0_13] : memref<32x96xbf16, #tpu.memory_space<vmem>>, vector<32x96xbf16>
    %cst_14 = arith.constant dense<0.000000e+00> : vector<34x96xf32>
    %29 = tpu.matmul %27, %28, %cst_14 {dimension_numbers = #tpu.dot_dimension_numbers<[1], [0], [0], [1], [0, 0, 1, 1], [], []>} : vector<34x32xbf16>, vector<32x96xbf16>, vector<34x96xf32> -> vector<34x96xf32>
    %30 = arith.addf %26, %29 : vector<34x96xf32>
    %c0_15 = arith.constant 0 : index
    %c0_16 = arith.constant 0 : index
    %31 = vector.load %arg9[%c0_15, %c0_16] : memref<34x96xf32, #tpu.memory_space<vmem>>, vector<34x96xf32>
    tpu.vector_store %arg9[%c0_15, %c0_16], %30 {strides = array<i32>} : memref<34x96xf32, #tpu.memory_space<vmem>>, vector<34x96xf32>,
    %c0_i32_17 = arith.constant 0 : i32
    %32 = arith.cmpi eq, %arg2, %c0_i32_17 : i32
    %33 = arith.extui %32 : i1 to i32
    %c0_i32_18 = arith.constant 0 : i32
    %34 = arith.cmpi ne, %33, %c0_i32_18 : i32
    scf.if %34 {
      %c0_19 = arith.constant 0 : index
      %c0_20 = arith.constant 0 : index
      %35 = vector.load %arg9[%c0_19, %c0_20] : memref<34x96xf32, #tpu.memory_space<vmem>>, vector<34x96xf32>
      %c0_21 = arith.constant 0 : index
      %c0_22 = arith.constant 0 : index
      %36 = vector.load %arg8[%c0_21, %c0_22] : memref<34x96xf32, #tpu.memory_space<vmem>>, vector<34x96xf32>
      tpu.vector_store %arg8[%c0_21, %c0_22], %35 {strides = array<i32>} : memref<34x96xf32, #tpu.memory_space<vmem>>, vector<34x96xf32>,
    } else {
    }
    return
  }
  func.func @transform_0(%arg0: i32, %arg1: i32, %arg2: i32) -> (i32, i32) {
    %c0_i32 = arith.constant 0 : i32
    return %arg0, %arg2 : i32, i32
  }
  func.func @transform_1(%arg0: i32, %arg1: i32, %arg2: i32) -> (i32, i32) {
    %c0_i32 = arith.constant 0 : i32
    %c0_i32_0 = arith.constant 0 : i32
    return %c0_i32, %arg2 : i32, i32
  }
  func.func @transform_2(%arg0: i32, %arg1: i32, %arg2: i32) -> (i32, i32) {
    %c0_i32 = arith.constant 0 : i32
    %c0_i32_0 = arith.constant 0 : i32
    return %c0_i32, %arg2 : i32, i32
  }
  func.func @transform_3(%arg0: i32, %arg1: i32, %arg2: i32) -> (i32, i32) {
    %c0_i32 = arith.constant 0 : i32
    return %arg2, %arg1 : i32, i32
  }
  func.func @transform_4(%arg0: i32, %arg1: i32, %arg2: i32) -> (i32, i32) {
    %c0_i32 = arith.constant 0 : i32
    %c0_i32_0 = arith.constant 0 : i32
    return %c0_i32, %arg1 : i32, i32
  }
  func.func @transform_5(%arg0: i32, %arg1: i32, %arg2: i32) -> (i32, i32) {
    %c0_i32 = arith.constant 0 : i32
    return %arg0, %arg1 : i32, i32
  }
}

module attributes {stable_mosaic.version = 11 : i64} {
  func.func @kernel(%arg0: i32, %arg1: i32, %arg2: i32, %arg3: memref<34x32xf32, #tpu.memory_space<vmem>>, %arg4: memref<1x32xf32, #tpu.memory_space<vmem>>, %arg5: memref<1x32xf32, #tpu.memory_space<vmem>>, %arg6: memref<32x128xbf16, #tpu.memory_space<vmem>>, %arg7: memref<1x128xf32, #tpu.memory_space<vmem>>, %arg8: memref<34x128xf32, #tpu.memory_space<vmem>>, %arg9: memref<34x128xf32, #tpu.memory_space<vmem>>) attributes {dimension_semantics = [#tpu.dimension_semantics<parallel>, #tpu.dimension_semantics<parallel>, #tpu.dimension_semantics<arbitrary>], iteration_bounds = array<i64: 1, 1, 1>, scalar_prefetch = 0 : i64, scratch_operands = 1 : i64, tpu.core_type = #tpu.core_type<tc>, window_params = [{transform_indices = @transform_0, window_bounds = array<i64: 34, 32>}, {transform_indices = @transform_1, window_bounds = array<i64: 1, 32>}, {transform_indices = @transform_2, window_bounds = array<i64: 1, 32>}, {transform_indices = @transform_3, window_bounds = array<i64: 32, 128>}, {transform_indices = @transform_4, window_bounds = array<i64: 1, 128>}, {transform_indices = @transform_5, window_bounds = array<i64: 34, 128>}]} {
    %c0 = arith.constant 0 : index
    %c0_0 = arith.constant 0 : index
    %0 = vector.load %arg3[%c0, %c0_0] : memref<34x32xf32, #tpu.memory_space<vmem>>, vector<34x32xf32>
    %cst = arith.constant dense<0.000000e+00> : vector<34xf32>
    %1 = vector.multi_reduction <add>, %0, %cst [1] : vector<34x32xf32> to vector<34xf32>
    %2 = vector.shape_cast %1 : vector<34xf32> to vector<34x1xf32>
    %cst_1 = arith.constant 3.200000e+01 : f32
    %3 = vector.broadcast %cst_1 : f32 to vector<34x1xf32>
    %4 = arith.divf %2, %3 : vector<34x1xf32>
    %5 = vector.broadcast %4 : vector<34x1xf32> to vector<34x32xf32>
    %6 = arith.subf %0, %5 : vector<34x32xf32>
    %7 = arith.mulf %6, %6 : vector<34x32xf32>
    %cst_2 = arith.constant dense<0.000000e+00> : vector<34xf32>
    %8 = vector.multi_reduction <add>, %7, %cst_2 [1] : vector<34x32xf32> to vector<34xf32>
    %9 = vector.shape_cast %8 : vector<34xf32> to vector<34x1xf32>
    %cst_3 = arith.constant 3.200000e+01 : f32
    %10 = vector.broadcast %cst_3 : f32 to vector<34x1xf32>
    %11 = arith.divf %9, %10 : vector<34x1xf32>
    %cst_4 = arith.constant 9.99999974E-6 : f32
    %12 = vector.broadcast %cst_4 : f32 to vector<34x1xf32>
    %13 = arith.addf %11, %12 : vector<34x1xf32>
    %14 = math.rsqrt %13 : vector<34x1xf32>
    %15 = vector.broadcast %14 : vector<34x1xf32> to vector<34x32xf32>
    %16 = arith.mulf %6, %15 : vector<34x32xf32>
    %c0_5 = arith.constant 0 : index
    %c0_6 = arith.constant 0 : index
    %17 = vector.load %arg4[%c0_5, %c0_6] : memref<1x32xf32, #tpu.memory_space<vmem>>, vector<1x32xf32>
    %18 = vector.broadcast %17 : vector<1x32xf32> to vector<34x32xf32>
    %19 = arith.mulf %16, %18 : vector<34x32xf32>
    %c0_7 = arith.constant 0 : index
    %c0_8 = arith.constant 0 : index
    %20 = vector.load %arg5[%c0_7, %c0_8] : memref<1x32xf32, #tpu.memory_space<vmem>>, vector<1x32xf32>
    %21 = vector.broadcast %20 : vector<1x32xf32> to vector<34x32xf32>
    %22 = arith.addf %19, %21 : vector<34x32xf32>
    %c0_i32 = arith.constant 0 : i32
    %23 = arith.cmpi eq, %arg2, %c0_i32 : i32
    %24 = arith.extui %23 : i1 to i32
    %c0_i32_9 = arith.constant 0 : i32
    %25 = arith.cmpi ne, %24, %c0_i32_9 : i32
    scf.if %25 {
      %c0_19 = arith.constant 0 : index
      %c0_20 = arith.constant 0 : index
      %35 = vector.load %arg7[%c0_19, %c0_20] : memref<1x128xf32, #tpu.memory_space<vmem>>, vector<1x128xf32>
      %36 = vector.shape_cast %35 : vector<1x128xf32> to vector<1x128xf32>
      %37 = vector.broadcast %36 : vector<1x128xf32> to vector<34x128xf32>
      %c0_21 = arith.constant 0 : index
      %c0_22 = arith.constant 0 : index
      %38 = vector.load %arg9[%c0_21, %c0_22] : memref<34x128xf32, #tpu.memory_space<vmem>>, vector<34x128xf32>
      tpu.vector_store %arg9[%c0_21, %c0_22], %37 {strides = array<i32>} : memref<34x128xf32, #tpu.memory_space<vmem>>, vector<34x128xf32>,
    } else {
    }
    %c0_10 = arith.constant 0 : index
    %c0_11 = arith.constant 0 : index
    %26 = vector.load %arg9[%c0_10, %c0_11] : memref<34x128xf32, #tpu.memory_space<vmem>>, vector<34x128xf32>
    %27 = arith.truncf %22 : vector<34x32xf32> to vector<34x32xbf16>
    %c0_12 = arith.constant 0 : index
    %c0_13 = arith.constant 0 : index
    %28 = vector.load %arg6[%c0_12, %c0_13] : memref<32x128xbf16, #tpu.memory_space<vmem>>, vector<32x128xbf16>
    %cst_14 = arith.constant dense<0.000000e+00> : vector<34x128xf32>
    %29 = tpu.matmul %27, %28, %cst_14 {dimension_numbers = #tpu.dot_dimension_numbers<[1], [0], [0], [1], [0, 0, 1, 1], [], []>} : vector<34x32xbf16>, vector<32x128xbf16>, vector<34x128xf32> -> vector<34x128xf32>
    %30 = arith.addf %26, %29 : vector<34x128xf32>
    %c0_15 = arith.constant 0 : index
    %c0_16 = arith.constant 0 : index
    %31 = vector.load %arg9[%c0_15, %c0_16] : memref<34x128xf32, #tpu.memory_space<vmem>>, vector<34x128xf32>
    tpu.vector_store %arg9[%c0_15, %c0_16], %30 {strides = array<i32>} : memref<34x128xf32, #tpu.memory_space<vmem>>, vector<34x128xf32>,
    %c0_i32_17 = arith.constant 0 : i32
    %32 = arith.cmpi eq, %arg2, %c0_i32_17 : i32
    %33 = arith.extui %32 : i1 to i32
    %c0_i32_18 = arith.constant 0 : i32
    %34 = arith.cmpi ne, %33, %c0_i32_18 : i32
    scf.if %34 {
      %c0_19 = arith.constant 0 : index
      %c0_20 = arith.constant 0 : index
      %35 = vector.load %arg9[%c0_19, %c0_20] : memref<34x128xf32, #tpu.memory_space<vmem>>, vector<34x128xf32>
      %cst_21 = arith.constant 5.000000e-01 : f32
      %36 = vector.broadcast %cst_21 : f32 to vector<34x128xf32>
      %37 = arith.mulf %36, %35 : vector<34x128xf32>
      %cst_22 = arith.constant 0.707106769 : f32
      %38 = vector.broadcast %cst_22 : f32 to vector<34x128xf32>
      %39 = arith.mulf %35, %38 : vector<34x128xf32>
      %cst_23 = arith.constant 0.000000e+00 : f32
      %40 = vector.broadcast %cst_23 : f32 to vector<34x128xf32>
      %41 = arith.cmpf oge, %39, %40 : vector<34x128xf32>
      %cst_24 = arith.constant 1.000000e+00 : f32
      %cst_25 = arith.constant -1.000000e+00 : f32
      %42 = vector.broadcast %cst_24 : f32 to vector<34x128xf32>
      %43 = vector.broadcast %cst_25 : f32 to vector<34x128xf32>
      %44 = arith.select %41, %42, %43 : vector<34x128xi1>, vector<34x128xf32>
      %45 = math.absf %39 : vector<34x128xf32>
      %cst_26 = arith.constant 0.327591091 : f32
      %46 = vector.broadcast %cst_26 : f32 to vector<34x128xf32>
      %47 = arith.mulf %46, %45 : vector<34x128xf32>
      %cst_27 = arith.constant 1.000000e+00 : f32
      %48 = vector.broadcast %cst_27 : f32 to vector<34x128xf32>
      %49 = arith.addf %48, %47 : vector<34x128xf32>
      %cst_28 = arith.constant 1.000000e+00 : f32
      %50 = vector.broadcast %cst_28 : f32 to vector<34x128xf32>
      %51 = arith.divf %50, %49 : vector<34x128xf32>
      %cst_29 = arith.constant 1.06140542 : f32
      %52 = vector.broadcast %cst_29 : f32 to vector<34x128xf32>
      %53 = arith.mulf %52, %51 : vector<34x128xf32>
      %cst_30 = arith.constant -1.45315206 : f32
      %54 = vector.broadcast %cst_30 : f32 to vector<34x128xf32>
      %55 = arith.addf %53, %54 : vector<34x128xf32>
      %56 = arith.mulf %55, %51 : vector<34x128xf32>
      %cst_31 = arith.constant 1.42141378 : f32
      %57 = vector.broadcast %cst_31 : f32 to vector<34x128xf32>
      %58 = arith.addf %56, %57 : vector<34x128xf32>
      %59 = arith.mulf %58, %51 : vector<34x128xf32>
      %cst_32 = arith.constant -0.284496725 : f32
      %60 = vector.broadcast %cst_32 : f32 to vector<34x128xf32>
      %61 = arith.addf %59, %60 : vector<34x128xf32>
      %62 = arith.mulf %61, %51 : vector<34x128xf32>
      %cst_33 = arith.constant 0.254829586 : f32
      %63 = vector.broadcast %cst_33 : f32 to vector<34x128xf32>
      %64 = arith.addf %62, %63 : vector<34x128xf32>
      %65 = arith.mulf %64, %51 : vector<34x128xf32>
      %cst_34 = arith.constant 0.000000e+00 : f32
      %66 = vector.broadcast %cst_34 : f32 to vector<34x128xf32>
      %67 = arith.subf %66, %45 : vector<34x128xf32>
      %68 = arith.mulf %67, %45 : vector<34x128xf32>
      %69 = math.exp %68 : vector<34x128xf32>
      %70 = arith.mulf %65, %69 : vector<34x128xf32>
      %cst_35 = arith.constant 1.000000e+00 : f32
      %71 = vector.broadcast %cst_35 : f32 to vector<34x128xf32>
      %72 = arith.subf %71, %70 : vector<34x128xf32>
      %73 = arith.mulf %44, %72 : vector<34x128xf32>
      %cst_36 = arith.constant 1.000000e+00 : f32
      %74 = vector.broadcast %cst_36 : f32 to vector<34x128xf32>
      %75 = arith.addf %74, %73 : vector<34x128xf32>
      %76 = arith.mulf %37, %75 : vector<34x128xf32>
      %c0_37 = arith.constant 0 : index
      %c0_38 = arith.constant 0 : index
      %77 = vector.load %arg8[%c0_37, %c0_38] : memref<34x128xf32, #tpu.memory_space<vmem>>, vector<34x128xf32>
      tpu.vector_store %arg8[%c0_37, %c0_38], %76 {strides = array<i32>} : memref<34x128xf32, #tpu.memory_space<vmem>>, vector<34x128xf32>,
    } else {
    }
    return
  }
  func.func @transform_0(%arg0: i32, %arg1: i32, %arg2: i32) -> (i32, i32) {
    %c0_i32 = arith.constant 0 : i32
    return %arg0, %arg2 : i32, i32
  }
  func.func @transform_1(%arg0: i32, %arg1: i32, %arg2: i32) -> (i32, i32) {
    %c0_i32 = arith.constant 0 : i32
    %c0_i32_0 = arith.constant 0 : i32
    return %c0_i32, %arg2 : i32, i32
  }
  func.func @transform_2(%arg0: i32, %arg1: i32, %arg2: i32) -> (i32, i32) {
    %c0_i32 = arith.constant 0 : i32
    %c0_i32_0 = arith.constant 0 : i32
    return %c0_i32, %arg2 : i32, i32
  }
  func.func @transform_3(%arg0: i32, %arg1: i32, %arg2: i32) -> (i32, i32) {
    %c0_i32 = arith.constant 0 : i32
    return %arg2, %arg1 : i32, i32
  }
  func.func @transform_4(%arg0: i32, %arg1: i32, %arg2: i32) -> (i32, i32) {
    %c0_i32 = arith.constant 0 : i32
    %c0_i32_0 = arith.constant 0 : i32
    return %c0_i32, %arg1 : i32, i32
  }
  func.func @transform_5(%arg0: i32, %arg1: i32, %arg2: i32) -> (i32, i32) {
    %c0_i32 = arith.constant 0 : i32
    return %arg0, %arg1 : i32, i32
  }
}

module attributes {stable_mosaic.version = 11 : i64} {
  func.func @kernel(%arg0: i32, %arg1: memref<1x12x17x8xf32, #tpu.memory_space<vmem>>, %arg2: memref<1x4x17x8xf32, #tpu.memory_space<vmem>>) attributes {dimension_semantics = [#tpu.dimension_semantics<parallel>], iteration_bounds = array<i64: 2>, scalar_prefetch = 0 : i64, scratch_operands = 0 : i64, tpu.core_type = #tpu.core_type<tc>, window_params = [{transform_indices = @transform_0, window_bounds = array<i64: 1, 12, 17, 8>}, {transform_indices = @transform_1, window_bounds = array<i64: 1, 4, 17, 8>}]} {
    %c0 = arith.constant 0 : index
    %c0_0 = arith.constant 0 : index
    %c0_1 = arith.constant 0 : index
    %c0_2 = arith.constant 0 : index
    %0 = vector.load %arg1[%c0, %c0_0, %c0_1, %c0_2] : memref<1x12x17x8xf32, #tpu.memory_space<vmem>>, vector<1x12x17x8xf32>
    %1 = vector.shape_cast %0 : vector<1x12x17x8xf32> to vector<12x17x8xf32>
    %2 = vector.extract_strided_slice %1 {offsets = [0, 0, 0], sizes = [4, 17, 8], strides = [1, 1, 1]} : vector<12x17x8xf32> to vector<4x17x8xf32>
    %3 = vector.extract_strided_slice %1 {offsets = [4, 0, 0], sizes = [4, 17, 8], strides = [1, 1, 1]} : vector<12x17x8xf32> to vector<4x17x8xf32>
    %4 = vector.extract_strided_slice %1 {offsets = [8, 0, 0], sizes = [4, 17, 8], strides = [1, 1, 1]} : vector<12x17x8xf32> to vector<4x17x8xf32>
    %5 = arith.truncf %2 : vector<4x17x8xf32> to vector<4x17x8xbf16>
    %6 = arith.truncf %3 : vector<4x17x8xf32> to vector<4x17x8xbf16>
    %7 = arith.truncf %4 : vector<4x17x8xf32> to vector<4x17x8xbf16>
    "tpu.trace_start"() <{level = 10 : i32, message = "hqd,hkd->hqk"}> : () -> ()
    %cst = arith.constant dense<0.000000e+00> : vector<4x17x17xf32>
    %8 = tpu.matmul %5, %6, %cst {dimension_numbers = #tpu.dot_dimension_numbers<[2], [2], [1], [1], [0, 0, 0, 1, 1, 1], [0], [0]>} : vector<4x17x8xbf16>, vector<4x17x8xbf16>, vector<4x17x17xf32> -> vector<4x17x17xf32>
    "tpu.trace_stop"() : () -> ()
    %cst_3 = arith.constant dense<0xFF800000> : vector<4x17xf32>
    %9 = vector.multi_reduction <maximumf>, %8, %cst_3 [2] : vector<4x17x17xf32> to vector<4x17xf32>
    %10 = vector.shape_cast %9 : vector<4x17xf32> to vector<4x17x1xf32>
    %11 = vector.broadcast %10 : vector<4x17x1xf32> to vector<4x17x17xf32>
    %12 = arith.subf %8, %11 : vector<4x17x17xf32>
    %13 = math.exp %12 : vector<4x17x17xf32>
    %cst_4 = arith.constant dense<0.000000e+00> : vector<4x17xf32>
    %14 = vector.multi_reduction <add>, %13, %cst_4 [2] : vector<4x17x17xf32> to vector<4x17xf32>
    %15 = vector.shape_cast %14 : vector<4x17xf32> to vector<4x17x1xf32>
    %16 = tpu.reciprocal %15 {approx = true} : vector<4x17x1xf32> -> vector<4x17x1xf32>
    %17 = vector.broadcast %16 : vector<4x17x1xf32> to vector<4x17x17xf32>
    %18 = arith.mulf %13, %17 : vector<4x17x17xf32>
    %19 = arith.truncf %18 : vector<4x17x17xf32> to vector<4x17x17xbf16>
    "tpu.trace_start"() <{level = 10 : i32, message = "hqk,hkd->hqd"}> : () -> ()
    %cst_5 = arith.constant dense<0.000000e+00> : vector<4x17x8xf32>
    %20 = tpu.matmul %19, %7, %cst_5 {dimension_numbers = #tpu.dot_dimension_numbers<[2], [1], [1], [2], [0, 0, 0, 1, 1, 2], [0], [0]>} : vector<4x17x17xbf16>, vector<4x17x8xbf16>, vector<4x17x8xf32> -> vector<4x17x8xf32>
    "tpu.trace_stop"() : () -> ()
    %c0_6 = arith.constant 0 : index
    %c0_7 = arith.constant 0 : index
    %c0_8 = arith.constant 0 : index
    %c0_9 = arith.constant 0 : index
    %21 = vector.load %arg2[%c0_6, %c0_7, %c0_8, %c0_9] : memref<1x4x17x8xf32, #tpu.memory_space<vmem>>, vector<1x4x17x8xf32>
    %22 = vector.shape_cast %21 : vector<1x4x17x8xf32> to vector<4x17x8xf32>
    %23 = vector.shape_cast %20 : vector<4x17x8xf32> to vector<1x4x17x8xf32>
    tpu.vector_store %arg2[%c0_6, %c0_7, %c0_8, %c0_9], %23 {strides = array<i32>} : memref<1x4x17x8xf32, #tpu.memory_space<vmem>>, vector<1x4x17x8xf32>,
    return
  }
  func.func @transform_0(%arg0: i32) -> (i32, i32, i32, i32) {
    %c0_i32 = arith.constant 0 : i32
    %c0_i32_0 = arith.constant 0 : i32
    %c0_i32_1 = arith.constant 0 : i32
    %c0_i32_2 = arith.constant 0 : i32
    return %arg0, %c0_i32, %c0_i32_0, %c0_i32_1 : i32, i32, i32, i32
  }
  func.func @transform_1(%arg0: i32) -> (i32, i32, i32, i32) {
    %c0_i32 = arith.constant 0 : i32
    %c0_i32_0 = arith.constant 0 : i32
    %c0_i32_1 = arith.constant 0 : i32
    %c0_i32_2 = arith.constant 0 : i32
    return %arg0, %c0_i32, %c0_i32_0, %c0_i32_1 : i32, i32, i32, i32
  }
}

module attributes {stable_mosaic.version = 11 : i64} {
  func.func @kernel(%arg0: i32, %arg1: i32, %arg2: i32, %arg3: memref<34x128xf32, #tpu.memory_space<vmem>>, %arg4: memref<128x32xbf16, #tpu.memory_space<vmem>>, %arg5: memref<1x32xf32, #tpu.memory_space<vmem>>, %arg6: memref<34x32xf32, #tpu.memory_space<vmem>>, %arg7: memref<34x32xf32, #tpu.memory_space<vmem>>, %arg8: memref<34x32xf32, #tpu.memory_space<vmem>>) attributes {dimension_semantics = [#tpu.dimension_semantics<parallel>, #tpu.dimension_semantics<parallel>, #tpu.dimension_semantics<arbitrary>], iteration_bounds = array<i64: 1, 1, 1>, scalar_prefetch = 0 : i64, scratch_operands = 1 : i64, tpu.core_type = #tpu.core_type<tc>, window_params = [{transform_indices = @transform_0, window_bounds = array<i64: 34, 128>}, {transform_indices = @transform_1, window_bounds = array<i64: 128, 32>}, {transform_indices = @transform_2, window_bounds = array<i64: 1, 32>}, {transform_indices = @transform_3, window_bounds = array<i64: 34, 32>}, {transform_indices = @transform_4, window_bounds = array<i64: 34, 32>}]} {
    %c0 = arith.constant 0 : index
    %c0_0 = arith.constant 0 : index
    %0 = vector.load %arg3[%c0, %c0_0] : memref<34x128xf32, #tpu.memory_space<vmem>>, vector<34x128xf32>
    %c0_i32 = arith.constant 0 : i32
    %1 = arith.cmpi eq, %arg2, %c0_i32 : i32
    %2 = arith.extui %1 : i1 to i32
    %c0_i32_1 = arith.constant 0 : i32
    %3 = arith.cmpi ne, %2, %c0_i32_1 : i32
    scf.if %3 {
      %c0_10 = arith.constant 0 : index
      %c0_11 = arith.constant 0 : index
      %13 = vector.load %arg5[%c0_10, %c0_11] : memref<1x32xf32, #tpu.memory_space<vmem>>, vector<1x32xf32>
      %14 = vector.shape_cast %13 : vector<1x32xf32> to vector<1x32xf32>
      %15 = vector.broadcast %14 : vector<1x32xf32> to vector<34x32xf32>
      %c0_12 = arith.constant 0 : index
      %c0_13 = arith.constant 0 : index
      %16 = vector.load %arg8[%c0_12, %c0_13] : memref<34x32xf32, #tpu.memory_space<vmem>>, vector<34x32xf32>
      tpu.vector_store %arg8[%c0_12, %c0_13], %15 {strides = array<i32>} : memref<34x32xf32, #tpu.memory_space<vmem>>, vector<34x32xf32>,
    } else {
    }
    %c0_2 = arith.constant 0 : index
    %c0_3 = arith.constant 0 : index
    %4 = vector.load %arg8[%c0_2, %c0_3] : memref<34x32xf32, #tpu.memory_space<vmem>>, vector<34x32xf32>
    %5 = arith.truncf %0 : vector<34x128xf32> to vector<34x128xbf16>
    %c0_4 = arith.constant 0 : index
    %c0_5 = arith.constant 0 : index
    %6 = vector.load %arg4[%c0_4, %c0_5] : memref<128x32xbf16, #tpu.memory_space<vmem>>, vector<128x32xbf16>
    %cst = arith.constant dense<0.000000e+00> : vector<34x32xf32>
    %7 = tpu.matmul %5, %6, %cst {dimension_numbers = #tpu.dot_dimension_numbers<[1], [0], [0], [1], [0, 0, 1, 1], [], []>} : vector<34x128xbf16>, vector<128x32xbf16>, vector<34x32xf32> -> vector<34x32xf32>
    %8 = arith.addf %4, %7 : vector<34x32xf32>
    %c0_6 = arith.constant 0 : index
    %c0_7 = arith.constant 0 : index
    %9 = vector.load %arg8[%c0_6, %c0_7] : memref<34x32xf32, #tpu.memory_space<vmem>>, vector<34x32xf32>
    tpu.vector_store %arg8[%c0_6, %c0_7], %8 {strides = array<i32>} : memref<34x32xf32, #tpu.memory_space<vmem>>, vector<34x32xf32>,
    %c0_i32_8 = arith.constant 0 : i32
    %10 = arith.cmpi eq, %arg2, %c0_i32_8 : i32
    %11 = arith.extui %10 : i1 to i32
    %c0_i32_9 = arith.constant 0 : i32
    %12 = arith.cmpi ne, %11, %c0_i32_9 : i32
    scf.if %12 {
      %c0_10 = arith.constant 0 : index
      %c0_11 = arith.constant 0 : index
      %13 = vector.load %arg8[%c0_10, %c0_11] : memref<34x32xf32, #tpu.memory_space<vmem>>, vector<34x32xf32>
      %c0_12 = arith.constant 0 : index
      %c0_13 = arith.constant 0 : index
      %14 = vector.load %arg6[%c0_12, %c0_13] : memref<34x32xf32, #tpu.memory_space<vmem>>, vector<34x32xf32>
      %15 = arith.addf %13, %14 : vector<34x32xf32>
      %c0_14 = arith.constant 0 : index
      %c0_15 = arith.constant 0 : index
      %16 = vector.load %arg7[%c0_14, %c0_15] : memref<34x32xf32, #tpu.memory_space<vmem>>, vector<34x32xf32>
      tpu.vector_store %arg7[%c0_14, %c0_15], %15 {strides = array<i32>} : memref<34x32xf32, #tpu.memory_space<vmem>>, vector<34x32xf32>,
    } else {
    }
    return
  }
  func.func @transform_0(%arg0: i32, %arg1: i32, %arg2: i32) -> (i32, i32) {
    %c0_i32 = arith.constant 0 : i32
    return %arg0, %arg2 : i32, i32
  }
  func.func @transform_1(%arg0: i32, %arg1: i32, %arg2: i32) -> (i32, i32) {
    %c0_i32 = arith.constant 0 : i32
    return %arg2, %arg1 : i32, i32
  }
  func.func @transform_2(%arg0: i32, %arg1: i32, %arg2: i32) -> (i32, i32) {
    %c0_i32 = arith.constant 0 : i32
    %c0_i32_0 = arith.constant 0 : i32
    return %c0_i32, %arg1 : i32, i32
  }
  func.func @transform_3(%arg0: i32, %arg1: i32, %arg2: i32) -> (i32, i32) {
    %c0_i32 = arith.constant 0 : i32
    return %arg0, %arg1 : i32, i32
  }
  func.func @transform_4(%arg0: i32, %arg1: i32, %arg2: i32) -> (i32, i32) {
    %c0_i32 = arith.constant 0 : i32
    return %arg0, %arg1 : i32, i32
  }
}

module attributes {stable_mosaic.version = 11 : i64} {
  func.func @kernel(%arg0: i32, %arg1: i32, %arg2: i32, %arg3: memref<2x32xf32, #tpu.memory_space<vmem>>, %arg4: memref<1x32xf32, #tpu.memory_space<vmem>>, %arg5: memref<1x32xf32, #tpu.memory_space<vmem>>, %arg6: memref<32x10xbf16, #tpu.memory_space<vmem>>, %arg7: memref<1x10xf32, #tpu.memory_space<vmem>>, %arg8: memref<2x10xf32, #tpu.memory_space<vmem>>, %arg9: memref<2x10xf32, #tpu.memory_space<vmem>>) attributes {dimension_semantics = [#tpu.dimension_semantics<parallel>, #tpu.dimension_semantics<parallel>, #tpu.dimension_semantics<arbitrary>], iteration_bounds = array<i64: 1, 1, 1>, scalar_prefetch = 0 : i64, scratch_operands = 1 : i64, tpu.core_type = #tpu.core_type<tc>, window_params = [{transform_indices = @transform_0, window_bounds = array<i64: 2, 32>}, {transform_indices = @transform_1, window_bounds = array<i64: 1, 32>}, {transform_indices = @transform_2, window_bounds = array<i64: 1, 32>}, {transform_indices = @transform_3, window_bounds = array<i64: 32, 10>}, {transform_indices = @transform_4, window_bounds = array<i64: 1, 10>}, {transform_indices = @transform_5, window_bounds = array<i64: 2, 10>}]} {
    %c0 = arith.constant 0 : index
    %c0_0 = arith.constant 0 : index
    %0 = vector.load %arg3[%c0, %c0_0] : memref<2x32xf32, #tpu.memory_space<vmem>>, vector<2x32xf32>
    %cst = arith.constant dense<0.000000e+00> : vector<2xf32>
    %1 = vector.multi_reduction <add>, %0, %cst [1] : vector<2x32xf32> to vector<2xf32>
    %2 = vector.shape_cast %1 : vector<2xf32> to vector<2x1xf32>
    %cst_1 = arith.constant 3.200000e+01 : f32
    %3 = vector.broadcast %cst_1 : f32 to vector<2x1xf32>
    %4 = arith.divf %2, %3 : vector<2x1xf32>
    %5 = vector.broadcast %4 : vector<2x1xf32> to vector<2x32xf32>
    %6 = arith.subf %0, %5 : vector<2x32xf32>
    %7 = arith.mulf %6, %6 : vector<2x32xf32>
    %cst_2 = arith.constant dense<0.000000e+00> : vector<2xf32>
    %8 = vector.multi_reduction <add>, %7, %cst_2 [1] : vector<2x32xf32> to vector<2xf32>
    %9 = vector.shape_cast %8 : vector<2xf32> to vector<2x1xf32>
    %cst_3 = arith.constant 3.200000e+01 : f32
    %10 = vector.broadcast %cst_3 : f32 to vector<2x1xf32>
    %11 = arith.divf %9, %10 : vector<2x1xf32>
    %cst_4 = arith.constant 9.99999974E-6 : f32
    %12 = vector.broadcast %cst_4 : f32 to vector<2x1xf32>
    %13 = arith.addf %11, %12 : vector<2x1xf32>
    %14 = math.rsqrt %13 : vector<2x1xf32>
    %15 = vector.broadcast %14 : vector<2x1xf32> to vector<2x32xf32>
    %16 = arith.mulf %6, %15 : vector<2x32xf32>
    %c0_5 = arith.constant 0 : index
    %c0_6 = arith.constant 0 : index
    %17 = vector.load %arg4[%c0_5, %c0_6] : memref<1x32xf32, #tpu.memory_space<vmem>>, vector<1x32xf32>
    %18 = vector.broadcast %17 : vector<1x32xf32> to vector<2x32xf32>
    %19 = arith.mulf %16, %18 : vector<2x32xf32>
    %c0_7 = arith.constant 0 : index
    %c0_8 = arith.constant 0 : index
    %20 = vector.load %arg5[%c0_7, %c0_8] : memref<1x32xf32, #tpu.memory_space<vmem>>, vector<1x32xf32>
    %21 = vector.broadcast %20 : vector<1x32xf32> to vector<2x32xf32>
    %22 = arith.addf %19, %21 : vector<2x32xf32>
    %c0_i32 = arith.constant 0 : i32
    %23 = arith.cmpi eq, %arg2, %c0_i32 : i32
    %24 = arith.extui %23 : i1 to i32
    %c0_i32_9 = arith.constant 0 : i32
    %25 = arith.cmpi ne, %24, %c0_i32_9 : i32
    scf.if %25 {
      %c0_19 = arith.constant 0 : index
      %c0_20 = arith.constant 0 : index
      %35 = vector.load %arg7[%c0_19, %c0_20] : memref<1x10xf32, #tpu.memory_space<vmem>>, vector<1x10xf32>
      %36 = vector.shape_cast %35 : vector<1x10xf32> to vector<1x10xf32>
      %37 = vector.broadcast %36 : vector<1x10xf32> to vector<2x10xf32>
      %c0_21 = arith.constant 0 : index
      %c0_22 = arith.constant 0 : index
      %38 = vector.load %arg9[%c0_21, %c0_22] : memref<2x10xf32, #tpu.memory_space<vmem>>, vector<2x10xf32>
      tpu.vector_store %arg9[%c0_21, %c0_22], %37 {strides = array<i32>} : memref<2x10xf32, #tpu.memory_space<vmem>>, vector<2x10xf32>,
    } else {
    }
    %c0_10 = arith.constant 0 : index
    %c0_11 = arith.constant 0 : index
    %26 = vector.load %arg9[%c0_10, %c0_11] : memref<2x10xf32, #tpu.memory_space<vmem>>, vector<2x10xf32>
    %27 = arith.truncf %22 : vector<2x32xf32> to vector<2x32xbf16>
    %c0_12 = arith.constant 0 : index
    %c0_13 = arith.constant 0 : index
    %28 = vector.load %arg6[%c0_12, %c0_13] : memref<32x10xbf16, #tpu.memory_space<vmem>>, vector<32x10xbf16>
    %cst_14 = arith.constant dense<0.000000e+00> : vector<2x10xf32>
    %29 = tpu.matmul %27, %28, %cst_14 {dimension_numbers = #tpu.dot_dimension_numbers<[1], [0], [0], [1], [0, 0, 1, 1], [], []>} : vector<2x32xbf16>, vector<32x10xbf16>, vector<2x10xf32> -> vector<2x10xf32>
    %30 = arith.addf %26, %29 : vector<2x10xf32>
    %c0_15 = arith.constant 0 : index
    %c0_16 = arith.constant 0 : index
    %31 = vector.load %arg9[%c0_15, %c0_16] : memref<2x10xf32, #tpu.memory_space<vmem>>, vector<2x10xf32>
    tpu.vector_store %arg9[%c0_15, %c0_16], %30 {strides = array<i32>} : memref<2x10xf32, #tpu.memory_space<vmem>>, vector<2x10xf32>,
    %c0_i32_17 = arith.constant 0 : i32
    %32 = arith.cmpi eq, %arg2, %c0_i32_17 : i32
    %33 = arith.extui %32 : i1 to i32
    %c0_i32_18 = arith.constant 0 : i32
    %34 = arith.cmpi ne, %33, %c0_i32_18 : i32
    scf.if %34 {
      %c0_19 = arith.constant 0 : index
      %c0_20 = arith.constant 0 : index
      %35 = vector.load %arg9[%c0_19, %c0_20] : memref<2x10xf32, #tpu.memory_space<vmem>>, vector<2x10xf32>
      %c0_21 = arith.constant 0 : index
      %c0_22 = arith.constant 0 : index
      %36 = vector.load %arg8[%c0_21, %c0_22] : memref<2x10xf32, #tpu.memory_space<vmem>>, vector<2x10xf32>
      tpu.vector_store %arg8[%c0_21, %c0_22], %35 {strides = array<i32>} : memref<2x10xf32, #tpu.memory_space<vmem>>, vector<2x10xf32>,
    } else {
    }
    return
  }
  func.func @transform_0(%arg0: i32, %arg1: i32, %arg2: i32) -> (i32, i32) {
    %c0_i32 = arith.constant 0 : i32
    return %arg0, %arg2 : i32, i32
  }
  func.func @transform_1(%arg0: i32, %arg1: i32, %arg2: i32) -> (i32, i32) {
    %c0_i32 = arith.constant 0 : i32
    %c0_i32_0 = arith.constant 0 : i32
    return %c0_i32, %arg2 : i32, i32
  }
  func.func @transform_2(%arg0: i32, %arg1: i32, %arg2: i32) -> (i32, i32) {
    %c0_i32 = arith.constant 0 : i32
    %c0_i32_0 = arith.constant 0 : i32
    return %c0_i32, %arg2 : i32, i32
  }
  func.func @transform_3(%arg0: i32, %arg1: i32, %arg2: i32) -> (i32, i32) {
    %c0_i32 = arith.constant 0 : i32
    return %arg2, %arg1 : i32, i32
  }
  func.func @transform_4(%arg0: i32, %arg1: i32, %arg2: i32) -> (i32, i32) {
    %c0_i32 = arith.constant 0 : i32
    %c0_i32_0 = arith.constant 0 : i32
    return %c0_i32, %arg1 : i32, i32
  }
  func.func @transform_5(%arg0: i32, %arg1: i32, %arg2: i32) -> (i32, i32) {
    %c0_i32 = arith.constant 0 : i32
    return %arg0, %arg1 : i32, i32
  }
}

</mosaic_0001>

<llo_original>
// kernel: vit_context_forward.20
$region0: #{vit_context_forward.20}
  #allocation0 [shape = 'u32[]', space=smem, size = 0x4, offset = 0x4, fixed_abs, tag = 'smem constant byte address 0x4 - core index']
  #allocation1 [shape = 'u32[144,128]{1,0:T(1,128)}', space=vmem, size = 0x12000, scoped, tag = 'internal scratch']
  #allocation2 [shape = 'f32[32,32]{1,0:T(8,128)}', space=vmem, size = 0x4000, scoped, tag = 'scratch operand']
  %s0 = inlined_call_operand.vmem [shape: f32[32,192], index: 0, kind: input, shape index: {}]
  %s1 = inlined_call_operand.vmem [shape: bf16[192,32], index: 1, kind: input, shape index: {}]
  %s2 = inlined_call_operand.vmem [shape: f32[1,32], index: 2, kind: input, shape index: {}]
  %s3 = inlined_call_operand.vmem [shape: f32[32,32], index: 3, kind: output, shape index: {}]
  %s4 = sld [smem:[#allocation0]]
  $region30: #{vit_context_forward.20} parent=0
    _
  %s6 = ssub.s32 1, %s4
  %s7 = scalar_select 0, %s6, %s4
  // Predicated region
  $region2: #{vit_context_forward.20} parent=0 // pred_check
    _
  $region3: #{vit_context_forward.20} parent=0 // pred_check_branch
    %9 = sbr.rel (0) target = $region5
  $region4: #{vit_context_forward.20} parent=0 // pred_region
    _
  $region5: #{vit_context_forward.20} parent=0 // pred_fallthru
    _
  // Predicated region
  $region6: #{vit_context_forward.20} parent=0 // pred_check
    _
  $region7: #{vit_context_forward.20} parent=0 // pred_check_branch
    %11 = sbr.rel (0) target = $region9
  $region8: #{vit_context_forward.20} parent=0 // pred_region
    _
  $region9: #{vit_context_forward.20} parent=0 // pred_fallthru
    _
  // Predicated region
  $region10: #{vit_context_forward.20} parent=0 // pred_check
    _
  $region11: #{vit_context_forward.20} parent=0 // pred_check_branch
    %13 = sbr.rel (0) target = $region13
  $region12: #{vit_context_forward.20} parent=0 // pred_region
    _
  $region13: #{vit_context_forward.20} parent=0 // pred_fallthru
    _
  %v15 = vld [vmem:[%s0] sm:$0xff]
  %v16 = vld [vmem:[%s0 + $0x8] sm:$0xff]
  %v17 = vld [vmem:[%s0 + $0x10] sm:$0xff]
  %v18 = vld [vmem:[%s0 + $0x18] sm:$0xff]
  %v19 = vld [vmem:[%s0 + $0x20] sm:$0xff]
  %v20 = vld [vmem:[%s0 + $0x28] sm:$0xff]
  %v21 = vld [vmem:[%s0 + $0x30] sm:$0xff]
  %v22 = vld [vmem:[%s0 + $0x38] sm:$0xff]
  %p23 = scmp.eq.s32.totalorder 0, 0
  // Predicated region
  $region14: #{vit_context_forward.20} parent=0 // pred_check
    %p24 = pneg %p23
  $region15: #{vit_context_forward.20} parent=0 // pred_check_branch
    %26 = sbr.rel (%p24) target = $region17
  $region16: #{vit_context_forward.20} parent=0 // pred_region
    %v27 = vld [vmem:[%s2] sm:$0x1]
    %v29 = vlaneseq
    %v30 = vshrl.u32 %v29, 7
    %v31 = vsub.s32 0, %v30
    %v32 = vrot.slane %v27, %v31
    %vm34 = vcmask 261120
    %35 = vst.msk [vmem:[#allocation2] sm:$0xff] %vm34, %v32
    %36 = vst.msk [vmem:[#allocation2 + $0x8] sm:$0xff] %vm34, %v32
    %37 = vst.msk [vmem:[#allocation2 + $0x10] sm:$0xff] %vm34, %v32
    %38 = vst.msk [vmem:[#allocation2 + $0x18] sm:$0xff] %vm34, %v32
  $region17: #{vit_context_forward.20} parent=0 // pred_fallthru
    _
  %v39 = vld [vmem:[#allocation2] sm:$0xff]
  %v40 = vld [vmem:[#allocation2 + $0x8] sm:$0xff]
  %v41 = vld [vmem:[#allocation2 + $0x10] sm:$0xff]
  %v42 = vld [vmem:[#allocation2 + $0x18] sm:$0xff]
  %v43 = vpack.c.bf16 %v17, %v15
  %v44 = vpack.c.bf16 %v18, %v16
  %v45 = vpack.c.bf16 %v21, %v19
  %v46 = vpack.c.bf16 %v22, %v20
  %v47 = vld [vmem:[%s1] sm:$0xf]
  %v48 = vld [vmem:[%s1 + $0x4] sm:$0xf]
  %v49 = vld [vmem:[%s1 + $0x8] sm:$0xf]
  %v50 = vld [vmem:[%s1 + $0xc] sm:$0xf]
  %v51 = vld [vmem:[%s1 + $0x10] sm:$0xf]
  %v52 = vld [vmem:[%s1 + $0x14] sm:$0xf]
  %v53 = vld [vmem:[%s1 + $0x18] sm:$0xf]
  %v54 = vld [vmem:[%s1 + $0x1c] sm:$0xf]
  %v55 = vld [vmem:[%s1 + $0x20] sm:$0xf]
  %v56 = vld [vmem:[%s1 + $0x24] sm:$0xf]
  %v57 = vld [vmem:[%s1 + $0x28] sm:$0xf]
  %v58 = vld [vmem:[%s1 + $0x2c] sm:$0xf]
  %v59 = vld [vmem:[%s1 + $0x30] sm:$0xf]
  %v60 = vld [vmem:[%s1 + $0x34] sm:$0xf]
  %v61 = vld [vmem:[%s1 + $0x38] sm:$0xf]
  %v62 = vld [vmem:[%s1 + $0x3c] sm:$0xf]
  %v63 = vld [vmem:[%s1 + $0x40] sm:$0xf]
  %v64 = vld [vmem:[%s1 + $0x44] sm:$0xf]
  %v65 = vld [vmem:[%s1 + $0x48] sm:$0xf]
  %v66 = vld [vmem:[%s1 + $0x4c] sm:$0xf]
  %v67 = vld [vmem:[%s1 + $0x50] sm:$0xf]
  %v68 = vld [vmem:[%s1 + $0x54] sm:$0xf]
  %v69 = vld [vmem:[%s1 + $0x58] sm:$0xf]
  %v70 = vld [vmem:[%s1 + $0x5c] sm:$0xf]
  %v95 = vunpack.c.l.b16 %v47
  %v96 = vunpack.c.l.b16 %v48
  %v97 = vunpack.c.l.b16 %v49
  %v98 = vunpack.c.l.b16 %v50
  %v99 = vunpack.c.l.b16 %v51
  %v100 = vunpack.c.l.b16 %v52
  %v101 = vunpack.c.l.b16 %v53
  %v102 = vunpack.c.l.b16 %v54
  %v103 = vunpack.c.l.b16 %v55
  %v104 = vunpack.c.l.b16 %v56
  %v105 = vunpack.c.l.b16 %v57
  %v106 = vunpack.c.l.b16 %v58
  %v107 = vunpack.c.l.b16 %v59
  %v108 = vunpack.c.l.b16 %v60
  %v109 = vunpack.c.l.b16 %v61
  %v110 = vunpack.c.l.b16 %v62
  %v111 = vunpack.c.l.b16 %v63
  %v112 = vunpack.c.l.b16 %v64
  %v113 = vunpack.c.l.b16 %v65
  %v114 = vunpack.c.l.b16 %v66
  %v115 = vunpack.c.l.b16 %v67
  %v116 = vunpack.c.l.b16 %v68
  %v117 = vunpack.c.l.b16 %v69
  %v118 = vunpack.c.l.b16 %v70
  %v119 = vpack.c.b16 %v96, %v95
  %v120 = vpack.c.b16 %v98, %v97
  %v121 = vpack.c.b16 %v100, %v99
  %v122 = vpack.c.b16 %v102, %v101
  %v123 = vpack.c.b16 %v104, %v103
  %v124 = vpack.c.b16 %v106, %v105
  %v125 = vpack.c.b16 %v108, %v107
  %v126 = vpack.c.b16 %v110, %v109
  %v127 = vpack.c.b16 %v112, %v111
  %v128 = vpack.c.b16 %v114, %v113
  %v129 = vpack.c.b16 %v116, %v115
  %v130 = vpack.c.b16 %v118, %v117
  %vm143 = vcmask 523264
  %v145 = vsel %vm143, %v44, 0
  %v148 = vsel %vm143, %v46, 0
  %150 = vmatprep.subr.bf16.mxu0 0
  %151 = vmatpush1.bf16.msra.mxu0 %v119
  %152 = vmatprep.subr.bf16.mxu0 0
  %153 = vmatpush1.bf16.msra.mxu0 %v120
  %154 = vmatprep.subr.bf16.mxu0 0
  %155 = vmatpush1.bf16.msra.mxu0 %v121
  %156 = vmatprep.subr.bf16.mxu0 0
  %157 = vmatpush1.bf16.msra.mxu0 %v122
  %158 = vmatprep.subr.bf16.mxu0 0
  %159 = vmatpush1.bf16.msra.mxu0 %v123
  %160 = vmatprep.subr.bf16.mxu0 0
  %161 = vmatpush1.bf16.msra.mxu0 %v124
  %162 = vmatprep.subr.bf16.mxu0 0
  %163 = vmatpush1.bf16.msra.mxu0 %v125
  %164 = vmatprep.subr.bf16.mxu0 0
  %165 = vmatpush1.bf16.msra.mxu0 %v126
  %166 = vmatprep.subr.bf16.mxu0 0
  %167 = vmatpush1.bf16.msra.mxu0 %v127
  %168 = vmatprep.subr.bf16.mxu0 0
  %169 = vmatpush1.bf16.msra.mxu0 %v128
  %170 = vmatprep.subr.bf16.mxu0 0
  %171 = vmatpush1.bf16.msra.mxu0 %v129
  %172 = vmatprep.subr.bf16.mxu0 0
  %173 = vmatpush1.bf16.msra.mxu0 %v130
  %174 = vmatprep.subr.bf16.mxu0 0
  %175 = vmatpush1.bf16.msra.mxu0 0
  %176 = vmatprep.subr.bf16.mxu0 0
  %177 = vmatpush1.bf16.msra.mxu0 0
  %178 = vmatprep.subr.bf16.mxu0 0
  %179 = vmatpush1.bf16.msra.mxu0 0
  %180 = vmatprep.subr.bf16.mxu0 0
  %181 = vmatpush1.bf16.msra.mxu0 0
  %182 = vmatprep.mubr.bf16.mxu0 %v145
  %183 = vmatmul.mubr.bf16.gmra.mrb[0].mxu0 %v43
  %v184 = vpop.f32.mrb[0].mxu0
  %v185 = vadd.f32 0.0, %v184
  %v186 = vpop.f32.mrb[0].mxu0
  %v187 = vpop.f32.mrb[0].mxu0
  %v188 = vadd.f32 0.0, %v187
  %v189 = vpop.f32.mrb[0].mxu0
  %190 = vmatprep.mubr.bf16.mxu0 %v148
  %191 = vmatmul.mubr.bf16.gmra.mrb[0].mxu0 %v45
  %v192 = vpop.f32.mrb[0].mxu0
  %v193 = vadd.f32 0.0, %v192
  %v194 = vpop.f32.mrb[0].mxu0
  %v195 = vpop.f32.mrb[0].mxu0
  %v196 = vadd.f32 0.0, %v195
  %v197 = vpop.f32.mrb[0].mxu0
  %198 = vdwg.mxu0
  %v199 = vadd.f32 %v39, %v185
  %v200 = vadd.f32 %v40, %v188
  %v201 = vadd.f32 %v41, %v193
  %v202 = vadd.f32 %v42, %v196
  %vm203 = vcmask 261120
  %204 = vst.msk [vmem:[#allocation2] sm:$0xff] %vm203, %v199
  %205 = vst.msk [vmem:[#allocation2 + $0x8] sm:$0xff] %vm203, %v200
  %206 = vst.msk [vmem:[#allocation2 + $0x10] sm:$0xff] %vm203, %v201
  %207 = vst.msk [vmem:[#allocation2 + $0x18] sm:$0xff] %vm203, %v202
  // Predicated region
  $region18: #{vit_context_forward.20} parent=0 // pred_check
    %p208 = pneg %p23
  $region19: #{vit_context_forward.20} parent=0 // pred_check_branch
    %210 = sbr.rel (%p208) target = $region21
  $region20: #{vit_context_forward.20} parent=0 // pred_region
    %v211 = vld [vmem:[#allocation2] sm:$0xff]
    %v212 = vld [vmem:[#allocation2 + $0x8] sm:$0xff]
    %v213 = vld [vmem:[#allocation2 + $0x10] sm:$0xff]
    %v214 = vld [vmem:[#allocation2 + $0x18] sm:$0xff]
    %215 = vst.msk [vmem:[%s3] sm:$0xff] %vm203, %v211
    %216 = vst.msk [vmem:[%s3 + $0x8] sm:$0xff] %vm203, %v212
    %217 = vst.msk [vmem:[%s3 + $0x10] sm:$0xff] %vm203, %v213
    %218 = vst.msk [vmem:[%s3 + $0x18] sm:$0xff] %vm203, %v214
  $region21: #{vit_context_forward.20} parent=0 // pred_fallthru
    _
  // Predicated region
  $region22: #{vit_context_forward.20} parent=0 // pred_check
    _
  $region23: #{vit_context_forward.20} parent=0 // pred_check_branch
    %220 = sbr.rel (0) target = $region25
  $region24: #{vit_context_forward.20} parent=0 // pred_region
    _
  $region25: #{vit_context_forward.20} parent=0 // pred_fallthru
    _
  // Predicated region
  $region26: #{vit_context_forward.20} parent=0 // pred_check
    _
  $region27: #{vit_context_forward.20} parent=0 // pred_check_branch
    %222 = sbr.rel (0) target = $region29
  $region28: #{vit_context_forward.20} parent=0 // pred_region
    _
  $region29: #{vit_context_forward.20} parent=0 // pred_fallthru
    _

// kernel: vit_context_forward.22
$region0: #{vit_context_forward.22}
  #allocation0 [shape = 'u32[]', space=smem, size = 0x4, offset = 0x4, fixed_abs, tag = 'smem constant byte address 0x4 - core index']
  #allocation1 [shape = 'u32[144,128]{1,0:T(1,128)}', space=vmem, size = 0x12000, scoped, tag = 'internal scratch']
  #allocation2 [shape = 'f32[16,64]{1,0:T(8,128)}', space=vmem, size = 0x2000, scoped, tag = 'scratch operand']
  %s0 = inlined_call_operand.vmem [shape: f32[16,48], index: 0, kind: input, shape index: {}]
  %s1 = inlined_call_operand.vmem [shape: f32[1,48], index: 1, kind: input, shape index: {}]
  %s2 = inlined_call_operand.vmem [shape: f32[1,48], index: 2, kind: input, shape index: {}]
  %s3 = inlined_call_operand.vmem [shape: bf16[48,64], index: 3, kind: input, shape index: {}]
  %s4 = inlined_call_operand.vmem [shape: f32[1,64], index: 4, kind: input, shape index: {}]
  %s5 = inlined_call_operand.vmem [shape: f32[16,64], index: 5, kind: output, shape index: {}]
  %s6 = sld [smem:[#allocation0]]
  $region38: #{vit_context_forward.22} parent=0
    _
  %s8 = ssub.s32 1, %s6
  %s9 = scalar_select 0, %s8, %s6
  // Predicated region
  $region2: #{vit_context_forward.22} parent=0 // pred_check
    _
  $region3: #{vit_context_forward.22} parent=0 // pred_check_branch
    %11 = sbr.rel (0) target = $region5
  $region4: #{vit_context_forward.22} parent=0 // pred_region
    _
  $region5: #{vit_context_forward.22} parent=0 // pred_fallthru
    _
  // Predicated region
  $region6: #{vit_context_forward.22} parent=0 // pred_check
    _
  $region7: #{vit_context_forward.22} parent=0 // pred_check_branch
    %13 = sbr.rel (0) target = $region9
  $region8: #{vit_context_forward.22} parent=0 // pred_region
    _
  $region9: #{vit_context_forward.22} parent=0 // pred_fallthru
    _
  // Predicated region
  $region10: #{vit_context_forward.22} parent=0 // pred_check
    _
  $region11: #{vit_context_forward.22} parent=0 // pred_check_branch
    %15 = sbr.rel (0) target = $region13
  $region12: #{vit_context_forward.22} parent=0 // pred_region
    _
  $region13: #{vit_context_forward.22} parent=0 // pred_fallthru
    _
  // Predicated region
  $region14: #{vit_context_forward.22} parent=0 // pred_check
    _
  $region15: #{vit_context_forward.22} parent=0 // pred_check_branch
    %17 = sbr.rel (0) target = $region17
  $region16: #{vit_context_forward.22} parent=0 // pred_region
    _
  $region17: #{vit_context_forward.22} parent=0 // pred_fallthru
    _
  // Predicated region
  $region18: #{vit_context_forward.22} parent=0 // pred_check
    _
  $region19: #{vit_context_forward.22} parent=0 // pred_check_branch
    %19 = sbr.rel (0) target = $region21
  $region20: #{vit_context_forward.22} parent=0 // pred_region
    _
  $region21: #{vit_context_forward.22} parent=0 // pred_fallthru
    _
  %v21 = vld [vmem:[%s0] sm:$0xff]
  %v22 = vld [vmem:[%s0 + $0x8] sm:$0xff]
  %vm23 = vcmask 392192
  %v24 = vsel %vm23, %v21, 0.0
  %25 = vadd.xlane.f32.xlu0 %v24
  %v26 = vpop.xlane.xlu0 %25
  %v27 = vsel %vm23, %v22, 0.0
  %28 = vadd.xlane.f32.xlu0 %v27
  %v29 = vpop.xlane.xlu0 %28
  %v30 = vrcp.pop 48.0
  %v31 = vmul.f32 %v26, %v30
  %v32 = vmul.f32 %v29, %v30
  %v33 = vsub.f32 %v21, %v31
  %v34 = vsub.f32 %v22, %v32
  %v35 = vmul.f32 %v33, %v33
  %v36 = vmul.f32 %v34, %v34
  %v37 = vsel %vm23, %v35, 0.0
  %38 = vadd.xlane.f32.xlu0 %v37
  %v39 = vpop.xlane.xlu0 %38
  %v40 = vsel %vm23, %v36, 0.0
  %41 = vadd.xlane.f32.xlu0 %v40
  %v42 = vpop.xlane.xlu0 %41
  %v43 = vmul.f32 %v39, %v30
  %v44 = vmul.f32 %v42, %v30
  %v45 = vadd.f32 %v43, 1e-05
  %v46 = vadd.f32 %v44, 1e-05
  %v47 = vrsqrt.pop %v45
  %v48 = vrsqrt.pop %v46
  %v49 = vmul.f32 %v33, %v47
  %v50 = vmul.f32 %v34, %v48
  %v51 = vld [vmem:[%s1] sm:$0x1]
  %v53 = vlaneseq
  %v54 = vshrl.u32 %v53, 7
  %v55 = vsub.s32 0, %v54
  %v56 = vrot.slane %v51, %v55
  %v58 = vmul.f32 %v49, %v56
  %v59 = vmul.f32 %v50, %v56
  %v60 = vld [vmem:[%s2] sm:$0x1]
  %v62 = vlaneseq
  %v63 = vshrl.u32 %v62, 7
  %v64 = vsub.s32 0, %v63
  %v65 = vrot.slane %v60, %v64
  %v67 = vadd.f32 %v58, %v65
  %v68 = vadd.f32 %v59, %v65
  %p69 = scmp.eq.s32.totalorder 0, 0
  // Predicated region
  $region22: #{vit_context_forward.22} parent=0 // pred_check
    %p70 = pneg %p69
  $region23: #{vit_context_forward.22} parent=0 // pred_check_branch
    %72 = sbr.rel (%p70) target = $region25
  $region24: #{vit_context_forward.22} parent=0 // pred_region
    %v73 = vld [vmem:[%s4] sm:$0x1]
    %v75 = vlaneseq
    %v76 = vshrl.u32 %v75, 7
    %v77 = vsub.s32 0, %v76
    %v78 = vrot.slane %v73, %v77
    %vm80 = vcmask 523264
    %81 = vst.msk [vmem:[#allocation2] sm:$0xff] %vm80, %v78
    %82 = vst.msk [vmem:[#allocation2 + $0x8] sm:$0xff] %vm80, %v78
  $region25: #{vit_context_forward.22} parent=0 // pred_fallthru
    _
  %v83 = vld [vmem:[#allocation2] sm:$0xff]
  %v84 = vld [vmem:[#allocation2 + $0x8] sm:$0xff]
  %v85 = vpack.c.bf16 %v68, %v67
  %v86 = vld [vmem:[%s3] sm:$0xf]
  %v87 = vld [vmem:[%s3 + $0x4] sm:$0xf]
  %v88 = vld [vmem:[%s3 + $0x8] sm:$0xf]
  %v89 = vld [vmem:[%s3 + $0xc] sm:$0xf]
  %v90 = vld [vmem:[%s3 + $0x10] sm:$0xf]
  %v91 = vld [vmem:[%s3 + $0x14] sm:$0xf]
  %v98 = vunpack.c.l.b16 %v86
  %v99 = vunpack.c.l.b16 %v87
  %v100 = vunpack.c.l.b16 %v88
  %v101 = vunpack.c.l.b16 %v89
  %v102 = vunpack.c.l.b16 %v90
  %v103 = vunpack.c.l.b16 %v91
  %v104 = vpack.c.b16 %v99, %v98
  %v105 = vpack.c.b16 %v101, %v100
  %v106 = vpack.c.b16 %v103, %v102
  %v111 = vsel %vm23, %v85, 0
  %113 = vmatprep.subr.bf16.mxu0 0
  %114 = vmatpush1.bf16.msra.mxu0 %v104
  %115 = vmatprep.subr.bf16.mxu0 0
  %116 = vmatpush1.bf16.msra.mxu0 %v105
  %117 = vmatprep.subr.bf16.mxu0 0
  %118 = vmatpush1.bf16.msra.mxu0 %v106
  %119 = vmatprep.subr.bf16.mxu0 0
  %120 = vmatpush1.bf16.msra.mxu0 0
  %121 = vmatprep.subr.bf16.mxu0 0
  %122 = vmatpush1.bf16.msra.mxu0 0
  %123 = vmatprep.subr.bf16.mxu0 0
  %124 = vmatpush1.bf16.msra.mxu0 0
  %125 = vmatprep.subr.bf16.mxu0 0
  %126 = vmatpush1.bf16.msra.mxu0 0
  %127 = vmatprep.subr.bf16.mxu0 0
  %128 = vmatpush1.bf16.msra.mxu0 0
  %129 = vmatprep.subr.bf16.mxu0 0
  %130 = vmatpush1.bf16.msra.mxu0 0
  %131 = vmatprep.subr.bf16.mxu0 0
  %132 = vmatpush1.bf16.msra.mxu0 0
  %133 = vmatprep.subr.bf16.mxu0 0
  %134 = vmatpush1.bf16.msra.mxu0 0
  %135 = vmatprep.subr.bf16.mxu0 0
  %136 = vmatpush1.bf16.msra.mxu0 0
  %137 = vmatprep.subr.bf16.mxu0 0
  %138 = vmatpush1.bf16.msra.mxu0 0
  %139 = vmatprep.subr.bf16.mxu0 0
  %140 = vmatpush1.bf16.msra.mxu0 0
  %141 = vmatprep.subr.bf16.mxu0 0
  %142 = vmatpush1.bf16.msra.mxu0 0
  %143 = vmatprep.subr.bf16.mxu0 0
  %144 = vmatpush1.bf16.msra.mxu0 0
  %145 = vmatprep.mubr.bf16.mxu0 0
  %146 = vmatmul.mubr.bf16.gmra.mrb[0].mxu0 %v111
  %v147 = vpop.f32.mrb[0].mxu0
  %v148 = vadd.f32 0.0, %v147
  %v149 = vpop.f32.mrb[0].mxu0
  %v150 = vpop.f32.mrb[0].mxu0
  %v151 = vadd.f32 0.0, %v150
  %v152 = vpop.f32.mrb[0].mxu0
  %153 = vdwg.mxu0
  %v154 = vadd.f32 %v83, %v148
  %v155 = vadd.f32 %v84, %v151
  %vm156 = vcmask 523264
  %157 = vst.msk [vmem:[#allocation2] sm:$0xff] %vm156, %v154
  %158 = vst.msk [vmem:[#allocation2 + $0x8] sm:$0xff] %vm156, %v155
  // Predicated region
  $region26: #{vit_context_forward.22} parent=0 // pred_check
    %p159 = pneg %p69
  $region27: #{vit_context_forward.22} parent=0 // pred_check_branch
    %161 = sbr.rel (%p159) target = $region29
  $region28: #{vit_context_forward.22} parent=0 // pred_region
    %v162 = vld [vmem:[#allocation2] sm:$0xff]
    %v163 = vld [vmem:[#allocation2 + $0x8] sm:$0xff]
    %164 = vst.msk [vmem:[%s5] sm:$0xff] %vm156, %v162
    %165 = vst.msk [vmem:[%s5 + $0x8] sm:$0xff] %vm156, %v163
  $region29: #{vit_context_forward.22} parent=0 // pred_fallthru
    _
  // Predicated region
  $region30: #{vit_context_forward.22} parent=0 // pred_check
    _
  $region31: #{vit_context_forward.22} parent=0 // pred_check_branch
    %167 = sbr.rel (0) target = $region33
  $region32: #{vit_context_forward.22} parent=0 // pred_region
    _
  $region33: #{vit_context_forward.22} parent=0 // pred_fallthru
    _
  // Predicated region
  $region34: #{vit_context_forward.22} parent=0 // pred_check
    _
  $region35: #{vit_context_forward.22} parent=0 // pred_check_branch
    %169 = sbr.rel (0) target = $region37
  $region36: #{vit_context_forward.22} parent=0 // pred_region
    _
  $region37: #{vit_context_forward.22} parent=0 // pred_fallthru
    _

// kernel: vit_context_forward.21
$region0: #{vit_context_forward.21}
  #allocation0 [shape = 'u32[]', space=smem, size = 0x4, offset = 0x4, fixed_abs, tag = 'smem constant byte address 0x4 - core index']
  #allocation1 [shape = 'u32[144,128]{1,0:T(1,128)}', space=vmem, size = 0x12000, scoped, tag = 'internal scratch']
  #allocation2 [shape = 'f32[34,32]{1,0:T(8,128)}', space=vmem, size = 0x5000, scoped, tag = 'scratch operand']
  %s0 = inlined_call_operand.vmem [shape: f32[34,32], index: 0, kind: input, shape index: {}]
  %s1 = inlined_call_operand.vmem [shape: f32[1,32], index: 1, kind: input, shape index: {}]
  %s2 = inlined_call_operand.vmem [shape: f32[1,32], index: 2, kind: input, shape index: {}]
  %s3 = inlined_call_operand.vmem [shape: bf16[32,32], index: 3, kind: input, shape index: {}]
  %s4 = inlined_call_operand.vmem [shape: f32[1,32], index: 4, kind: input, shape index: {}]
  %s5 = inlined_call_operand.vmem [shape: f32[34,32], index: 5, kind: output, shape index: {}]
  %s6 = sld [smem:[#allocation0]]
  $region38: #{vit_context_forward.21} parent=0
    _
  %s8 = ssub.s32 1, %s6
  %s9 = scalar_select 0, %s8, %s6
  // Predicated region
  $region2: #{vit_context_forward.21} parent=0 // pred_check
    _
  $region3: #{vit_context_forward.21} parent=0 // pred_check_branch
    %11 = sbr.rel (0) target = $region5
  $region4: #{vit_context_forward.21} parent=0 // pred_region
    _
  $region5: #{vit_context_forward.21} parent=0 // pred_fallthru
    _
  // Predicated region
  $region6: #{vit_context_forward.21} parent=0 // pred_check
    _
  $region7: #{vit_context_forward.21} parent=0 // pred_check_branch
    %13 = sbr.rel (0) target = $region9
  $region8: #{vit_context_forward.21} parent=0 // pred_region
    _
  $region9: #{vit_context_forward.21} parent=0 // pred_fallthru
    _
  // Predicated region
  $region10: #{vit_context_forward.21} parent=0 // pred_check
    _
  $region11: #{vit_context_forward.21} parent=0 // pred_check_branch
    %15 = sbr.rel (0) target = $region13
  $region12: #{vit_context_forward.21} parent=0 // pred_region
    _
  $region13: #{vit_context_forward.21} parent=0 // pred_fallthru
    _
  // Predicated region
  $region14: #{vit_context_forward.21} parent=0 // pred_check
    _
  $region15: #{vit_context_forward.21} parent=0 // pred_check_branch
    %17 = sbr.rel (0) target = $region17
  $region16: #{vit_context_forward.21} parent=0 // pred_region
    _
  $region17: #{vit_context_forward.21} parent=0 // pred_fallthru
    _
  // Predicated region
  $region18: #{vit_context_forward.21} parent=0 // pred_check
    _
  $region19: #{vit_context_forward.21} parent=0 // pred_check_branch
    %19 = sbr.rel (0) target = $region21
  $region20: #{vit_context_forward.21} parent=0 // pred_region
    _
  $region21: #{vit_context_forward.21} parent=0 // pred_fallthru
    _
  %v21 = vld [vmem:[%s0] sm:$0xff]
  %v22 = vld [vmem:[%s0 + $0x8] sm:$0xff]
  %v23 = vld [vmem:[%s0 + $0x10] sm:$0xff]
  %v24 = vld [vmem:[%s0 + $0x18] sm:$0xff]
  %v25 = vld [vmem:[%s0 + $0x20] sm:$0x3]
  %vm26 = vcmask 261120
  %v27 = vsel %vm26, %v21, 0.0
  %28 = vadd.xlane.f32.xlu0 %v27
  %v29 = vpop.xlane.xlu0 %28
  %v30 = vsel %vm26, %v22, 0.0
  %31 = vadd.xlane.f32.xlu0 %v30
  %v32 = vpop.xlane.xlu0 %31
  %v33 = vsel %vm26, %v23, 0.0
  %34 = vadd.xlane.f32.xlu0 %v33
  %v35 = vpop.xlane.xlu0 %34
  %v36 = vsel %vm26, %v24, 0.0
  %37 = vadd.xlane.f32.xlu0 %v36
  %v38 = vpop.xlane.xlu0 %37
  %vm39 = vcmask 254976
  %v40 = vsel %vm39, %v25, 0.0
  %41 = vadd.xlane.f32.xlu0 %v40
  %v42 = vpop.xlane.xlu0 %41
  %v43 = vrcp.pop 32.0
  %v44 = vmul.f32 %v29, %v43
  %v45 = vmul.f32 %v32, %v43
  %v46 = vmul.f32 %v35, %v43
  %v47 = vmul.f32 %v38, %v43
  %v48 = vmul.f32 %v42, %v43
  %v49 = vsub.f32 %v21, %v44
  %v50 = vsub.f32 %v22, %v45
  %v51 = vsub.f32 %v23, %v46
  %v52 = vsub.f32 %v24, %v47
  %v53 = vsub.f32 %v25, %v48
  %v54 = vmul.f32 %v49, %v49
  %v55 = vmul.f32 %v50, %v50
  %v56 = vmul.f32 %v51, %v51
  %v57 = vmul.f32 %v52, %v52
  %v58 = vmul.f32 %v53, %v53
  %v59 = vsel %vm26, %v54, 0.0
  %60 = vadd.xlane.f32.xlu0 %v59
  %v61 = vpop.xlane.xlu0 %60
  %v62 = vsel %vm26, %v55, 0.0
  %63 = vadd.xlane.f32.xlu0 %v62
  %v64 = vpop.xlane.xlu0 %63
  %v65 = vsel %vm26, %v56, 0.0
  %66 = vadd.xlane.f32.xlu0 %v65
  %v67 = vpop.xlane.xlu0 %66
  %v68 = vsel %vm26, %v57, 0.0
  %69 = vadd.xlane.f32.xlu0 %v68
  %v70 = vpop.xlane.xlu0 %69
  %v71 = vsel %vm39, %v58, 0.0
  %72 = vadd.xlane.f32.xlu0 %v71
  %v73 = vpop.xlane.xlu0 %72
  %v74 = vmul.f32 %v61, %v43
  %v75 = vmul.f32 %v64, %v43
  %v76 = vmul.f32 %v67, %v43
  %v77 = vmul.f32 %v70, %v43
  %v78 = vmul.f32 %v73, %v43
  %v79 = vadd.f32 %v74, 1e-05
  %v80 = vadd.f32 %v75, 1e-05
  %v81 = vadd.f32 %v76, 1e-05
  %v82 = vadd.f32 %v77, 1e-05
  %v83 = vadd.f32 %v78, 1e-05
  %v84 = vrsqrt.pop %v79
  %v85 = vrsqrt.pop %v80
  %v86 = vrsqrt.pop %v81
  %v87 = vrsqrt.pop %v82
  %v88 = vrsqrt.pop %v83
  %v89 = vmul.f32 %v49, %v84
  %v90 = vmul.f32 %v50, %v85
  %v91 = vmul.f32 %v51, %v86
  %v92 = vmul.f32 %v52, %v87
  %v93 = vmul.f32 %v53, %v88
  %v94 = vld [vmem:[%s1] sm:$0x1]
  %v96 = vlaneseq
  %v97 = vshrl.u32 %v96, 7
  %v98 = vsub.s32 0, %v97
  %v99 = vrot.slane %v94, %v98
  %v101 = vmul.f32 %v89, %v99
  %v102 = vmul.f32 %v90, %v99
  %v103 = vmul.f32 %v91, %v99
  %v104 = vmul.f32 %v92, %v99
  %v105 = vmul.f32 %v93, %v99
  %v106 = vld [vmem:[%s2] sm:$0x1]
  %v108 = vlaneseq
  %v109 = vshrl.u32 %v108, 7
  %v110 = vsub.s32 0, %v109
  %v111 = vrot.slane %v106, %v110
  %v113 = vadd.f32 %v101, %v111
  %v114 = vadd.f32 %v102, %v111
  %v115 = vadd.f32 %v103, %v111
  %v116 = vadd.f32 %v104, %v111
  %v117 = vadd.f32 %v105, %v111
  %p118 = scmp.eq.s32.totalorder 0, 0
  // Predicated region
  $region22: #{vit_context_forward.21} parent=0 // pred_check
    %p119 = pneg %p118
  $region23: #{vit_context_forward.21} parent=0 // pred_check_branch
    %121 = sbr.rel (%p119) target = $region25
  $region24: #{vit_context_forward.21} parent=0 // pred_region
    %v122 = vld [vmem:[%s4] sm:$0x1]
    %v124 = vlaneseq
    %v125 = vshrl.u32 %v124, 7
    %v126 = vsub.s32 0, %v125
    %v127 = vrot.slane %v122, %v126
    %129 = vst.msk [vmem:[#allocation2] sm:$0xff] %vm26, %v127
    %130 = vst.msk [vmem:[#allocation2 + $0x8] sm:$0xff] %vm26, %v127
    %131 = vst.msk [vmem:[#allocation2 + $0x10] sm:$0xff] %vm26, %v127
    %132 = vst.msk [vmem:[#allocation2 + $0x18] sm:$0xff] %vm26, %v127
    %133 = vst.msk [vmem:[#allocation2 + $0x20] sm:$0x3] %vm39, %v127
  $region25: #{vit_context_forward.21} parent=0 // pred_fallthru
    _
  %v134 = vld [vmem:[#allocation2] sm:$0xff]
  %v135 = vld [vmem:[#allocation2 + $0x8] sm:$0xff]
  %v136 = vld [vmem:[#allocation2 + $0x10] sm:$0xff]
  %v137 = vld [vmem:[#allocation2 + $0x18] sm:$0xff]
  %v138 = vld [vmem:[#allocation2 + $0x20] sm:$0x3]
  %v139 = vpack.c.bf16 %v114, %v113
  %v140 = vpack.c.bf16 %v116, %v115
  %v141 = vpack.c.bf16 %v117, %v117
  %v142 = vld [vmem:[%s3] sm:$0xf]
  %v143 = vld [vmem:[%s3 + $0x4] sm:$0xf]
  %v144 = vld [vmem:[%s3 + $0x8] sm:$0xf]
  %v145 = vld [vmem:[%s3 + $0xc] sm:$0xf]
  %v150 = vunpack.c.l.b16 %v142
  %v151 = vunpack.c.l.b16 %v143
  %v152 = vunpack.c.l.b16 %v144
  %v153 = vunpack.c.l.b16 %v145
  %v154 = vpack.c.b16 %v151, %v150
  %v155 = vpack.c.b16 %v153, %v152
  %v159 = vsel %vm26, %v139, 0
  %v162 = vsel %vm26, %v140, 0
  %v165 = vsel %vm26, %v141, 0
  %167 = vmatprep.subr.bf16.mxu0 0
  %168 = vmatpush1.bf16.msra.mxu0 %v154
  %169 = vmatprep.subr.bf16.mxu0 0
  %170 = vmatpush1.bf16.msra.mxu0 %v155
  %171 = vmatprep.subr.bf16.mxu0 0
  %172 = vmatpush1.bf16.msra.mxu0 0
  %173 = vmatprep.subr.bf16.mxu0 0
  %174 = vmatpush1.bf16.msra.mxu0 0
  %175 = vmatprep.subr.bf16.mxu0 0
  %176 = vmatpush1.bf16.msra.mxu0 0
  %177 = vmatprep.subr.bf16.mxu0 0
  %178 = vmatpush1.bf16.msra.mxu0 0
  %179 = vmatprep.subr.bf16.mxu0 0
  %180 = vmatpush1.bf16.msra.mxu0 0
  %181 = vmatprep.subr.bf16.mxu0 0
  %182 = vmatpush1.bf16.msra.mxu0 0
  %183 = vmatprep.subr.bf16.mxu0 0
  %184 = vmatpush1.bf16.msra.mxu0 0
  %185 = vmatprep.subr.bf16.mxu0 0
  %186 = vmatpush1.bf16.msra.mxu0 0
  %187 = vmatprep.subr.bf16.mxu0 0
  %188 = vmatpush1.bf16.msra.mxu0 0
  %189 = vmatprep.subr.bf16.mxu0 0
  %190 = vmatpush1.bf16.msra.mxu0 0
  %191 = vmatprep.subr.bf16.mxu0 0
  %192 = vmatpush1.bf16.msra.mxu0 0
  %193 = vmatprep.subr.bf16.mxu0 0
  %194 = vmatpush1.bf16.msra.mxu0 0
  %195 = vmatprep.subr.bf16.mxu0 0
  %196 = vmatpush1.bf16.msra.mxu0 0
  %197 = vmatprep.subr.bf16.mxu0 0
  %198 = vmatpush1.bf16.msra.mxu0 0
  %199 = vmatprep.mubr.bf16.mxu0 0
  %200 = vmatmul.mubr.bf16.gmra.mrb[0].mxu0 %v159
  %v201 = vpop.f32.mrb[0].mxu0
  %v202 = vadd.f32 0.0, %v201
  %v203 = vpop.f32.mrb[0].mxu0
  %v204 = vpop.f32.mrb[0].mxu0
  %v205 = vadd.f32 0.0, %v204
  %v206 = vpop.f32.mrb[0].mxu0
  %207 = vmatprep.mubr.bf16.mxu0 0
  %208 = vmatmul.mubr.bf16.gmra.mrb[0].mxu0 %v162
  %v209 = vpop.f32.mrb[0].mxu0
  %v210 = vadd.f32 0.0, %v209
  %v211 = vpop.f32.mrb[0].mxu0
  %v212 = vpop.f32.mrb[0].mxu0
  %v213 = vadd.f32 0.0, %v212
  %v214 = vpop.f32.mrb[0].mxu0
  %215 = vmatprep.mubr.bf16.mxu0 0
  %216 = vmatmul.mubr.bf16.gmra.mrb[0].mxu0 %v165
  %v217 = vpop.f32.mrb[0].mxu0
  %v218 = vadd.f32 0.0, %v217
  %v219 = vpop.f32.mrb[0].mxu0
  %v220 = vpop.f32.mrb[0].mxu0
  %v221 = vpop.f32.mrb[0].mxu0
  %222 = vdwg.mxu0
  %v223 = vadd.f32 %v134, %v202
  %v224 = vadd.f32 %v135, %v205
  %v225 = vadd.f32 %v136, %v210
  %v226 = vadd.f32 %v137, %v213
  %v227 = vadd.f32 %v138, %v218
  %228 = vst.msk [vmem:[#allocation2] sm:$0xff] %vm26, %v223
  %229 = vst.msk [vmem:[#allocation2 + $0x8] sm:$0xff] %vm26, %v224
  %230 = vst.msk [vmem:[#allocation2 + $0x10] sm:$0xff] %vm26, %v225
  %231 = vst.msk [vmem:[#allocation2 + $0x18] sm:$0xff] %vm26, %v226
  %232 = vst.msk [vmem:[#allocation2 + $0x20] sm:$0x3] %vm39, %v227
  // Predicated region
  $region26: #{vit_context_forward.21} parent=0 // pred_check
    %p233 = pneg %p118
  $region27: #{vit_context_forward.21} parent=0 // pred_check_branch
    %235 = sbr.rel (%p233) target = $region29
  $region28: #{vit_context_forward.21} parent=0 // pred_region
    %v236 = vld [vmem:[#allocation2] sm:$0xff]
    %v237 = vld [vmem:[#allocation2 + $0x8] sm:$0xff]
    %v238 = vld [vmem:[#allocation2 + $0x10] sm:$0xff]
    %v239 = vld [vmem:[#allocation2 + $0x18] sm:$0xff]
    %v240 = vld [vmem:[#allocation2 + $0x20] sm:$0x3]
    %241 = vst.msk [vmem:[%s5] sm:$0xff] %vm26, %v236
    %242 = vst.msk [vmem:[%s5 + $0x8] sm:$0xff] %vm26, %v237
    %243 = vst.msk [vmem:[%s5 + $0x10] sm:$0xff] %vm26, %v238
    %244 = vst.msk [vmem:[%s5 + $0x18] sm:$0xff] %vm26, %v239
    %245 = vst.msk [vmem:[%s5 + $0x20] sm:$0x3] %vm39, %v240
  $region29: #{vit_context_forward.21} parent=0 // pred_fallthru
    _
  // Predicated region
  $region30: #{vit_context_forward.21} parent=0 // pred_check
    _
  $region31: #{vit_context_forward.21} parent=0 // pred_check_branch
    %247 = sbr.rel (0) target = $region33
  $region32: #{vit_context_forward.21} parent=0 // pred_region
    _
  $region33: #{vit_context_forward.21} parent=0 // pred_fallthru
    _
  // Predicated region
  $region34: #{vit_context_forward.21} parent=0 // pred_check
    _
  $region35: #{vit_context_forward.21} parent=0 // pred_check_branch
    %249 = sbr.rel (0) target = $region37
  $region36: #{vit_context_forward.21} parent=0 // pred_region
    _
  $region37: #{vit_context_forward.21} parent=0 // pred_fallthru
    _

// kernel: vit_context_forward.23
$region0: #{vit_context_forward.23}
  #allocation0 [shape = 'u32[]', space=smem, size = 0x4, offset = 0x4, fixed_abs, tag = 'smem constant byte address 0x4 - core index']
  #allocation1 [shape = 'u32[144,128]{1,0:T(1,128)}', space=vmem, size = 0x12000, scoped, tag = 'internal scratch']
  %s0 = inlined_call_operand.vmem [shape: f32[2,4,17,8], index: 0, kind: input, shape index: {}]
  %s1 = inlined_call_operand.vmem [shape: f32[2,8,8,8], index: 1, kind: input, shape index: {}]
  %s2 = inlined_call_operand.vmem [shape: f32[2,4,17,8], index: 2, kind: output, shape index: {}]
  %s3 = sld [smem:[#allocation0]]
  $region41: #{vit_context_forward.23} parent=0
    _
  %s5 = ssub.s32 1, %s3
  %s6 = scalar_select 0, %s5, %s3
  loop: start=0, step=1, limit=4
  $region2: #{vit_context_forward.23} parent=0 // loop_pre_header
    _
  $region3: #{vit_context_forward.23} parent=0 // loop_header
    %s8 = sphi 0, %s12
    %p9 = scmp.ge.s32.totalorder %s8, 4
    %s18 = sphi 0, %s20
    %s21 = sphi 0, %s18
    %s22 = sphi 0, %s21
    %s38 = sphi 0, %s22
    %s44 = sphi 0, %s46
    %s47 = sphi 0, %s44
    %s48 = sphi 0, %s47
    %s64 = sphi 0, %s48
    %s70 = sphi 0, %s72
    %s73 = sphi 0, %s70
    %s74 = sphi 0, %s73
    %s90 = sphi 0, %s74
  $region4: #{vit_context_forward.23} parent=0 // loop_header_branch
    %11 = sbr.rel (%p9) target = $region8
  $region5: #{vit_context_forward.23} parent=0 // loop_body
    %s13 = ssub.s32 %s8, 1
    %s14 = ssub.s32 %s8, 2
    %s15 = sadd.s32 %s8, 1
    %s16 = ssub.s32 %s8, %s15
    %p17 = scmp.eq.s32.totalorder %s16, 0
    %s19 = sadd.s32 %s18, 1
    %s20 = scalar_select %p17, %s18, %s19
    %p23 = pneg %p17
    %p24 = scmp.eq.s32.totalorder %s8, 1
    %p25 = por %p23, %p24
    %p26 = scmp.ne.s32.totalorder %s18, %s21
    %p27 = scmp.eq.s32.totalorder %s8, 0
    %p28 = por %p26, %p27
    %p29 = scmp.ne.s32.totalorder %s18, %s21
    %p30 = scmp.eq.s32.totalorder %s13, 1
    %p31 = por %p29, %p30
    %p32 = scmp.ne.s32.totalorder %s21, %s22
    %p33 = scmp.eq.s32.totalorder %s13, 0
    %p34 = por %p32, %p33
    %p35 = scmp.ne.s32.totalorder %s21, %s22
    %p36 = scmp.eq.s32.totalorder %s14, 1
    %p37 = por %p35, %p36
    %p39 = scmp.ne.s32.totalorder %s22, %s38
    %p40 = scmp.eq.s32.totalorder %s14, 0
    %p41 = por %p39, %p40
    %s42 = ssub.s32 %s8, %s15
    %p43 = scmp.eq.s32.totalorder %s42, 0
    %s45 = sadd.s32 %s44, 1
    %s46 = scalar_select %p43, %s44, %s45
    %p49 = pneg %p43
    %p50 = scmp.eq.s32.totalorder %s8, 1
    %p51 = por %p49, %p50
    %p52 = scmp.ne.s32.totalorder %s44, %s47
    %p53 = scmp.eq.s32.totalorder %s8, 0
    %p54 = por %p52, %p53
    %p55 = scmp.ne.s32.totalorder %s44, %s47
    %p56 = scmp.eq.s32.totalorder %s13, 1
    %p57 = por %p55, %p56
    %p58 = scmp.ne.s32.totalorder %s47, %s48
    %p59 = scmp.eq.s32.totalorder %s13, 0
    %p60 = por %p58, %p59
    %p61 = scmp.ne.s32.totalorder %s47, %s48
    %p62 = scmp.eq.s32.totalorder %s14, 1
    %p63 = por %p61, %p62
    %p65 = scmp.ne.s32.totalorder %s48, %s64
    %p66 = scmp.eq.s32.totalorder %s14, 0
    %p67 = por %p65, %p66
    %s68 = ssub.s32 %s8, %s15
    %p69 = scmp.eq.s32.totalorder %s68, 0
    %s71 = sadd.s32 %s70, 1
    %s72 = scalar_select %p69, %s70, %s71
    %p75 = pneg %p69
    %p76 = scmp.eq.s32.totalorder %s8, 1
    %p77 = por %p75, %p76
    %p78 = scmp.ne.s32.totalorder %s70, %s73
    %p79 = scmp.eq.s32.totalorder %s8, 0
    %p80 = por %p78, %p79
    %p81 = scmp.ne.s32.totalorder %s70, %s73
    %p82 = scmp.eq.s32.totalorder %s13, 1
    %p83 = por %p81, %p82
    %p84 = scmp.ne.s32.totalorder %s73, %s74
    %p85 = scmp.eq.s32.totalorder %s13, 0
    %p86 = por %p84, %p85
    %p87 = scmp.ne.s32.totalorder %s73, %s74
    %p88 = scmp.eq.s32.totalorder %s14, 1
    %p89 = por %p87, %p88
    %p91 = scmp.ne.s32.totalorder %s74, %s90
    %p92 = scmp.eq.s32.totalorder %s14, 0
    %p93 = por %p91, %p92
    %p94 = scmp.le.s32.totalorder 1, %s8
    %p95 = scmp.lt.s32.totalorder %s8, 3
    %p96 = pnand %p94, %p95
    %p97 = pneg %p96
    // Predicated region
    $region9: #{vit_context_forward.23} parent=5 // pred_check
      _
    $region10: #{vit_context_forward.23} parent=5 // pred_check_branch
      %99 = sbr.rel (%p96) target = $region12
    $region11: #{vit_context_forward.23} parent=5 // pred_region
      %s100 = ssub.s32 %s8, 1
    $region12: #{vit_context_forward.23} parent=5 // pred_fallthru
      _
    %p101 = scmp.lt.s32.totalorder %s8, 2
    // Predicated region
    $region13: #{vit_context_forward.23} parent=5 // pred_check
      %p102 = pneg %p101
    $region14: #{vit_context_forward.23} parent=5 // pred_check_branch
      %104 = sbr.rel (%p102) target = $region16
    $region15: #{vit_context_forward.23} parent=5 // pred_region
      // Predicated region
      $region17: #{vit_context_forward.23} parent=15 // pred_check
        %p105 = pneg %p28
      $region18: #{vit_context_forward.23} parent=15 // pred_check_branch
        %107 = sbr.rel (%p105) target = $region20
      $region19: #{vit_context_forward.23} parent=15 // pred_region
        %p108 = scmp.lt.s32.totalorder %s8, 1
        %s109 = scalar_select %p108, %s8, 1
        %s110 = smul.addr %s109, 12
        %s111 = smul.addr %s110, 8
        %s112 = scalar_lea.vmem %s0, %s111
      $region20: #{vit_context_forward.23} parent=15 // pred_fallthru
        _
      // Predicated region
      $region21: #{vit_context_forward.23} parent=15 // pred_check
        %p113 = pneg %p54
      $region22: #{vit_context_forward.23} parent=15 // pred_check_branch
        %115 = sbr.rel (%p113) target = $region24
      $region23: #{vit_context_forward.23} parent=15 // pred_region
        %p116 = scmp.lt.s32.totalorder %s8, 1
        %s117 = scalar_select %p116, %s8, 1
        %s118 = smul.addr %s117, 8
        %s119 = smul.addr %s118, 8
        %s120 = scalar_lea.vmem %s1, %s119
      $region24: #{vit_context_forward.23} parent=15 // pred_fallthru
        _
    $region16: #{vit_context_forward.23} parent=5 // pred_fallthru
      _
    %p121 = scmp.le.s32.totalorder 1, %s8
    %p122 = scmp.lt.s32.totalorder %s8, 3
    %p123 = pnand %p121, %p122
    %p124 = pneg %p123
    // Predicated region
    $region25: #{vit_context_forward.23} parent=5 // pred_check
      _
    $region26: #{vit_context_forward.23} parent=5 // pred_check_branch
      %126 = sbr.rel (%p123) target = $region28
    $region27: #{vit_context_forward.23} parent=5 // pred_region
      %s127 = ssub.s32 %s8, 1
      %p128 = scmp.lt.s32.totalorder %s13, 1
      %s129 = scalar_select %p128, %s13, 1
      %s130 = smul.addr %s129, 12
      %s131 = smul.addr %s130, 8
      %s132 = scalar_lea.vmem %s0, %s131
      %p133 = pneg %p34
      %p134 = pneg %p31
      %p135 = scmp.lt.s32.totalorder %s13, 1
      %s136 = scalar_select %p135, %s13, 1
      %s137 = smul.addr %s136, 8
      %s138 = smul.addr %s137, 8
      %s139 = scalar_lea.vmem %s1, %s138
      %p140 = pneg %p60
      %p141 = pneg %p57
      %p142 = pneg %p86
      %p143 = pneg %p83
      %p144 = scmp.lt.s32.totalorder %s13, 1
      %s145 = scalar_select %p144, %s13, 1
      %s146 = smul.addr %s145, 12
      %s147 = smul.addr %s146, 8
      %s148 = scalar_lea.vmem %s2, %s147
      %p149 = scmp.lt.s32.totalorder %s13, 1
      %s150 = scalar_select %p149, %s13, 1
      %s151 = smul.addr %s150, 12
      %s152 = smul.addr %s151, 8
      %s153 = scalar_lea.vmem %s0, %s152
      %p154 = scmp.lt.s32.totalorder %s13, 1
      %s155 = scalar_select %p154, %s13, 1
      %s156 = smul.addr %s155, 8
      %s157 = smul.addr %s156, 8
      %s158 = scalar_lea.vmem %s1, %s157
      %p159 = scmp.lt.s32.totalorder %s13, 1
      %s160 = scalar_select %p159, %s13, 1
      %s161 = smul.addr %s160, 12
      %s162 = smul.addr %s161, 8
      %s163 = scalar_lea.vmem %s2, %s162
      %v165 = vld [vmem:[%s158] sm:$0xff]
      %v166 = vld [vmem:[%s158 + $0x8] sm:$0xff]
      %v167 = vld [vmem:[%s158 + $0x10] sm:$0xff]
      %v168 = vld [vmem:[%s158 + $0x18] sm:$0xff]
      %v169 = vld [vmem:[%s158 + $0x20] sm:$0xff]
      %v170 = vld [vmem:[%s158 + $0x28] sm:$0xff]
      %v171 = vld [vmem:[%s158 + $0x30] sm:$0xff]
      %v172 = vld [vmem:[%s158 + $0x38] sm:$0xff]
      %v173 = vld [vmem:[%s153] sm:$0xff]
      %v174 = vld [vmem:[%s153 + $0x8] sm:$0xff]
      %v175 = vld [vmem:[%s153 + $0x10] sm:$0x1]
      %v176 = vld [vmem:[%s153 + $0x18] sm:$0xff]
      %v177 = vld [vmem:[%s153 + $0x20] sm:$0xff]
      %v178 = vld [vmem:[%s153 + $0x28] sm:$0x1]
      %v179 = vld [vmem:[%s153 + $0x30] sm:$0xff]
      %v180 = vld [vmem:[%s153 + $0x38] sm:$0xff]
      %v181 = vld [vmem:[%s153 + $0x40] sm:$0x1]
      %v182 = vld [vmem:[%s153 + $0x48] sm:$0xff]
      %v183 = vld [vmem:[%s153 + $0x50] sm:$0xff]
      %v184 = vld [vmem:[%s153 + $0x58] sm:$0x1]
      %v185 = vpack.c.bf16 %v174, %v173
      %v186 = vpack.c.bf16 %v175, %v175
      %v187 = vpack.c.bf16 %v177, %v176
      %v188 = vpack.c.bf16 %v178, %v178
      %v189 = vpack.c.bf16 %v180, %v179
      %v190 = vpack.c.bf16 %v181, %v181
      %v191 = vpack.c.bf16 %v183, %v182
      %v192 = vpack.c.bf16 %v184, %v184
      %v193 = vpack.c.bf16 %v165, %v165
      %v194 = vpack.c.bf16 %v166, %v166
      %v195 = vpack.c.bf16 %v167, %v167
      %v196 = vpack.c.bf16 %v168, %v168
      %v197 = vpack.c.bf16 %v169, %v169
      %v198 = vpack.c.bf16 %v170, %v170
      %v199 = vpack.c.bf16 %v171, %v171
      %v200 = vpack.c.bf16 %v172, %v172
      %vm201 = vcmask 64512
      %v203 = vsel %vm201, %v185, 0
      %v206 = vsel %vm201, %v186, 0
      %v209 = vsel %vm201, %v193, 0
      %211 = vmatprep.subr.bf16.mxu0 0
      %212 = vmatpush1.bf16.xpose.msra.mxu0 %v209
      %213 = vmatprep.subr.bf16.mxu0 0
      %214 = vmatpush1.bf16.xpose.msra.mxu0 0
      %215 = vmatprep.subr.bf16.mxu0 0
      %216 = vmatpush1.bf16.xpose.msra.mxu0 0
      %217 = vmatprep.subr.bf16.mxu0 0
      %218 = vmatpush1.bf16.xpose.msra.mxu0 0
      %219 = vmatprep.subr.bf16.mxu0 0
      %220 = vmatpush1.bf16.xpose.msra.mxu0 0
      %221 = vmatprep.subr.bf16.mxu0 0
      %222 = vmatpush1.bf16.xpose.msra.mxu0 0
      %223 = vmatprep.subr.bf16.mxu0 0
      %224 = vmatpush1.bf16.xpose.msra.mxu0 0
      %225 = vmatprep.subr.bf16.mxu0 0
      %226 = vmatpush1.bf16.xpose.msra.mxu0 0
      %227 = vmatprep.subr.bf16.mxu0 0
      %228 = vmatpush1.bf16.xpose.msra.mxu0 0
      %229 = vmatprep.subr.bf16.mxu0 0
      %230 = vmatpush1.bf16.xpose.msra.mxu0 0
      %231 = vmatprep.subr.bf16.mxu0 0
      %232 = vmatpush1.bf16.xpose.msra.mxu0 0
      %233 = vmatprep.subr.bf16.mxu0 0
      %234 = vmatpush1.bf16.xpose.msra.mxu0 0
      %235 = vmatprep.subr.bf16.mxu0 0
      %236 = vmatpush1.bf16.xpose.msra.mxu0 0
      %237 = vmatprep.subr.bf16.mxu0 0
      %238 = vmatpush1.bf16.xpose.msra.mxu0 0
      %239 = vmatprep.subr.bf16.mxu0 0
      %240 = vmatpush1.bf16.xpose.msra.mxu0 0
      %241 = vmatprep.subr.bf16.mxu0 0
      %242 = vmatpush1.bf16.xpose.msra.mxu0 0
      %243 = vmatprep.mubr.bf16.mxu0 0
      %244 = vmatmul.mubr.bf16.gmra.mrb[0].mxu0 %v203
      %v245 = vpop.f32.mrb[0].mxu0
      %v246 = vadd.f32 0.0, %v245
      %v247 = vpop.f32.mrb[0].mxu0
      %v248 = vpop.f32.mrb[0].mxu0
      %v249 = vadd.f32 0.0, %v248
      %v250 = vpop.f32.mrb[0].mxu0
      %251 = vmatprep.mubr.bf16.mxu0 0
      %252 = vmatmul.mubr.bf16.gmra.mrb[0].mxu0 %v206
      %v253 = vpop.f32.mrb[0].mxu0
      %v254 = vadd.f32 0.0, %v253
      %v255 = vpop.f32.mrb[0].mxu0
      %v256 = vpop.f32.mrb[0].mxu0
      %v257 = vpop.f32.mrb[0].mxu0
      %258 = vdwg.mxu0
      %v260 = vsel %vm201, %v187, 0
      %v263 = vsel %vm201, %v188, 0
      %v266 = vsel %vm201, %v194, 0
      %268 = vmatprep.subr.bf16.mxu0 0
      %269 = vmatpush1.bf16.xpose.msra.mxu0 %v266
      %270 = vmatprep.subr.bf16.mxu0 0
      %271 = vmatpush1.bf16.xpose.msra.mxu0 0
      %272 = vmatprep.subr.bf16.mxu0 0
      %273 = vmatpush1.bf16.xpose.msra.mxu0 0
      %274 = vmatprep.subr.bf16.mxu0 0
      %275 = vmatpush1.bf16.xpose.msra.mxu0 0
      %276 = vmatprep.subr.bf16.mxu0 0
      %277 = vmatpush1.bf16.xpose.msra.mxu0 0
      %278 = vmatprep.subr.bf16.mxu0 0
      %279 = vmatpush1.bf16.xpose.msra.mxu0 0
      %280 = vmatprep.subr.bf16.mxu0 0
      %281 = vmatpush1.bf16.xpose.msra.mxu0 0
      %282 = vmatprep.subr.bf16.mxu0 0
      %283 = vmatpush1.bf16.xpose.msra.mxu0 0
      %284 = vmatprep.subr.bf16.mxu0 0
      %285 = vmatpush1.bf16.xpose.msra.mxu0 0
      %286 = vmatprep.subr.bf16.mxu0 0
      %287 = vmatpush1.bf16.xpose.msra.mxu0 0
      %288 = vmatprep.subr.bf16.mxu0 0
      %289 = vmatpush1.bf16.xpose.msra.mxu0 0
      %290 = vmatprep.subr.bf16.mxu0 0
      %291 = vmatpush1.bf16.xpose.msra.mxu0 0
      %292 = vmatprep.subr.bf16.mxu0 0
      %293 = vmatpush1.bf16.xpose.msra.mxu0 0
      %294 = vmatprep.subr.bf16.mxu0 0
      %295 = vmatpush1.bf16.xpose.msra.mxu0 0
      %296 = vmatprep.subr.bf16.mxu0 0
      %297 = vmatpush1.bf16.xpose.msra.mxu0 0
      %298 = vmatprep.subr.bf16.mxu0 0
      %299 = vmatpush1.bf16.xpose.msra.mxu0 0
      %300 = vmatprep.mubr.bf16.mxu0 0
      %301 = vmatmul.mubr.bf16.gmra.mrb[0].mxu0 %v260
      %v302 = vpop.f32.mrb[0].mxu0
      %v303 = vadd.f32 0.0, %v302
      %v304 = vpop.f32.mrb[0].mxu0
      %v305 = vpop.f32.mrb[0].mxu0
      %v306 = vadd.f32 0.0, %v305
      %v307 = vpop.f32.mrb[0].mxu0
      %308 = vmatprep.mubr.bf16.mxu0 0
      %309 = vmatmul.mubr.bf16.gmra.mrb[0].mxu0 %v263
      %v310 = vpop.f32.mrb[0].mxu0
      %v311 = vadd.f32 0.0, %v310
      %v312 = vpop.f32.mrb[0].mxu0
      %v313 = vpop.f32.mrb[0].mxu0
      %v314 = vpop.f32.mrb[0].mxu0
      %315 = vdwg.mxu0
      %v317 = vsel %vm201, %v189, 0
      %v320 = vsel %vm201, %v190, 0
      %v323 = vsel %vm201, %v195, 0
      %325 = vmatprep.subr.bf16.mxu0 0
      %326 = vmatpush1.bf16.xpose.msra.mxu0 %v323
      %327 = vmatprep.subr.bf16.mxu0 0
      %328 = vmatpush1.bf16.xpose.msra.mxu0 0
      %329 = vmatprep.subr.bf16.mxu0 0
      %330 = vmatpush1.bf16.xpose.msra.mxu0 0
      %331 = vmatprep.subr.bf16.mxu0 0
      %332 = vmatpush1.bf16.xpose.msra.mxu0 0
      %333 = vmatprep.subr.bf16.mxu0 0
      %334 = vmatpush1.bf16.xpose.msra.mxu0 0
      %335 = vmatprep.subr.bf16.mxu0 0
      %336 = vmatpush1.bf16.xpose.msra.mxu0 0
      %337 = vmatprep.subr.bf16.mxu0 0
      %338 = vmatpush1.bf16.xpose.msra.mxu0 0
      %339 = vmatprep.subr.bf16.mxu0 0
      %340 = vmatpush1.bf16.xpose.msra.mxu0 0
      %341 = vmatprep.subr.bf16.mxu0 0
      %342 = vmatpush1.bf16.xpose.msra.mxu0 0
      %343 = vmatprep.subr.bf16.mxu0 0
      %344 = vmatpush1.bf16.xpose.msra.mxu0 0
      %345 = vmatprep.subr.bf16.mxu0 0
      %346 = vmatpush1.bf16.xpose.msra.mxu0 0
      %347 = vmatprep.subr.bf16.mxu0 0
      %348 = vmatpush1.bf16.xpose.msra.mxu0 0
      %349 = vmatprep.subr.bf16.mxu0 0
      %350 = vmatpush1.bf16.xpose.msra.mxu0 0
      %351 = vmatprep.subr.bf16.mxu0 0
      %352 = vmatpush1.bf16.xpose.msra.mxu0 0
      %353 = vmatprep.subr.bf16.mxu0 0
      %354 = vmatpush1.bf16.xpose.msra.mxu0 0
      %355 = vmatprep.subr.bf16.mxu0 0
      %356 = vmatpush1.bf16.xpose.msra.mxu0 0
      %357 = vmatprep.mubr.bf16.mxu0 0
      %358 = vmatmul.mubr.bf16.gmra.mrb[0].mxu0 %v317
      %v359 = vpop.f32.mrb[0].mxu0
      %v360 = vadd.f32 0.0, %v359
      %v361 = vpop.f32.mrb[0].mxu0
      %v362 = vpop.f32.mrb[0].mxu0
      %v363 = vadd.f32 0.0, %v362
      %v364 = vpop.f32.mrb[0].mxu0
      %365 = vmatprep.mubr.bf16.mxu0 0
      %366 = vmatmul.mubr.bf16.gmra.mrb[0].mxu0 %v320
      %v367 = vpop.f32.mrb[0].mxu0
      %v368 = vadd.f32 0.0, %v367
      %v369 = vpop.f32.mrb[0].mxu0
      %v370 = vpop.f32.mrb[0].mxu0
      %v371 = vpop.f32.mrb[0].mxu0
      %372 = vdwg.mxu0
      %v374 = vsel %vm201, %v191, 0
      %v377 = vsel %vm201, %v192, 0
      %v380 = vsel %vm201, %v196, 0
      %382 = vmatprep.subr.bf16.mxu0 0
      %383 = vmatpush1.bf16.xpose.msra.mxu0 %v380
      %384 = vmatprep.subr.bf16.mxu0 0
      %385 = vmatpush1.bf16.xpose.msra.mxu0 0
      %386 = vmatprep.subr.bf16.mxu0 0
      %387 = vmatpush1.bf16.xpose.msra.mxu0 0
      %388 = vmatprep.subr.bf16.mxu0 0
      %389 = vmatpush1.bf16.xpose.msra.mxu0 0
      %390 = vmatprep.subr.bf16.mxu0 0
      %391 = vmatpush1.bf16.xpose.msra.mxu0 0
      %392 = vmatprep.subr.bf16.mxu0 0
      %393 = vmatpush1.bf16.xpose.msra.mxu0 0
      %394 = vmatprep.subr.bf16.mxu0 0
      %395 = vmatpush1.bf16.xpose.msra.mxu0 0
      %396 = vmatprep.subr.bf16.mxu0 0
      %397 = vmatpush1.bf16.xpose.msra.mxu0 0
      %398 = vmatprep.subr.bf16.mxu0 0
      %399 = vmatpush1.bf16.xpose.msra.mxu0 0
      %400 = vmatprep.subr.bf16.mxu0 0
      %401 = vmatpush1.bf16.xpose.msra.mxu0 0
      %402 = vmatprep.subr.bf16.mxu0 0
      %403 = vmatpush1.bf16.xpose.msra.mxu0 0
      %404 = vmatprep.subr.bf16.mxu0 0
      %405 = vmatpush1.bf16.xpose.msra.mxu0 0
      %406 = vmatprep.subr.bf16.mxu0 0
      %407 = vmatpush1.bf16.xpose.msra.mxu0 0
      %408 = vmatprep.subr.bf16.mxu0 0
      %409 = vmatpush1.bf16.xpose.msra.mxu0 0
      %410 = vmatprep.subr.bf16.mxu0 0
      %411 = vmatpush1.bf16.xpose.msra.mxu0 0
      %412 = vmatprep.subr.bf16.mxu0 0
      %413 = vmatpush1.bf16.xpose.msra.mxu0 0
      %414 = vmatprep.mubr.bf16.mxu0 0
      %415 = vmatmul.mubr.bf16.gmra.mrb[0].mxu0 %v374
      %v416 = vpop.f32.mrb[0].mxu0
      %v417 = vadd.f32 0.0, %v416
      %v418 = vpop.f32.mrb[0].mxu0
      %v419 = vpop.f32.mrb[0].mxu0
      %v420 = vadd.f32 0.0, %v419
      %v421 = vpop.f32.mrb[0].mxu0
      %422 = vmatprep.mubr.bf16.mxu0 0
      %423 = vmatmul.mubr.bf16.gmra.mrb[0].mxu0 %v377
      %v424 = vpop.f32.mrb[0].mxu0
      %v425 = vadd.f32 0.0, %v424
      %v426 = vpop.f32.mrb[0].mxu0
      %v427 = vpop.f32.mrb[0].mxu0
      %v428 = vpop.f32.mrb[0].mxu0
      %429 = vdwg.mxu0
      %v430 = vsel %vm201, %v246, -inf
      %431 = vmax.xlane.f32.xlu0 %v430
      %v432 = vpop.xlane.xlu0 %431
      %v433 = vsel %vm201, %v249, -inf
      %434 = vmax.xlane.f32.xlu0 %v433
      %v435 = vpop.xlane.xlu0 %434
      %vm436 = vcmask 57344
      %v437 = vsel %vm436, %v254, -inf
      %438 = vmax.xlane.f32.xlu0 %v437
      %v439 = vpop.xlane.xlu0 %438
      %v440 = vsel %vm201, %v303, -inf
      %441 = vmax.xlane.f32.xlu0 %v440
      %v442 = vpop.xlane.xlu0 %441
      %v443 = vsel %vm201, %v306, -inf
      %444 = vmax.xlane.f32.xlu0 %v443
      %v445 = vpop.xlane.xlu0 %444
      %v446 = vsel %vm436, %v311, -inf
      %447 = vmax.xlane.f32.xlu0 %v446
      %v448 = vpop.xlane.xlu0 %447
      %v449 = vsel %vm201, %v360, -inf
      %450 = vmax.xlane.f32.xlu0 %v449
      %v451 = vpop.xlane.xlu0 %450
      %v452 = vsel %vm201, %v363, -inf
      %453 = vmax.xlane.f32.xlu0 %v452
      %v454 = vpop.xlane.xlu0 %453
      %v455 = vsel %vm436, %v368, -inf
      %456 = vmax.xlane.f32.xlu0 %v455
      %v457 = vpop.xlane.xlu0 %456
      %v458 = vsel %vm201, %v417, -inf
      %459 = vmax.xlane.f32.xlu0 %v458
      %v460 = vpop.xlane.xlu0 %459
      %v461 = vsel %vm201, %v420, -inf
      %462 = vmax.xlane.f32.xlu0 %v461
      %v463 = vpop.xlane.xlu0 %462
      %v464 = vsel %vm436, %v425, -inf
      %465 = vmax.xlane.f32.xlu0 %v464
      %v466 = vpop.xlane.xlu0 %465
      %v467 = vsub.f32 %v246, %v432
      %v468 = vsub.f32 %v249, %v435
      %v469 = vsub.f32 %v254, %v439
      %v470 = vsub.f32 %v303, %v442
      %v471 = vsub.f32 %v306, %v445
      %v472 = vsub.f32 %v311, %v448
      %v473 = vsub.f32 %v360, %v451
      %v474 = vsub.f32 %v363, %v454
      %v475 = vsub.f32 %v368, %v457
      %v476 = vsub.f32 %v417, %v460
      %v477 = vsub.f32 %v420, %v463
      %v478 = vsub.f32 %v425, %v466
      %v479 = vmul.f32 %v467, 1.442695
      %v480 = vpow.pop %v479
      %v481 = vmul.f32 %v468, 1.442695
      %v482 = vpow.pop %v481
      %v483 = vmul.f32 %v469, 1.442695
      %v484 = vpow.pop %v483
      %v485 = vmul.f32 %v470, 1.442695
      %v486 = vpow.pop %v485
      %v487 = vmul.f32 %v471, 1.442695
      %v488 = vpow.pop %v487
      %v489 = vmul.f32 %v472, 1.442695
      %v490 = vpow.pop %v489
      %v491 = vmul.f32 %v473, 1.442695
      %v492 = vpow.pop %v491
      %v493 = vmul.f32 %v474, 1.442695
      %v494 = vpow.pop %v493
      %v495 = vmul.f32 %v475, 1.442695
      %v496 = vpow.pop %v495
      %v497 = vmul.f32 %v476, 1.442695
      %v498 = vpow.pop %v497
      %v499 = vmul.f32 %v477, 1.442695
      %v500 = vpow.pop %v499
      %v501 = vmul.f32 %v478, 1.442695
      %v502 = vpow.pop %v501
      %v503 = vsel %vm201, %v480, 0.0
      %504 = vadd.xlane.f32.xlu0 %v503
      %v505 = vpop.xlane.xlu0 %504
      %v506 = vsel %vm201, %v482, 0.0
      %507 = vadd.xlane.f32.xlu0 %v506
      %v508 = vpop.xlane.xlu0 %507
      %v509 = vsel %vm436, %v484, 0.0
      %510 = vadd.xlane.f32.xlu0 %v509
      %v511 = vpop.xlane.xlu0 %510
      %v512 = vsel %vm201, %v486, 0.0
      %513 = vadd.xlane.f32.xlu0 %v512
      %v514 = vpop.xlane.xlu0 %513
      %v515 = vsel %vm201, %v488, 0.0
      %516 = vadd.xlane.f32.xlu0 %v515
      %v517 = vpop.xlane.xlu0 %516
      %v518 = vsel %vm436, %v490, 0.0
      %519 = vadd.xlane.f32.xlu0 %v518
      %v520 = vpop.xlane.xlu0 %519
      %v521 = vsel %vm201, %v492, 0.0
      %522 = vadd.xlane.f32.xlu0 %v521
      %v523 = vpop.xlane.xlu0 %522
      %v524 = vsel %vm201, %v494, 0.0
      %525 = vadd.xlane.f32.xlu0 %v524
      %v526 = vpop.xlane.xlu0 %525
      %v527 = vsel %vm436, %v496, 0.0
      %528 = vadd.xlane.f32.xlu0 %v527
      %v529 = vpop.xlane.xlu0 %528
      %v530 = vsel %vm201, %v498, 0.0
      %531 = vadd.xlane.f32.xlu0 %v530
      %v532 = vpop.xlane.xlu0 %531
      %v533 = vsel %vm201, %v500, 0.0
      %534 = vadd.xlane.f32.xlu0 %v533
      %v535 = vpop.xlane.xlu0 %534
      %v536 = vsel %vm436, %v502, 0.0
      %537 = vadd.xlane.f32.xlu0 %v536
      %v538 = vpop.xlane.xlu0 %537
      %v539 = vrcp.pop %v505
      %v540 = vrcp.pop %v508
      %v541 = vrcp.pop %v511
      %v542 = vrcp.pop %v514
      %v543 = vrcp.pop %v517
      %v544 = vrcp.pop %v520
      %v545 = vrcp.pop %v523
      %v546 = vrcp.pop %v526
      %v547 = vrcp.pop %v529
      %v548 = vrcp.pop %v532
      %v549 = vrcp.pop %v535
      %v550 = vrcp.pop %v538
      %v551 = vmul.f32 %v480, %v539
      %v552 = vmul.f32 %v482, %v540
      %v553 = vmul.f32 %v484, %v541
      %v554 = vmul.f32 %v486, %v542
      %v555 = vmul.f32 %v488, %v543
      %v556 = vmul.f32 %v490, %v544
      %v557 = vmul.f32 %v492, %v545
      %v558 = vmul.f32 %v494, %v546
      %v559 = vmul.f32 %v496, %v547
      %v560 = vmul.f32 %v498, %v548
      %v561 = vmul.f32 %v500, %v549
      %v562 = vmul.f32 %v502, %v550
      %v563 = vpack.c.bf16 %v552, %v551
      %v564 = vpack.c.bf16 %v553, %v553
      %v565 = vpack.c.bf16 %v555, %v554
      %v566 = vpack.c.bf16 %v556, %v556
      %v567 = vpack.c.bf16 %v558, %v557
      %v568 = vpack.c.bf16 %v559, %v559
      %v569 = vpack.c.bf16 %v561, %v560
      %v570 = vpack.c.bf16 %v562, %v562
      %v572 = vsel %vm201, %v563, 0
      %v575 = vsel %vm201, %v564, 0
      %vm577 = vcmask 1043456
      %v579 = vsel %vm577, %v197, 0
      %581 = vmatprep.subr.bf16.mxu0 0
      %582 = vmatpush1.bf16.msra.mxu0 %v579
      %583 = vmatprep.subr.bf16.mxu0 0
      %584 = vmatpush1.bf16.msra.mxu0 0
      %585 = vmatprep.subr.bf16.mxu0 0
      %586 = vmatpush1.bf16.msra.mxu0 0
      %587 = vmatprep.subr.bf16.mxu0 0
      %588 = vmatpush1.bf16.msra.mxu0 0
      %589 = vmatprep.subr.bf16.mxu0 0
      %590 = vmatpush1.bf16.msra.mxu0 0
      %591 = vmatprep.subr.bf16.mxu0 0
      %592 = vmatpush1.bf16.msra.mxu0 0
      %593 = vmatprep.subr.bf16.mxu0 0
      %594 = vmatpush1.bf16.msra.mxu0 0
      %595 = vmatprep.subr.bf16.mxu0 0
      %596 = vmatpush1.bf16.msra.mxu0 0
      %597 = vmatprep.subr.bf16.mxu0 0
      %598 = vmatpush1.bf16.msra.mxu0 0
      %599 = vmatprep.subr.bf16.mxu0 0
      %600 = vmatpush1.bf16.msra.mxu0 0
      %601 = vmatprep.subr.bf16.mxu0 0
      %602 = vmatpush1.bf16.msra.mxu0 0
      %603 = vmatprep.subr.bf16.mxu0 0
      %604 = vmatpush1.bf16.msra.mxu0 0
      %605 = vmatprep.subr.bf16.mxu0 0
      %606 = vmatpush1.bf16.msra.mxu0 0
      %607 = vmatprep.subr.bf16.mxu0 0
      %608 = vmatpush1.bf16.msra.mxu0 0
      %609 = vmatprep.subr.bf16.mxu0 0
      %610 = vmatpush1.bf16.msra.mxu0 0
      %611 = vmatprep.subr.bf16.mxu0 0
      %612 = vmatpush1.bf16.msra.mxu0 0
      %613 = vmatprep.mubr.bf16.mxu0 0
      %614 = vmatmul.mubr.bf16.gmra.mrb[0].mxu0 %v572
      %v615 = vpop.f32.mrb[0].mxu0
      %v616 = vadd.f32 0.0, %v615
      %v617 = vpop.f32.mrb[0].mxu0
      %v618 = vpop.f32.mrb[0].mxu0
      %v619 = vadd.f32 0.0, %v618
      %v620 = vpop.f32.mrb[0].mxu0
      %621 = vmatprep.mubr.bf16.mxu0 0
      %622 = vmatmul.mubr.bf16.gmra.mrb[0].mxu0 %v575
      %v623 = vpop.f32.mrb[0].mxu0
      %v624 = vadd.f32 0.0, %v623
      %v625 = vpop.f32.mrb[0].mxu0
      %v626 = vpop.f32.mrb[0].mxu0
      %v627 = vpop.f32.mrb[0].mxu0
      %628 = vdwg.mxu0
      %v630 = vsel %vm201, %v565, 0
      %v633 = vsel %vm201, %v566, 0
      %v636 = vsel %vm577, %v198, 0
      %638 = vmatprep.subr.bf16.mxu0 0
      %639 = vmatpush1.bf16.msra.mxu0 %v636
      %640 = vmatprep.subr.bf16.mxu0 0
      %641 = vmatpush1.bf16.msra.mxu0 0
      %642 = vmatprep.subr.bf16.mxu0 0
      %643 = vmatpush1.bf16.msra.mxu0 0
      %644 = vmatprep.subr.bf16.mxu0 0
      %645 = vmatpush1.bf16.msra.mxu0 0
      %646 = vmatprep.subr.bf16.mxu0 0
      %647 = vmatpush1.bf16.msra.mxu0 0
      %648 = vmatprep.subr.bf16.mxu0 0
      %649 = vmatpush1.bf16.msra.mxu0 0
      %650 = vmatprep.subr.bf16.mxu0 0
      %651 = vmatpush1.bf16.msra.mxu0 0
      %652 = vmatprep.subr.bf16.mxu0 0
      %653 = vmatpush1.bf16.msra.mxu0 0
      %654 = vmatprep.subr.bf16.mxu0 0
      %655 = vmatpush1.bf16.msra.mxu0 0
      %656 = vmatprep.subr.bf16.mxu0 0
      %657 = vmatpush1.bf16.msra.mxu0 0
      %658 = vmatprep.subr.bf16.mxu0 0
      %659 = vmatpush1.bf16.msra.mxu0 0
      %660 = vmatprep.subr.bf16.mxu0 0
      %661 = vmatpush1.bf16.msra.mxu0 0
      %662 = vmatprep.subr.bf16.mxu0 0
      %663 = vmatpush1.bf16.msra.mxu0 0
      %664 = vmatprep.subr.bf16.mxu0 0
      %665 = vmatpush1.bf16.msra.mxu0 0
      %666 = vmatprep.subr.bf16.mxu0 0
      %667 = vmatpush1.bf16.msra.mxu0 0
      %668 = vmatprep.subr.bf16.mxu0 0
      %669 = vmatpush1.bf16.msra.mxu0 0
      %670 = vmatprep.mubr.bf16.mxu0 0
      %671 = vmatmul.mubr.bf16.gmra.mrb[0].mxu0 %v630
      %v672 = vpop.f32.mrb[0].mxu0
      %v673 = vadd.f32 0.0, %v672
      %v674 = vpop.f32.mrb[0].mxu0
      %v675 = vpop.f32.mrb[0].mxu0
      %v676 = vadd.f32 0.0, %v675
      %v677 = vpop.f32.mrb[0].mxu0
      %678 = vmatprep.mubr.bf16.mxu0 0
      %679 = vmatmul.mubr.bf16.gmra.mrb[0].mxu0 %v633
      %v680 = vpop.f32.mrb[0].mxu0
      %v681 = vadd.f32 0.0, %v680
      %v682 = vpop.f32.mrb[0].mxu0
      %v683 = vpop.f32.mrb[0].mxu0
      %v684 = vpop.f32.mrb[0].mxu0
      %685 = vdwg.mxu0
      %v687 = vsel %vm201, %v567, 0
      %v690 = vsel %vm201, %v568, 0
      %v693 = vsel %vm577, %v199, 0
      %695 = vmatprep.subr.bf16.mxu0 0
      %696 = vmatpush1.bf16.msra.mxu0 %v693
      %697 = vmatprep.subr.bf16.mxu0 0
      %698 = vmatpush1.bf16.msra.mxu0 0
      %699 = vmatprep.subr.bf16.mxu0 0
      %700 = vmatpush1.bf16.msra.mxu0 0
      %701 = vmatprep.subr.bf16.mxu0 0
      %702 = vmatpush1.bf16.msra.mxu0 0
      %703 = vmatprep.subr.bf16.mxu0 0
      %704 = vmatpush1.bf16.msra.mxu0 0
      %705 = vmatprep.subr.bf16.mxu0 0
      %706 = vmatpush1.bf16.msra.mxu0 0
      %707 = vmatprep.subr.bf16.mxu0 0
      %708 = vmatpush1.bf16.msra.mxu0 0
      %709 = vmatprep.subr.bf16.mxu0 0
      %710 = vmatpush1.bf16.msra.mxu0 0
      %711 = vmatprep.subr.bf16.mxu0 0
      %712 = vmatpush1.bf16.msra.mxu0 0
      %713 = vmatprep.subr.bf16.mxu0 0
      %714 = vmatpush1.bf16.msra.mxu0 0
      %715 = vmatprep.subr.bf16.mxu0 0
      %716 = vmatpush1.bf16.msra.mxu0 0
      %717 = vmatprep.subr.bf16.mxu0 0
      %718 = vmatpush1.bf16.msra.mxu0 0
      %719 = vmatprep.subr.bf16.mxu0 0
      %720 = vmatpush1.bf16.msra.mxu0 0
      %721 = vmatprep.subr.bf16.mxu0 0
      %722 = vmatpush1.bf16.msra.mxu0 0
      %723 = vmatprep.subr.bf16.mxu0 0
      %724 = vmatpush1.bf16.msra.mxu0 0
      %725 = vmatprep.subr.bf16.mxu0 0
      %726 = vmatpush1.bf16.msra.mxu0 0
      %727 = vmatprep.mubr.bf16.mxu0 0
      %728 = vmatmul.mubr.bf16.gmra.mrb[0].mxu0 %v687
      %v729 = vpop.f32.mrb[0].mxu0
      %v730 = vadd.f32 0.0, %v729
      %v731 = vpop.f32.mrb[0].mxu0
      %v732 = vpop.f32.mrb[0].mxu0
      %v733 = vadd.f32 0.0, %v732
      %v734 = vpop.f32.mrb[0].mxu0
      %735 = vmatprep.mubr.bf16.mxu0 0
      %736 = vmatmul.mubr.bf16.gmra.mrb[0].mxu0 %v690
      %v737 = vpop.f32.mrb[0].mxu0
      %v738 = vadd.f32 0.0, %v737
      %v739 = vpop.f32.mrb[0].mxu0
      %v740 = vpop.f32.mrb[0].mxu0
      %v741 = vpop.f32.mrb[0].mxu0
      %742 = vdwg.mxu0
      %v744 = vsel %vm201, %v569, 0
      %v747 = vsel %vm201, %v570, 0
      %v750 = vsel %vm577, %v200, 0
      %752 = vmatprep.subr.bf16.mxu0 0
      %753 = vmatpush1.bf16.msra.mxu0 %v750
      %754 = vmatprep.subr.bf16.mxu0 0
      %755 = vmatpush1.bf16.msra.mxu0 0
      %756 = vmatprep.subr.bf16.mxu0 0
      %757 = vmatpush1.bf16.msra.mxu0 0
      %758 = vmatprep.subr.bf16.mxu0 0
      %759 = vmatpush1.bf16.msra.mxu0 0
      %760 = vmatprep.subr.bf16.mxu0 0
      %761 = vmatpush1.bf16.msra.mxu0 0
      %762 = vmatprep.subr.bf16.mxu0 0
      %763 = vmatpush1.bf16.msra.mxu0 0
      %764 = vmatprep.subr.bf16.mxu0 0
      %765 = vmatpush1.bf16.msra.mxu0 0
      %766 = vmatprep.subr.bf16.mxu0 0
      %767 = vmatpush1.bf16.msra.mxu0 0
      %768 = vmatprep.subr.bf16.mxu0 0
      %769 = vmatpush1.bf16.msra.mxu0 0
      %770 = vmatprep.subr.bf16.mxu0 0
      %771 = vmatpush1.bf16.msra.mxu0 0
      %772 = vmatprep.subr.bf16.mxu0 0
      %773 = vmatpush1.bf16.msra.mxu0 0
      %774 = vmatprep.subr.bf16.mxu0 0
      %775 = vmatpush1.bf16.msra.mxu0 0
      %776 = vmatprep.subr.bf16.mxu0 0
      %777 = vmatpush1.bf16.msra.mxu0 0
      %778 = vmatprep.subr.bf16.mxu0 0
      %779 = vmatpush1.bf16.msra.mxu0 0
      %780 = vmatprep.subr.bf16.mxu0 0
      %781 = vmatpush1.bf16.msra.mxu0 0
      %782 = vmatprep.subr.bf16.mxu0 0
      %783 = vmatpush1.bf16.msra.mxu0 0
      %784 = vmatprep.mubr.bf16.mxu0 0
      %785 = vmatmul.mubr.bf16.gmra.mrb[0].mxu0 %v744
      %v786 = vpop.f32.mrb[0].mxu0
      %v787 = vadd.f32 0.0, %v786
      %v788 = vpop.f32.mrb[0].mxu0
      %v789 = vpop.f32.mrb[0].mxu0
      %v790 = vadd.f32 0.0, %v789
      %v791 = vpop.f32.mrb[0].mxu0
      %792 = vmatprep.mubr.bf16.mxu0 0
      %793 = vmatmul.mubr.bf16.gmra.mrb[0].mxu0 %v747
      %v794 = vpop.f32.mrb[0].mxu0
      %v795 = vadd.f32 0.0, %v794
      %v796 = vpop.f32.mrb[0].mxu0
      %v797 = vpop.f32.mrb[0].mxu0
      %v798 = vpop.f32.mrb[0].mxu0
      %799 = vdwg.mxu0
      %800 = vst.msk [vmem:[%s163] sm:$0xff] %vm201, %v616
      %801 = vst.msk [vmem:[%s163 + $0x8] sm:$0xff] %vm201, %v619
      %802 = vst.msk [vmem:[%s163 + $0x10] sm:$0x1] %vm436, %v624
      %803 = vst.msk [vmem:[%s163 + $0x18] sm:$0xff] %vm201, %v673
      %804 = vst.msk [vmem:[%s163 + $0x20] sm:$0xff] %vm201, %v676
      %805 = vst.msk [vmem:[%s163 + $0x28] sm:$0x1] %vm436, %v681
      %806 = vst.msk [vmem:[%s163 + $0x30] sm:$0xff] %vm201, %v730
      %807 = vst.msk [vmem:[%s163 + $0x38] sm:$0xff] %vm201, %v733
      %808 = vst.msk [vmem:[%s163 + $0x40] sm:$0x1] %vm436, %v738
      %809 = vst.msk [vmem:[%s163 + $0x48] sm:$0xff] %vm201, %v787
      %810 = vst.msk [vmem:[%s163 + $0x50] sm:$0xff] %vm201, %v790
      %811 = vst.msk [vmem:[%s163 + $0x58] sm:$0x1] %vm436, %v795
      %p812 = scmp.lt.s32.totalorder %s13, 1
      %s813 = scalar_select %p812, %s13, 1
      %s814 = smul.addr %s813, 12
      %s815 = smul.addr %s814, 8
      %s816 = scalar_lea.vmem %s2, %s815
      // Predicated region
      $region29: #{vit_context_forward.23} parent=27 // pred_check
        %p817 = pneg %p83
      $region30: #{vit_context_forward.23} parent=27 // pred_check_branch
        %819 = sbr.rel (%p817) target = $region32
      $region31: #{vit_context_forward.23} parent=27 // pred_region
        _
      $region32: #{vit_context_forward.23} parent=27 // pred_fallthru
        _
    $region28: #{vit_context_forward.23} parent=5 // pred_fallthru
      _
    %p820 = scmp.le.s32.totalorder 2, %s8
    // Predicated region
    $region33: #{vit_context_forward.23} parent=5 // pred_check
      %p821 = pneg %p820
    $region34: #{vit_context_forward.23} parent=5 // pred_check_branch
      %823 = sbr.rel (%p821) target = $region36
    $region35: #{vit_context_forward.23} parent=5 // pred_region
      %s824 = ssub.s32 %s8, 2
      // Predicated region
      $region37: #{vit_context_forward.23} parent=35 // pred_check
        %p825 = pneg %p89
      $region38: #{vit_context_forward.23} parent=35 // pred_check_branch
        %827 = sbr.rel (%p825) target = $region40
      $region39: #{vit_context_forward.23} parent=35 // pred_region
        %p828 = scmp.lt.s32.totalorder %s14, 1
        %s829 = scalar_select %p828, %s14, 1
        %s830 = smul.addr %s829, 12
        %s831 = smul.addr %s830, 8
        %s832 = scalar_lea.vmem %s2, %s831
      $region40: #{vit_context_forward.23} parent=35 // pred_fallthru
        _
    $region36: #{vit_context_forward.23} parent=5 // pred_fallthru
      _
  $region6: #{vit_context_forward.23} parent=0 // loop_footer
    %s12 = sadd.s32 1, %s8
  $region7: #{vit_context_forward.23} parent=0 // loop_footer_branch
    %7 = sbr.rel target = $region3
  $region8: #{vit_context_forward.23} parent=0 // loop_exit
    _

// kernel: vit_context_forward.24
$region0: #{vit_context_forward.24}
  #allocation0 [shape = 'u32[]', space=smem, size = 0x4, offset = 0x4, fixed_abs, tag = 'smem constant byte address 0x4 - core index']
  #allocation1 [shape = 'u32[144,128]{1,0:T(1,128)}', space=vmem, size = 0x12000, scoped, tag = 'internal scratch']
  #allocation2 [shape = 'f32[34,32]{1,0:T(8,128)}', space=vmem, size = 0x5000, scoped, tag = 'scratch operand']
  %s0 = inlined_call_operand.vmem [shape: f32[34,32], index: 0, kind: input, shape index: {}]
  %s1 = inlined_call_operand.vmem [shape: bf16[32,32], index: 1, kind: input, shape index: {}]
  %s2 = inlined_call_operand.vmem [shape: f32[1,32], index: 2, kind: input, shape index: {}]
  %s3 = inlined_call_operand.vmem [shape: f32[34,32], index: 3, kind: input, shape index: {}]
  %s4 = inlined_call_operand.vmem [shape: f32[34,32], index: 4, kind: output, shape index: {}]
  %s5 = sld [smem:[#allocation0]]
  $region34: #{vit_context_forward.24} parent=0
    _
  %s7 = ssub.s32 1, %s5
  %s8 = scalar_select 0, %s7, %s5
  // Predicated region
  $region2: #{vit_context_forward.24} parent=0 // pred_check
    _
  $region3: #{vit_context_forward.24} parent=0 // pred_check_branch
    %10 = sbr.rel (0) target = $region5
  $region4: #{vit_context_forward.24} parent=0 // pred_region
    _
  $region5: #{vit_context_forward.24} parent=0 // pred_fallthru
    _
  // Predicated region
  $region6: #{vit_context_forward.24} parent=0 // pred_check
    _
  $region7: #{vit_context_forward.24} parent=0 // pred_check_branch
    %12 = sbr.rel (0) target = $region9
  $region8: #{vit_context_forward.24} parent=0 // pred_region
    _
  $region9: #{vit_context_forward.24} parent=0 // pred_fallthru
    _
  // Predicated region
  $region10: #{vit_context_forward.24} parent=0 // pred_check
    _
  $region11: #{vit_context_forward.24} parent=0 // pred_check_branch
    %14 = sbr.rel (0) target = $region13
  $region12: #{vit_context_forward.24} parent=0 // pred_region
    _
  $region13: #{vit_context_forward.24} parent=0 // pred_fallthru
    _
  // Predicated region
  $region14: #{vit_context_forward.24} parent=0 // pred_check
    _
  $region15: #{vit_context_forward.24} parent=0 // pred_check_branch
    %16 = sbr.rel (0) target = $region17
  $region16: #{vit_context_forward.24} parent=0 // pred_region
    _
  $region17: #{vit_context_forward.24} parent=0 // pred_fallthru
    _
  %v18 = vld [vmem:[%s0] sm:$0xff]
  %v19 = vld [vmem:[%s0 + $0x8] sm:$0xff]
  %v20 = vld [vmem:[%s0 + $0x10] sm:$0xff]
  %v21 = vld [vmem:[%s0 + $0x18] sm:$0xff]
  %v22 = vld [vmem:[%s0 + $0x20] sm:$0x3]
  %p23 = scmp.eq.s32.totalorder 0, 0
  // Predicated region
  $region18: #{vit_context_forward.24} parent=0 // pred_check
    %p24 = pneg %p23
  $region19: #{vit_context_forward.24} parent=0 // pred_check_branch
    %26 = sbr.rel (%p24) target = $region21
  $region20: #{vit_context_forward.24} parent=0 // pred_region
    %v27 = vld [vmem:[%s2] sm:$0x1]
    %v29 = vlaneseq
    %v30 = vshrl.u32 %v29, 7
    %v31 = vsub.s32 0, %v30
    %v32 = vrot.slane %v27, %v31
    %vm34 = vcmask 261120
    %35 = vst.msk [vmem:[#allocation2] sm:$0xff] %vm34, %v32
    %36 = vst.msk [vmem:[#allocation2 + $0x8] sm:$0xff] %vm34, %v32
    %37 = vst.msk [vmem:[#allocation2 + $0x10] sm:$0xff] %vm34, %v32
    %38 = vst.msk [vmem:[#allocation2 + $0x18] sm:$0xff] %vm34, %v32
    %vm39 = vcmask 254976
    %40 = vst.msk [vmem:[#allocation2 + $0x20] sm:$0x3] %vm39, %v32
  $region21: #{vit_context_forward.24} parent=0 // pred_fallthru
    _
  %v41 = vld [vmem:[#allocation2] sm:$0xff]
  %v42 = vld [vmem:[#allocation2 + $0x8] sm:$0xff]
  %v43 = vld [vmem:[#allocation2 + $0x10] sm:$0xff]
  %v44 = vld [vmem:[#allocation2 + $0x18] sm:$0xff]
  %v45 = vld [vmem:[#allocation2 + $0x20] sm:$0x3]
  %v46 = vpack.c.bf16 %v19, %v18
  %v47 = vpack.c.bf16 %v21, %v20
  %v48 = vpack.c.bf16 %v22, %v22
  %v49 = vld [vmem:[%s1] sm:$0xf]
  %v50 = vld [vmem:[%s1 + $0x4] sm:$0xf]
  %v51 = vld [vmem:[%s1 + $0x8] sm:$0xf]
  %v52 = vld [vmem:[%s1 + $0xc] sm:$0xf]
  %v57 = vunpack.c.l.b16 %v49
  %v58 = vunpack.c.l.b16 %v50
  %v59 = vunpack.c.l.b16 %v51
  %v60 = vunpack.c.l.b16 %v52
  %v61 = vpack.c.b16 %v58, %v57
  %v62 = vpack.c.b16 %v60, %v59
  %vm65 = vcmask 261120
  %v67 = vsel %vm65, %v46, 0
  %v70 = vsel %vm65, %v47, 0
  %v73 = vsel %vm65, %v48, 0
  %75 = vmatprep.subr.bf16.mxu0 0
  %76 = vmatpush1.bf16.msra.mxu0 %v61
  %77 = vmatprep.subr.bf16.mxu0 0
  %78 = vmatpush1.bf16.msra.mxu0 %v62
  %79 = vmatprep.subr.bf16.mxu0 0
  %80 = vmatpush1.bf16.msra.mxu0 0
  %81 = vmatprep.subr.bf16.mxu0 0
  %82 = vmatpush1.bf16.msra.mxu0 0
  %83 = vmatprep.subr.bf16.mxu0 0
  %84 = vmatpush1.bf16.msra.mxu0 0
  %85 = vmatprep.subr.bf16.mxu0 0
  %86 = vmatpush1.bf16.msra.mxu0 0
  %87 = vmatprep.subr.bf16.mxu0 0
  %88 = vmatpush1.bf16.msra.mxu0 0
  %89 = vmatprep.subr.bf16.mxu0 0
  %90 = vmatpush1.bf16.msra.mxu0 0
  %91 = vmatprep.subr.bf16.mxu0 0
  %92 = vmatpush1.bf16.msra.mxu0 0
  %93 = vmatprep.subr.bf16.mxu0 0
  %94 = vmatpush1.bf16.msra.mxu0 0
  %95 = vmatprep.subr.bf16.mxu0 0
  %96 = vmatpush1.bf16.msra.mxu0 0
  %97 = vmatprep.subr.bf16.mxu0 0
  %98 = vmatpush1.bf16.msra.mxu0 0
  %99 = vmatprep.subr.bf16.mxu0 0
  %100 = vmatpush1.bf16.msra.mxu0 0
  %101 = vmatprep.subr.bf16.mxu0 0
  %102 = vmatpush1.bf16.msra.mxu0 0
  %103 = vmatprep.subr.bf16.mxu0 0
  %104 = vmatpush1.bf16.msra.mxu0 0
  %105 = vmatprep.subr.bf16.mxu0 0
  %106 = vmatpush1.bf16.msra.mxu0 0
  %107 = vmatprep.mubr.bf16.mxu0 0
  %108 = vmatmul.mubr.bf16.gmra.mrb[0].mxu0 %v67
  %v109 = vpop.f32.mrb[0].mxu0
  %v110 = vadd.f32 0.0, %v109
  %v111 = vpop.f32.mrb[0].mxu0
  %v112 = vpop.f32.mrb[0].mxu0
  %v113 = vadd.f32 0.0, %v112
  %v114 = vpop.f32.mrb[0].mxu0
  %115 = vmatprep.mubr.bf16.mxu0 0
  %116 = vmatmul.mubr.bf16.gmra.mrb[0].mxu0 %v70
  %v117 = vpop.f32.mrb[0].mxu0
  %v118 = vadd.f32 0.0, %v117
  %v119 = vpop.f32.mrb[0].mxu0
  %v120 = vpop.f32.mrb[0].mxu0
  %v121 = vadd.f32 0.0, %v120
  %v122 = vpop.f32.mrb[0].mxu0
  %123 = vmatprep.mubr.bf16.mxu0 0
  %124 = vmatmul.mubr.bf16.gmra.mrb[0].mxu0 %v73
  %v125 = vpop.f32.mrb[0].mxu0
  %v126 = vadd.f32 0.0, %v125
  %v127 = vpop.f32.mrb[0].mxu0
  %v128 = vpop.f32.mrb[0].mxu0
  %v129 = vpop.f32.mrb[0].mxu0
  %130 = vdwg.mxu0
  %v131 = vadd.f32 %v41, %v110
  %v132 = vadd.f32 %v42, %v113
  %v133 = vadd.f32 %v43, %v118
  %v134 = vadd.f32 %v44, %v121
  %v135 = vadd.f32 %v45, %v126
  %136 = vst.msk [vmem:[#allocation2] sm:$0xff] %vm65, %v131
  %137 = vst.msk [vmem:[#allocation2 + $0x8] sm:$0xff] %vm65, %v132
  %138 = vst.msk [vmem:[#allocation2 + $0x10] sm:$0xff] %vm65, %v133
  %139 = vst.msk [vmem:[#allocation2 + $0x18] sm:$0xff] %vm65, %v134
  %vm140 = vcmask 254976
  %141 = vst.msk [vmem:[#allocation2 + $0x20] sm:$0x3] %vm140, %v135
  // Predicated region
  $region22: #{vit_context_forward.24} parent=0 // pred_check
    %p142 = pneg %p23
  $region23: #{vit_context_forward.24} parent=0 // pred_check_branch
    %144 = sbr.rel (%p142) target = $region25
  $region24: #{vit_context_forward.24} parent=0 // pred_region
    %v145 = vld [vmem:[#allocation2] sm:$0xff]
    %v146 = vld [vmem:[#allocation2 + $0x8] sm:$0xff]
    %v147 = vld [vmem:[#allocation2 + $0x10] sm:$0xff]
    %v148 = vld [vmem:[#allocation2 + $0x18] sm:$0xff]
    %v149 = vld [vmem:[#allocation2 + $0x20] sm:$0x3]
    %v150 = vld [vmem:[%s3] sm:$0xff]
    %v151 = vld [vmem:[%s3 + $0x8] sm:$0xff]
    %v152 = vld [vmem:[%s3 + $0x10] sm:$0xff]
    %v153 = vld [vmem:[%s3 + $0x18] sm:$0xff]
    %v154 = vld [vmem:[%s3 + $0x20] sm:$0x3]
    %v155 = vadd.f32 %v145, %v150
    %v156 = vadd.f32 %v146, %v151
    %v157 = vadd.f32 %v147, %v152
    %v158 = vadd.f32 %v148, %v153
    %v159 = vadd.f32 %v149, %v154
    %160 = vst.msk [vmem:[%s4] sm:$0xff] %vm65, %v155
    %161 = vst.msk [vmem:[%s4 + $0x8] sm:$0xff] %vm65, %v156
    %162 = vst.msk [vmem:[%s4 + $0x10] sm:$0xff] %vm65, %v157
    %163 = vst.msk [vmem:[%s4 + $0x18] sm:$0xff] %vm65, %v158
    %164 = vst.msk [vmem:[%s4 + $0x20] sm:$0x3] %vm140, %v159
  $region25: #{vit_context_forward.24} parent=0 // pred_fallthru
    _
  // Predicated region
  $region26: #{vit_context_forward.24} parent=0 // pred_check
    _
  $region27: #{vit_context_forward.24} parent=0 // pred_check_branch
    %166 = sbr.rel (0) target = $region29
  $region28: #{vit_context_forward.24} parent=0 // pred_region
    _
  $region29: #{vit_context_forward.24} parent=0 // pred_fallthru
    _
  // Predicated region
  $region30: #{vit_context_forward.24} parent=0 // pred_check
    _
  $region31: #{vit_context_forward.24} parent=0 // pred_check_branch
    %168 = sbr.rel (0) target = $region33
  $region32: #{vit_context_forward.24} parent=0 // pred_region
    _
  $region33: #{vit_context_forward.24} parent=0 // pred_fallthru
    _

// kernel: vit_context_forward.25
$region0: #{vit_context_forward.25}
  #allocation0 [shape = 'u32[]', space=smem, size = 0x4, offset = 0x4, fixed_abs, tag = 'smem constant byte address 0x4 - core index']
  #allocation1 [shape = 'u32[144,128]{1,0:T(1,128)}', space=vmem, size = 0x12000, scoped, tag = 'internal scratch']
  #allocation2 [shape = 'f32[34,96]{1,0:T(8,128)}', space=vmem, size = 0x5000, scoped, tag = 'scratch operand']
  %s0 = inlined_call_operand.vmem [shape: f32[34,32], index: 0, kind: input, shape index: {}]
  %s1 = inlined_call_operand.vmem [shape: f32[1,32], index: 1, kind: input, shape index: {}]
  %s2 = inlined_call_operand.vmem [shape: f32[1,32], index: 2, kind: input, shape index: {}]
  %s3 = inlined_call_operand.vmem [shape: bf16[32,96], index: 3, kind: input, shape index: {}]
  %s4 = inlined_call_operand.vmem [shape: f32[1,96], index: 4, kind: input, shape index: {}]
  %s5 = inlined_call_operand.vmem [shape: f32[34,96], index: 5, kind: output, shape index: {}]
  %s6 = sld [smem:[#allocation0]]
  $region38: #{vit_context_forward.25} parent=0
    _
  %s8 = ssub.s32 1, %s6
  %s9 = scalar_select 0, %s8, %s6
  // Predicated region
  $region2: #{vit_context_forward.25} parent=0 // pred_check
    _
  $region3: #{vit_context_forward.25} parent=0 // pred_check_branch
    %11 = sbr.rel (0) target = $region5
  $region4: #{vit_context_forward.25} parent=0 // pred_region
    _
  $region5: #{vit_context_forward.25} parent=0 // pred_fallthru
    _
  // Predicated region
  $region6: #{vit_context_forward.25} parent=0 // pred_check
    _
  $region7: #{vit_context_forward.25} parent=0 // pred_check_branch
    %13 = sbr.rel (0) target = $region9
  $region8: #{vit_context_forward.25} parent=0 // pred_region
    _
  $region9: #{vit_context_forward.25} parent=0 // pred_fallthru
    _
  // Predicated region
  $region10: #{vit_context_forward.25} parent=0 // pred_check
    _
  $region11: #{vit_context_forward.25} parent=0 // pred_check_branch
    %15 = sbr.rel (0) target = $region13
  $region12: #{vit_context_forward.25} parent=0 // pred_region
    _
  $region13: #{vit_context_forward.25} parent=0 // pred_fallthru
    _
  // Predicated region
  $region14: #{vit_context_forward.25} parent=0 // pred_check
    _
  $region15: #{vit_context_forward.25} parent=0 // pred_check_branch
    %17 = sbr.rel (0) target = $region17
  $region16: #{vit_context_forward.25} parent=0 // pred_region
    _
  $region17: #{vit_context_forward.25} parent=0 // pred_fallthru
    _
  // Predicated region
  $region18: #{vit_context_forward.25} parent=0 // pred_check
    _
  $region19: #{vit_context_forward.25} parent=0 // pred_check_branch
    %19 = sbr.rel (0) target = $region21
  $region20: #{vit_context_forward.25} parent=0 // pred_region
    _
  $region21: #{vit_context_forward.25} parent=0 // pred_fallthru
    _
  %v21 = vld [vmem:[%s0] sm:$0xff]
  %v22 = vld [vmem:[%s0 + $0x8] sm:$0xff]
  %v23 = vld [vmem:[%s0 + $0x10] sm:$0xff]
  %v24 = vld [vmem:[%s0 + $0x18] sm:$0xff]
  %v25 = vld [vmem:[%s0 + $0x20] sm:$0x3]
  %vm26 = vcmask 261120
  %v27 = vsel %vm26, %v21, 0.0
  %28 = vadd.xlane.f32.xlu0 %v27
  %v29 = vpop.xlane.xlu0 %28
  %v30 = vsel %vm26, %v22, 0.0
  %31 = vadd.xlane.f32.xlu0 %v30
  %v32 = vpop.xlane.xlu0 %31
  %v33 = vsel %vm26, %v23, 0.0
  %34 = vadd.xlane.f32.xlu0 %v33
  %v35 = vpop.xlane.xlu0 %34
  %v36 = vsel %vm26, %v24, 0.0
  %37 = vadd.xlane.f32.xlu0 %v36
  %v38 = vpop.xlane.xlu0 %37
  %vm39 = vcmask 254976
  %v40 = vsel %vm39, %v25, 0.0
  %41 = vadd.xlane.f32.xlu0 %v40
  %v42 = vpop.xlane.xlu0 %41
  %v43 = vrcp.pop 32.0
  %v44 = vmul.f32 %v29, %v43
  %v45 = vmul.f32 %v32, %v43
  %v46 = vmul.f32 %v35, %v43
  %v47 = vmul.f32 %v38, %v43
  %v48 = vmul.f32 %v42, %v43
  %v49 = vsub.f32 %v21, %v44
  %v50 = vsub.f32 %v22, %v45
  %v51 = vsub.f32 %v23, %v46
  %v52 = vsub.f32 %v24, %v47
  %v53 = vsub.f32 %v25, %v48
  %v54 = vmul.f32 %v49, %v49
  %v55 = vmul.f32 %v50, %v50
  %v56 = vmul.f32 %v51, %v51
  %v57 = vmul.f32 %v52, %v52
  %v58 = vmul.f32 %v53, %v53
  %v59 = vsel %vm26, %v54, 0.0
  %60 = vadd.xlane.f32.xlu0 %v59
  %v61 = vpop.xlane.xlu0 %60
  %v62 = vsel %vm26, %v55, 0.0
  %63 = vadd.xlane.f32.xlu0 %v62
  %v64 = vpop.xlane.xlu0 %63
  %v65 = vsel %vm26, %v56, 0.0
  %66 = vadd.xlane.f32.xlu0 %v65
  %v67 = vpop.xlane.xlu0 %66
  %v68 = vsel %vm26, %v57, 0.0
  %69 = vadd.xlane.f32.xlu0 %v68
  %v70 = vpop.xlane.xlu0 %69
  %v71 = vsel %vm39, %v58, 0.0
  %72 = vadd.xlane.f32.xlu0 %v71
  %v73 = vpop.xlane.xlu0 %72
  %v74 = vmul.f32 %v61, %v43
  %v75 = vmul.f32 %v64, %v43
  %v76 = vmul.f32 %v67, %v43
  %v77 = vmul.f32 %v70, %v43
  %v78 = vmul.f32 %v73, %v43
  %v79 = vadd.f32 %v74, 1e-05
  %v80 = vadd.f32 %v75, 1e-05
  %v81 = vadd.f32 %v76, 1e-05
  %v82 = vadd.f32 %v77, 1e-05
  %v83 = vadd.f32 %v78, 1e-05
  %v84 = vrsqrt.pop %v79
  %v85 = vrsqrt.pop %v80
  %v86 = vrsqrt.pop %v81
  %v87 = vrsqrt.pop %v82
  %v88 = vrsqrt.pop %v83
  %v89 = vmul.f32 %v49, %v84
  %v90 = vmul.f32 %v50, %v85
  %v91 = vmul.f32 %v51, %v86
  %v92 = vmul.f32 %v52, %v87
  %v93 = vmul.f32 %v53, %v88
  %v94 = vld [vmem:[%s1] sm:$0x1]
  %v96 = vlaneseq
  %v97 = vshrl.u32 %v96, 7
  %v98 = vsub.s32 0, %v97
  %v99 = vrot.slane %v94, %v98
  %v101 = vmul.f32 %v89, %v99
  %v102 = vmul.f32 %v90, %v99
  %v103 = vmul.f32 %v91, %v99
  %v104 = vmul.f32 %v92, %v99
  %v105 = vmul.f32 %v93, %v99
  %v106 = vld [vmem:[%s2] sm:$0x1]
  %v108 = vlaneseq
  %v109 = vshrl.u32 %v108, 7
  %v110 = vsub.s32 0, %v109
  %v111 = vrot.slane %v106, %v110
  %v113 = vadd.f32 %v101, %v111
  %v114 = vadd.f32 %v102, %v111
  %v115 = vadd.f32 %v103, %v111
  %v116 = vadd.f32 %v104, %v111
  %v117 = vadd.f32 %v105, %v111
  %p118 = scmp.eq.s32.totalorder 0, 0
  // Predicated region
  $region22: #{vit_context_forward.25} parent=0 // pred_check
    %p119 = pneg %p118
  $region23: #{vit_context_forward.25} parent=0 // pred_check_branch
    %121 = sbr.rel (%p119) target = $region25
  $region24: #{vit_context_forward.25} parent=0 // pred_region
    %v122 = vld [vmem:[%s4] sm:$0x1]
    %v124 = vlaneseq
    %v125 = vshrl.u32 %v124, 7
    %v126 = vsub.s32 0, %v125
    %v127 = vrot.slane %v122, %v126
    %vm129 = vcmask 785408
    %130 = vst.msk [vmem:[#allocation2] sm:$0xff] %vm129, %v127
    %131 = vst.msk [vmem:[#allocation2 + $0x8] sm:$0xff] %vm129, %v127
    %132 = vst.msk [vmem:[#allocation2 + $0x10] sm:$0xff] %vm129, %v127
    %133 = vst.msk [vmem:[#allocation2 + $0x18] sm:$0xff] %vm129, %v127
    %vm134 = vcmask 779264
    %135 = vst.msk [vmem:[#allocation2 + $0x20] sm:$0x3] %vm134, %v127
  $region25: #{vit_context_forward.25} parent=0 // pred_fallthru
    _
  %v136 = vld [vmem:[#allocation2] sm:$0xff]
  %v137 = vld [vmem:[#allocation2 + $0x8] sm:$0xff]
  %v138 = vld [vmem:[#allocation2 + $0x10] sm:$0xff]
  %v139 = vld [vmem:[#allocation2 + $0x18] sm:$0xff]
  %v140 = vld [vmem:[#allocation2 + $0x20] sm:$0x3]
  %v141 = vpack.c.bf16 %v114, %v113
  %v142 = vpack.c.bf16 %v116, %v115
  %v143 = vpack.c.bf16 %v117, %v117
  %v144 = vld [vmem:[%s3] sm:$0xf]
  %v145 = vld [vmem:[%s3 + $0x4] sm:$0xf]
  %v146 = vld [vmem:[%s3 + $0x8] sm:$0xf]
  %v147 = vld [vmem:[%s3 + $0xc] sm:$0xf]
  %v152 = vunpack.c.l.b16 %v144
  %v153 = vunpack.c.l.b16 %v145
  %v154 = vunpack.c.l.b16 %v146
  %v155 = vunpack.c.l.b16 %v147
  %v156 = vpack.c.b16 %v153, %v152
  %v157 = vpack.c.b16 %v155, %v154
  %v161 = vsel %vm26, %v141, 0
  %v164 = vsel %vm26, %v142, 0
  %v167 = vsel %vm26, %v143, 0
  %169 = vmatprep.subr.bf16.mxu0 0
  %170 = vmatpush1.bf16.msra.mxu0 %v156
  %171 = vmatprep.subr.bf16.mxu0 0
  %172 = vmatpush1.bf16.msra.mxu0 %v157
  %173 = vmatprep.subr.bf16.mxu0 0
  %174 = vmatpush1.bf16.msra.mxu0 0
  %175 = vmatprep.subr.bf16.mxu0 0
  %176 = vmatpush1.bf16.msra.mxu0 0
  %177 = vmatprep.subr.bf16.mxu0 0
  %178 = vmatpush1.bf16.msra.mxu0 0
  %179 = vmatprep.subr.bf16.mxu0 0
  %180 = vmatpush1.bf16.msra.mxu0 0
  %181 = vmatprep.subr.bf16.mxu0 0
  %182 = vmatpush1.bf16.msra.mxu0 0
  %183 = vmatprep.subr.bf16.mxu0 0
  %184 = vmatpush1.bf16.msra.mxu0 0
  %185 = vmatprep.subr.bf16.mxu0 0
  %186 = vmatpush1.bf16.msra.mxu0 0
  %187 = vmatprep.subr.bf16.mxu0 0
  %188 = vmatpush1.bf16.msra.mxu0 0
  %189 = vmatprep.subr.bf16.mxu0 0
  %190 = vmatpush1.bf16.msra.mxu0 0
  %191 = vmatprep.subr.bf16.mxu0 0
  %192 = vmatpush1.bf16.msra.mxu0 0
  %193 = vmatprep.subr.bf16.mxu0 0
  %194 = vmatpush1.bf16.msra.mxu0 0
  %195 = vmatprep.subr.bf16.mxu0 0
  %196 = vmatpush1.bf16.msra.mxu0 0
  %197 = vmatprep.subr.bf16.mxu0 0
  %198 = vmatpush1.bf16.msra.mxu0 0
  %199 = vmatprep.subr.bf16.mxu0 0
  %200 = vmatpush1.bf16.msra.mxu0 0
  %201 = vmatprep.mubr.bf16.mxu0 0
  %202 = vmatmul.mubr.bf16.gmra.mrb[0].mxu0 %v161
  %v203 = vpop.f32.mrb[0].mxu0
  %v204 = vadd.f32 0.0, %v203
  %v205 = vpop.f32.mrb[0].mxu0
  %v206 = vpop.f32.mrb[0].mxu0
  %v207 = vadd.f32 0.0, %v206
  %v208 = vpop.f32.mrb[0].mxu0
  %209 = vmatprep.mubr.bf16.mxu0 0
  %210 = vmatmul.mubr.bf16.gmra.mrb[0].mxu0 %v164
  %v211 = vpop.f32.mrb[0].mxu0
  %v212 = vadd.f32 0.0, %v211
  %v213 = vpop.f32.mrb[0].mxu0
  %v214 = vpop.f32.mrb[0].mxu0
  %v215 = vadd.f32 0.0, %v214
  %v216 = vpop.f32.mrb[0].mxu0
  %217 = vmatprep.mubr.bf16.mxu0 0
  %218 = vmatmul.mubr.bf16.gmra.mrb[0].mxu0 %v167
  %v219 = vpop.f32.mrb[0].mxu0
  %v220 = vadd.f32 0.0, %v219
  %v221 = vpop.f32.mrb[0].mxu0
  %v222 = vpop.f32.mrb[0].mxu0
  %v223 = vpop.f32.mrb[0].mxu0
  %224 = vdwg.mxu0
  %v225 = vadd.f32 %v136, %v204
  %v226 = vadd.f32 %v137, %v207
  %v227 = vadd.f32 %v138, %v212
  %v228 = vadd.f32 %v139, %v215
  %v229 = vadd.f32 %v140, %v220
  %vm230 = vcmask 785408
  %231 = vst.msk [vmem:[#allocation2] sm:$0xff] %vm230, %v225
  %232 = vst.msk [vmem:[#allocation2 + $0x8] sm:$0xff] %vm230, %v226
  %233 = vst.msk [vmem:[#allocation2 + $0x10] sm:$0xff] %vm230, %v227
  %234 = vst.msk [vmem:[#allocation2 + $0x18] sm:$0xff] %vm230, %v228
  %vm235 = vcmask 779264
  %236 = vst.msk [vmem:[#allocation2 + $0x20] sm:$0x3] %vm235, %v229
  // Predicated region
  $region26: #{vit_context_forward.25} parent=0 // pred_check
    %p237 = pneg %p118
  $region27: #{vit_context_forward.25} parent=0 // pred_check_branch
    %239 = sbr.rel (%p237) target = $region29
  $region28: #{vit_context_forward.25} parent=0 // pred_region
    %v240 = vld [vmem:[#allocation2] sm:$0xff]
    %v241 = vld [vmem:[#allocation2 + $0x8] sm:$0xff]
    %v242 = vld [vmem:[#allocation2 + $0x10] sm:$0xff]
    %v243 = vld [vmem:[#allocation2 + $0x18] sm:$0xff]
    %v244 = vld [vmem:[#allocation2 + $0x20] sm:$0x3]
    %245 = vst.msk [vmem:[%s5] sm:$0xff] %vm230, %v240
    %246 = vst.msk [vmem:[%s5 + $0x8] sm:$0xff] %vm230, %v241
    %247 = vst.msk [vmem:[%s5 + $0x10] sm:$0xff] %vm230, %v242
    %248 = vst.msk [vmem:[%s5 + $0x18] sm:$0xff] %vm230, %v243
    %249 = vst.msk [vmem:[%s5 + $0x20] sm:$0x3] %vm235, %v244
  $region29: #{vit_context_forward.25} parent=0 // pred_fallthru
    _
  // Predicated region
  $region30: #{vit_context_forward.25} parent=0 // pred_check
    _
  $region31: #{vit_context_forward.25} parent=0 // pred_check_branch
    %251 = sbr.rel (0) target = $region33
  $region32: #{vit_context_forward.25} parent=0 // pred_region
    _
  $region33: #{vit_context_forward.25} parent=0 // pred_fallthru
    _
  // Predicated region
  $region34: #{vit_context_forward.25} parent=0 // pred_check
    _
  $region35: #{vit_context_forward.25} parent=0 // pred_check_branch
    %253 = sbr.rel (0) target = $region37
  $region36: #{vit_context_forward.25} parent=0 // pred_region
    _
  $region37: #{vit_context_forward.25} parent=0 // pred_fallthru
    _

// kernel: vit_context_forward.28
$region0: #{vit_context_forward.28}
  #allocation0 [shape = 'u32[]', space=smem, size = 0x4, offset = 0x4, fixed_abs, tag = 'smem constant byte address 0x4 - core index']
  #allocation1 [shape = 'u32[144,128]{1,0:T(1,128)}', space=vmem, size = 0x12000, scoped, tag = 'internal scratch']
  #allocation2 [shape = 'f32[34,128]{1,0:T(8,128)}', space=vmem, size = 0x5000, scoped, tag = 'scratch operand']
  %s0 = inlined_call_operand.vmem [shape: f32[34,32], index: 0, kind: input, shape index: {}]
  %s1 = inlined_call_operand.vmem [shape: f32[1,32], index: 1, kind: input, shape index: {}]
  %s2 = inlined_call_operand.vmem [shape: f32[1,32], index: 2, kind: input, shape index: {}]
  %s3 = inlined_call_operand.vmem [shape: bf16[32,128], index: 3, kind: input, shape index: {}]
  %s4 = inlined_call_operand.vmem [shape: f32[1,128], index: 4, kind: input, shape index: {}]
  %s5 = inlined_call_operand.vmem [shape: f32[34,128], index: 5, kind: output, shape index: {}]
  %s6 = sld [smem:[#allocation0]]
  $region38: #{vit_context_forward.28} parent=0
    _
  %s8 = ssub.s32 1, %s6
  %s9 = scalar_select 0, %s8, %s6
  // Predicated region
  $region2: #{vit_context_forward.28} parent=0 // pred_check
    _
  $region3: #{vit_context_forward.28} parent=0 // pred_check_branch
    %11 = sbr.rel (0) target = $region5
  $region4: #{vit_context_forward.28} parent=0 // pred_region
    _
  $region5: #{vit_context_forward.28} parent=0 // pred_fallthru
    _
  // Predicated region
  $region6: #{vit_context_forward.28} parent=0 // pred_check
    _
  $region7: #{vit_context_forward.28} parent=0 // pred_check_branch
    %13 = sbr.rel (0) target = $region9
  $region8: #{vit_context_forward.28} parent=0 // pred_region
    _
  $region9: #{vit_context_forward.28} parent=0 // pred_fallthru
    _
  // Predicated region
  $region10: #{vit_context_forward.28} parent=0 // pred_check
    _
  $region11: #{vit_context_forward.28} parent=0 // pred_check_branch
    %15 = sbr.rel (0) target = $region13
  $region12: #{vit_context_forward.28} parent=0 // pred_region
    _
  $region13: #{vit_context_forward.28} parent=0 // pred_fallthru
    _
  // Predicated region
  $region14: #{vit_context_forward.28} parent=0 // pred_check
    _
  $region15: #{vit_context_forward.28} parent=0 // pred_check_branch
    %17 = sbr.rel (0) target = $region17
  $region16: #{vit_context_forward.28} parent=0 // pred_region
    _
  $region17: #{vit_context_forward.28} parent=0 // pred_fallthru
    _
  // Predicated region
  $region18: #{vit_context_forward.28} parent=0 // pred_check
    _
  $region19: #{vit_context_forward.28} parent=0 // pred_check_branch
    %19 = sbr.rel (0) target = $region21
  $region20: #{vit_context_forward.28} parent=0 // pred_region
    _
  $region21: #{vit_context_forward.28} parent=0 // pred_fallthru
    _
  %v21 = vld [vmem:[%s0] sm:$0xff]
  %v22 = vld [vmem:[%s0 + $0x8] sm:$0xff]
  %v23 = vld [vmem:[%s0 + $0x10] sm:$0xff]
  %v24 = vld [vmem:[%s0 + $0x18] sm:$0xff]
  %v25 = vld [vmem:[%s0 + $0x20] sm:$0x3]
  %vm26 = vcmask 261120
  %v27 = vsel %vm26, %v21, 0.0
  %28 = vadd.xlane.f32.xlu0 %v27
  %v29 = vpop.xlane.xlu0 %28
  %v30 = vsel %vm26, %v22, 0.0
  %31 = vadd.xlane.f32.xlu0 %v30
  %v32 = vpop.xlane.xlu0 %31
  %v33 = vsel %vm26, %v23, 0.0
  %34 = vadd.xlane.f32.xlu0 %v33
  %v35 = vpop.xlane.xlu0 %34
  %v36 = vsel %vm26, %v24, 0.0
  %37 = vadd.xlane.f32.xlu0 %v36
  %v38 = vpop.xlane.xlu0 %37
  %vm39 = vcmask 254976
  %v40 = vsel %vm39, %v25, 0.0
  %41 = vadd.xlane.f32.xlu0 %v40
  %v42 = vpop.xlane.xlu0 %41
  %v43 = vrcp.pop 32.0
  %v44 = vmul.f32 %v29, %v43
  %v45 = vmul.f32 %v32, %v43
  %v46 = vmul.f32 %v35, %v43
  %v47 = vmul.f32 %v38, %v43
  %v48 = vmul.f32 %v42, %v43
  %v49 = vsub.f32 %v21, %v44
  %v50 = vsub.f32 %v22, %v45
  %v51 = vsub.f32 %v23, %v46
  %v52 = vsub.f32 %v24, %v47
  %v53 = vsub.f32 %v25, %v48
  %v54 = vmul.f32 %v49, %v49
  %v55 = vmul.f32 %v50, %v50
  %v56 = vmul.f32 %v51, %v51
  %v57 = vmul.f32 %v52, %v52
  %v58 = vmul.f32 %v53, %v53
  %v59 = vsel %vm26, %v54, 0.0
  %60 = vadd.xlane.f32.xlu0 %v59
  %v61 = vpop.xlane.xlu0 %60
  %v62 = vsel %vm26, %v55, 0.0
  %63 = vadd.xlane.f32.xlu0 %v62
  %v64 = vpop.xlane.xlu0 %63
  %v65 = vsel %vm26, %v56, 0.0
  %66 = vadd.xlane.f32.xlu0 %v65
  %v67 = vpop.xlane.xlu0 %66
  %v68 = vsel %vm26, %v57, 0.0
  %69 = vadd.xlane.f32.xlu0 %v68
  %v70 = vpop.xlane.xlu0 %69
  %v71 = vsel %vm39, %v58, 0.0
  %72 = vadd.xlane.f32.xlu0 %v71
  %v73 = vpop.xlane.xlu0 %72
  %v74 = vmul.f32 %v61, %v43
  %v75 = vmul.f32 %v64, %v43
  %v76 = vmul.f32 %v67, %v43
  %v77 = vmul.f32 %v70, %v43
  %v78 = vmul.f32 %v73, %v43
  %v79 = vadd.f32 %v74, 1e-05
  %v80 = vadd.f32 %v75, 1e-05
  %v81 = vadd.f32 %v76, 1e-05
  %v82 = vadd.f32 %v77, 1e-05
  %v83 = vadd.f32 %v78, 1e-05
  %v84 = vrsqrt.pop %v79
  %v85 = vrsqrt.pop %v80
  %v86 = vrsqrt.pop %v81
  %v87 = vrsqrt.pop %v82
  %v88 = vrsqrt.pop %v83
  %v89 = vmul.f32 %v49, %v84
  %v90 = vmul.f32 %v50, %v85
  %v91 = vmul.f32 %v51, %v86
  %v92 = vmul.f32 %v52, %v87
  %v93 = vmul.f32 %v53, %v88
  %v94 = vld [vmem:[%s1] sm:$0x1]
  %v96 = vlaneseq
  %v97 = vshrl.u32 %v96, 7
  %v98 = vsub.s32 0, %v97
  %v99 = vrot.slane %v94, %v98
  %v101 = vmul.f32 %v89, %v99
  %v102 = vmul.f32 %v90, %v99
  %v103 = vmul.f32 %v91, %v99
  %v104 = vmul.f32 %v92, %v99
  %v105 = vmul.f32 %v93, %v99
  %v106 = vld [vmem:[%s2] sm:$0x1]
  %v108 = vlaneseq
  %v109 = vshrl.u32 %v108, 7
  %v110 = vsub.s32 0, %v109
  %v111 = vrot.slane %v106, %v110
  %v113 = vadd.f32 %v101, %v111
  %v114 = vadd.f32 %v102, %v111
  %v115 = vadd.f32 %v103, %v111
  %v116 = vadd.f32 %v104, %v111
  %v117 = vadd.f32 %v105, %v111
  %p118 = scmp.eq.s32.totalorder 0, 0
  // Predicated region
  $region22: #{vit_context_forward.28} parent=0 // pred_check
    %p119 = pneg %p118
  $region23: #{vit_context_forward.28} parent=0 // pred_check_branch
    %121 = sbr.rel (%p119) target = $region25
  $region24: #{vit_context_forward.28} parent=0 // pred_region
    %v122 = vld [vmem:[%s4] sm:$0x1]
    %v124 = vlaneseq
    %v125 = vshrl.u32 %v124, 7
    %v126 = vsub.s32 0, %v125
    %v127 = vrot.slane %v122, %v126
    %129 = vst [vmem:[#allocation2] sm:$0xff] %v127
    %130 = vst [vmem:[#allocation2 + $0x8] sm:$0xff] %v127
    %131 = vst [vmem:[#allocation2 + $0x10] sm:$0xff] %v127
    %132 = vst [vmem:[#allocation2 + $0x18] sm:$0xff] %v127
    %133 = vst [vmem:[#allocation2 + $0x20] sm:$0x3] %v127
  $region25: #{vit_context_forward.28} parent=0 // pred_fallthru
    _
  %v134 = vld [vmem:[#allocation2] sm:$0xff]
  %v135 = vld [vmem:[#allocation2 + $0x8] sm:$0xff]
  %v136 = vld [vmem:[#allocation2 + $0x10] sm:$0xff]
  %v137 = vld [vmem:[#allocation2 + $0x18] sm:$0xff]
  %v138 = vld [vmem:[#allocation2 + $0x20] sm:$0x3]
  %v139 = vpack.c.bf16 %v114, %v113
  %v140 = vpack.c.bf16 %v116, %v115
  %v141 = vpack.c.bf16 %v117, %v117
  %v142 = vld [vmem:[%s3] sm:$0xf]
  %v143 = vld [vmem:[%s3 + $0x4] sm:$0xf]
  %v144 = vld [vmem:[%s3 + $0x8] sm:$0xf]
  %v145 = vld [vmem:[%s3 + $0xc] sm:$0xf]
  %v150 = vunpack.c.l.b16 %v142
  %v151 = vunpack.c.l.b16 %v143
  %v152 = vunpack.c.l.b16 %v144
  %v153 = vunpack.c.l.b16 %v145
  %v154 = vpack.c.b16 %v151, %v150
  %v155 = vpack.c.b16 %v153, %v152
  %v159 = vsel %vm26, %v139, 0
  %v162 = vsel %vm26, %v140, 0
  %v165 = vsel %vm26, %v141, 0
  %167 = vmatprep.subr.bf16.mxu0 0
  %168 = vmatpush1.bf16.msra.mxu0 %v154
  %169 = vmatprep.subr.bf16.mxu0 0
  %170 = vmatpush1.bf16.msra.mxu0 %v155
  %171 = vmatprep.subr.bf16.mxu0 0
  %172 = vmatpush1.bf16.msra.mxu0 0
  %173 = vmatprep.subr.bf16.mxu0 0
  %174 = vmatpush1.bf16.msra.mxu0 0
  %175 = vmatprep.subr.bf16.mxu0 0
  %176 = vmatpush1.bf16.msra.mxu0 0
  %177 = vmatprep.subr.bf16.mxu0 0
  %178 = vmatpush1.bf16.msra.mxu0 0
  %179 = vmatprep.subr.bf16.mxu0 0
  %180 = vmatpush1.bf16.msra.mxu0 0
  %181 = vmatprep.subr.bf16.mxu0 0
  %182 = vmatpush1.bf16.msra.mxu0 0
  %183 = vmatprep.subr.bf16.mxu0 0
  %184 = vmatpush1.bf16.msra.mxu0 0
  %185 = vmatprep.subr.bf16.mxu0 0
  %186 = vmatpush1.bf16.msra.mxu0 0
  %187 = vmatprep.subr.bf16.mxu0 0
  %188 = vmatpush1.bf16.msra.mxu0 0
  %189 = vmatprep.subr.bf16.mxu0 0
  %190 = vmatpush1.bf16.msra.mxu0 0
  %191 = vmatprep.subr.bf16.mxu0 0
  %192 = vmatpush1.bf16.msra.mxu0 0
  %193 = vmatprep.subr.bf16.mxu0 0
  %194 = vmatpush1.bf16.msra.mxu0 0
  %195 = vmatprep.subr.bf16.mxu0 0
  %196 = vmatpush1.bf16.msra.mxu0 0
  %197 = vmatprep.subr.bf16.mxu0 0
  %198 = vmatpush1.bf16.msra.mxu0 0
  %199 = vmatprep.mubr.bf16.mxu0 0
  %200 = vmatmul.mubr.bf16.gmra.mrb[0].mxu0 %v159
  %v201 = vpop.f32.mrb[0].mxu0
  %v202 = vadd.f32 0.0, %v201
  %v203 = vpop.f32.mrb[0].mxu0
  %v204 = vpop.f32.mrb[0].mxu0
  %v205 = vadd.f32 0.0, %v204
  %v206 = vpop.f32.mrb[0].mxu0
  %207 = vmatprep.mubr.bf16.mxu0 0
  %208 = vmatmul.mubr.bf16.gmra.mrb[0].mxu0 %v162
  %v209 = vpop.f32.mrb[0].mxu0
  %v210 = vadd.f32 0.0, %v209
  %v211 = vpop.f32.mrb[0].mxu0
  %v212 = vpop.f32.mrb[0].mxu0
  %v213 = vadd.f32 0.0, %v212
  %v214 = vpop.f32.mrb[0].mxu0
  %215 = vmatprep.mubr.bf16.mxu0 0
  %216 = vmatmul.mubr.bf16.gmra.mrb[0].mxu0 %v165
  %v217 = vpop.f32.mrb[0].mxu0
  %v218 = vadd.f32 0.0, %v217
  %v219 = vpop.f32.mrb[0].mxu0
  %v220 = vpop.f32.mrb[0].mxu0
  %v221 = vpop.f32.mrb[0].mxu0
  %222 = vdwg.mxu0
  %v223 = vadd.f32 %v134, %v202
  %v224 = vadd.f32 %v135, %v205
  %v225 = vadd.f32 %v136, %v210
  %v226 = vadd.f32 %v137, %v213
  %v227 = vadd.f32 %v138, %v218
  %228 = vst [vmem:[#allocation2] sm:$0xff] %v223
  %229 = vst [vmem:[#allocation2 + $0x8] sm:$0xff] %v224
  %230 = vst [vmem:[#allocation2 + $0x10] sm:$0xff] %v225
  %231 = vst [vmem:[#allocation2 + $0x18] sm:$0xff] %v226
  %232 = vst [vmem:[#allocation2 + $0x20] sm:$0x3] %v227
  // Predicated region
  $region26: #{vit_context_forward.28} parent=0 // pred_check
    %p233 = pneg %p118
  $region27: #{vit_context_forward.28} parent=0 // pred_check_branch
    %235 = sbr.rel (%p233) target = $region29
  $region28: #{vit_context_forward.28} parent=0 // pred_region
    %v236 = vld [vmem:[#allocation2] sm:$0xff]
    %v237 = vld [vmem:[#allocation2 + $0x8] sm:$0xff]
    %v238 = vld [vmem:[#allocation2 + $0x10] sm:$0xff]
    %v239 = vld [vmem:[#allocation2 + $0x18] sm:$0xff]
    %v240 = vld [vmem:[#allocation2 + $0x20] sm:$0x3]
    %v241 = vmul.f32 %v236, 0.5
    %v242 = vmul.f32 %v237, 0.5
    %v243 = vmul.f32 %v238, 0.5
    %v244 = vmul.f32 %v239, 0.5
    %v245 = vmul.f32 %v240, 0.5
    %v246 = vmul.f32 %v236, 0.70710677
    %v247 = vmul.f32 %v237, 0.70710677
    %v248 = vmul.f32 %v238, 0.70710677
    %v249 = vmul.f32 %v239, 0.70710677
    %v250 = vmul.f32 %v240, 0.70710677
    %vm251 = vcmp.ge.f32.partialorder %v246, 0.0
    %vm252 = vcmp.ge.f32.partialorder %v247, 0.0
    %vm253 = vcmp.ge.f32.partialorder %v248, 0.0
    %vm254 = vcmp.ge.f32.partialorder %v249, 0.0
    %vm255 = vcmp.ge.f32.partialorder %v250, 0.0
    %v256 = vsel %vm251, 1.0, -1.0
    %v257 = vsel %vm252, 1.0, -1.0
    %v258 = vsel %vm253, 1.0, -1.0
    %v259 = vsel %vm254, 1.0, -1.0
    %v260 = vsel %vm255, 1.0, -1.0
    %v261 = vand.u32 2147483647, %v246
    %v262 = vand.u32 2147483647, %v247
    %v263 = vand.u32 2147483647, %v248
    %v264 = vand.u32 2147483647, %v249
    %v265 = vand.u32 2147483647, %v250
    %v266 = vmul.f32 %v261, 0.3275911
    %v267 = vmul.f32 %v262, 0.3275911
    %v268 = vmul.f32 %v263, 0.3275911
    %v269 = vmul.f32 %v264, 0.3275911
    %v270 = vmul.f32 %v265, 0.3275911
    %v271 = vadd.f32 %v266, 1.0
    %v272 = vadd.f32 %v267, 1.0
    %v273 = vadd.f32 %v268, 1.0
    %v274 = vadd.f32 %v269, 1.0
    %v275 = vadd.f32 %v270, 1.0
    %v276 = vrcp.pop %v271
    %v277 = vmul.f32 1.0, %v276
    %v278 = vrcp.pop %v272
    %v279 = vmul.f32 1.0, %v278
    %v280 = vrcp.pop %v273
    %v281 = vmul.f32 1.0, %v280
    %v282 = vrcp.pop %v274
    %v283 = vmul.f32 1.0, %v282
    %v284 = vrcp.pop %v275
    %v285 = vmul.f32 1.0, %v284
    %v286 = vmul.f32 %v277, 1.0614054
    %v287 = vmul.f32 %v279, 1.0614054
    %v288 = vmul.f32 %v281, 1.0614054
    %v289 = vmul.f32 %v283, 1.0614054
    %v290 = vmul.f32 %v285, 1.0614054
    %v291 = vadd.f32 %v286, -1.4531521
    %v292 = vadd.f32 %v287, -1.4531521
    %v293 = vadd.f32 %v288, -1.4531521
    %v294 = vadd.f32 %v289, -1.4531521
    %v295 = vadd.f32 %v290, -1.4531521
    %v296 = vmul.f32 %v291, %v277
    %v297 = vmul.f32 %v292, %v279
    %v298 = vmul.f32 %v293, %v281
    %v299 = vmul.f32 %v294, %v283
    %v300 = vmul.f32 %v295, %v285
    %v301 = vadd.f32 %v296, 1.4214138
    %v302 = vadd.f32 %v297, 1.4214138
    %v303 = vadd.f32 %v298, 1.4214138
    %v304 = vadd.f32 %v299, 1.4214138
    %v305 = vadd.f32 %v300, 1.4214138
    %v306 = vmul.f32 %v301, %v277
    %v307 = vmul.f32 %v302, %v279
    %v308 = vmul.f32 %v303, %v281
    %v309 = vmul.f32 %v304, %v283
    %v310 = vmul.f32 %v305, %v285
    %v311 = vadd.f32 %v306, -0.28449672
    %v312 = vadd.f32 %v307, -0.28449672
    %v313 = vadd.f32 %v308, -0.28449672
    %v314 = vadd.f32 %v309, -0.28449672
    %v315 = vadd.f32 %v310, -0.28449672
    %v316 = vmul.f32 %v311, %v277
    %v317 = vmul.f32 %v312, %v279
    %v318 = vmul.f32 %v313, %v281
    %v319 = vmul.f32 %v314, %v283
    %v320 = vmul.f32 %v315, %v285
    %v321 = vadd.f32 %v316, 0.2548296
    %v322 = vadd.f32 %v317, 0.2548296
    %v323 = vadd.f32 %v318, 0.2548296
    %v324 = vadd.f32 %v319, 0.2548296
    %v325 = vadd.f32 %v320, 0.2548296
    %v326 = vmul.f32 %v321, %v277
    %v327 = vmul.f32 %v322, %v279
    %v328 = vmul.f32 %v323, %v281
    %v329 = vmul.f32 %v324, %v283
    %v330 = vmul.f32 %v325, %v285
    %v331 = vsub.f32 0.0, %v261
    %v332 = vsub.f32 0.0, %v262
    %v333 = vsub.f32 0.0, %v263
    %v334 = vsub.f32 0.0, %v264
    %v335 = vsub.f32 0.0, %v265
    %v336 = vmul.f32 %v331, %v261
    %v337 = vmul.f32 %v332, %v262
    %v338 = vmul.f32 %v333, %v263
    %v339 = vmul.f32 %v334, %v264
    %v340 = vmul.f32 %v335, %v265
    %v341 = vmul.f32 %v336, 1.442695
    %v342 = vpow.pop %v341
    %v343 = vmul.f32 %v337, 1.442695
    %v344 = vpow.pop %v343
    %v345 = vmul.f32 %v338, 1.442695
    %v346 = vpow.pop %v345
    %v347 = vmul.f32 %v339, 1.442695
    %v348 = vpow.pop %v347
    %v349 = vmul.f32 %v340, 1.442695
    %v350 = vpow.pop %v349
    %v351 = vmul.f32 %v326, %v342
    %v352 = vmul.f32 %v327, %v344
    %v353 = vmul.f32 %v328, %v346
    %v354 = vmul.f32 %v329, %v348
    %v355 = vmul.f32 %v330, %v350
    %v356 = vsub.f32 1.0, %v351
    %v357 = vsub.f32 1.0, %v352
    %v358 = vsub.f32 1.0, %v353
    %v359 = vsub.f32 1.0, %v354
    %v360 = vsub.f32 1.0, %v355
    %v361 = vmul.f32 %v256, %v356
    %v362 = vmul.f32 %v257, %v357
    %v363 = vmul.f32 %v258, %v358
    %v364 = vmul.f32 %v259, %v359
    %v365 = vmul.f32 %v260, %v360
    %v366 = vadd.f32 %v361, 1.0
    %v367 = vadd.f32 %v362, 1.0
    %v368 = vadd.f32 %v363, 1.0
    %v369 = vadd.f32 %v364, 1.0
    %v370 = vadd.f32 %v365, 1.0
    %v371 = vmul.f32 %v241, %v366
    %v372 = vmul.f32 %v242, %v367
    %v373 = vmul.f32 %v243, %v368
    %v374 = vmul.f32 %v244, %v369
    %v375 = vmul.f32 %v245, %v370
    %376 = vst [vmem:[%s5] sm:$0xff] %v371
    %377 = vst [vmem:[%s5 + $0x8] sm:$0xff] %v372
    %378 = vst [vmem:[%s5 + $0x10] sm:$0xff] %v373
    %379 = vst [vmem:[%s5 + $0x18] sm:$0xff] %v374
    %380 = vst [vmem:[%s5 + $0x20] sm:$0x3] %v375
  $region29: #{vit_context_forward.28} parent=0 // pred_fallthru
    _
  // Predicated region
  $region30: #{vit_context_forward.28} parent=0 // pred_check
    _
  $region31: #{vit_context_forward.28} parent=0 // pred_check_branch
    %382 = sbr.rel (0) target = $region33
  $region32: #{vit_context_forward.28} parent=0 // pred_region
    _
  $region33: #{vit_context_forward.28} parent=0 // pred_fallthru
    _
  // Predicated region
  $region34: #{vit_context_forward.28} parent=0 // pred_check
    _
  $region35: #{vit_context_forward.28} parent=0 // pred_check_branch
    %384 = sbr.rel (0) target = $region37
  $region36: #{vit_context_forward.28} parent=0 // pred_region
    _
  $region37: #{vit_context_forward.28} parent=0 // pred_fallthru
    _

// kernel: vit_context_forward.29
$region0: #{vit_context_forward.29}
  #allocation0 [shape = 'u32[]', space=smem, size = 0x4, offset = 0x4, fixed_abs, tag = 'smem constant byte address 0x4 - core index']
  #allocation1 [shape = 'u32[144,128]{1,0:T(1,128)}', space=vmem, size = 0x12000, scoped, tag = 'internal scratch']
  #allocation2 [shape = 'f32[34,32]{1,0:T(8,128)}', space=vmem, size = 0x5000, scoped, tag = 'scratch operand']
  %s0 = inlined_call_operand.vmem [shape: f32[34,128], index: 0, kind: input, shape index: {}]
  %s1 = inlined_call_operand.vmem [shape: bf16[128,32], index: 1, kind: input, shape index: {}]
  %s2 = inlined_call_operand.vmem [shape: f32[1,32], index: 2, kind: input, shape index: {}]
  %s3 = inlined_call_operand.vmem [shape: f32[34,32], index: 3, kind: input, shape index: {}]
  %s4 = inlined_call_operand.vmem [shape: f32[34,32], index: 4, kind: output, shape index: {}]
  %s5 = sld [smem:[#allocation0]]
  $region34: #{vit_context_forward.29} parent=0
    _
  %s7 = ssub.s32 1, %s5
  %s8 = scalar_select 0, %s7, %s5
  // Predicated region
  $region2: #{vit_context_forward.29} parent=0 // pred_check
    _
  $region3: #{vit_context_forward.29} parent=0 // pred_check_branch
    %10 = sbr.rel (0) target = $region5
  $region4: #{vit_context_forward.29} parent=0 // pred_region
    _
  $region5: #{vit_context_forward.29} parent=0 // pred_fallthru
    _
  // Predicated region
  $region6: #{vit_context_forward.29} parent=0 // pred_check
    _
  $region7: #{vit_context_forward.29} parent=0 // pred_check_branch
    %12 = sbr.rel (0) target = $region9
  $region8: #{vit_context_forward.29} parent=0 // pred_region
    _
  $region9: #{vit_context_forward.29} parent=0 // pred_fallthru
    _
  // Predicated region
  $region10: #{vit_context_forward.29} parent=0 // pred_check
    _
  $region11: #{vit_context_forward.29} parent=0 // pred_check_branch
    %14 = sbr.rel (0) target = $region13
  $region12: #{vit_context_forward.29} parent=0 // pred_region
    _
  $region13: #{vit_context_forward.29} parent=0 // pred_fallthru
    _
  // Predicated region
  $region14: #{vit_context_forward.29} parent=0 // pred_check
    _
  $region15: #{vit_context_forward.29} parent=0 // pred_check_branch
    %16 = sbr.rel (0) target = $region17
  $region16: #{vit_context_forward.29} parent=0 // pred_region
    _
  $region17: #{vit_context_forward.29} parent=0 // pred_fallthru
    _
  %v18 = vld [vmem:[%s0] sm:$0xff]
  %v19 = vld [vmem:[%s0 + $0x8] sm:$0xff]
  %v20 = vld [vmem:[%s0 + $0x10] sm:$0xff]
  %v21 = vld [vmem:[%s0 + $0x18] sm:$0xff]
  %v22 = vld [vmem:[%s0 + $0x20] sm:$0x3]
  %p23 = scmp.eq.s32.totalorder 0, 0
  // Predicated region
  $region18: #{vit_context_forward.29} parent=0 // pred_check
    %p24 = pneg %p23
  $region19: #{vit_context_forward.29} parent=0 // pred_check_branch
    %26 = sbr.rel (%p24) target = $region21
  $region20: #{vit_context_forward.29} parent=0 // pred_region
    %v27 = vld [vmem:[%s2] sm:$0x1]
    %v29 = vlaneseq
    %v30 = vshrl.u32 %v29, 7
    %v31 = vsub.s32 0, %v30
    %v32 = vrot.slane %v27, %v31
    %vm34 = vcmask 261120
    %35 = vst.msk [vmem:[#allocation2] sm:$0xff] %vm34, %v32
    %36 = vst.msk [vmem:[#allocation2 + $0x8] sm:$0xff] %vm34, %v32
    %37 = vst.msk [vmem:[#allocation2 + $0x10] sm:$0xff] %vm34, %v32
    %38 = vst.msk [vmem:[#allocation2 + $0x18] sm:$0xff] %vm34, %v32
    %vm39 = vcmask 254976
    %40 = vst.msk [vmem:[#allocation2 + $0x20] sm:$0x3] %vm39, %v32
  $region21: #{vit_context_forward.29} parent=0 // pred_fallthru
    _
  %v41 = vld [vmem:[#allocation2] sm:$0xff]
  %v42 = vld [vmem:[#allocation2 + $0x8] sm:$0xff]
  %v43 = vld [vmem:[#allocation2 + $0x10] sm:$0xff]
  %v44 = vld [vmem:[#allocation2 + $0x18] sm:$0xff]
  %v45 = vld [vmem:[#allocation2 + $0x20] sm:$0x3]
  %v46 = vpack.c.bf16 %v19, %v18
  %v47 = vpack.c.bf16 %v21, %v20
  %v48 = vpack.c.bf16 %v22, %v22
  %v49 = vld [vmem:[%s1] sm:$0xf]
  %v50 = vld [vmem:[%s1 + $0x4] sm:$0xf]
  %v51 = vld [vmem:[%s1 + $0x8] sm:$0xf]
  %v52 = vld [vmem:[%s1 + $0xc] sm:$0xf]
  %v53 = vld [vmem:[%s1 + $0x10] sm:$0xf]
  %v54 = vld [vmem:[%s1 + $0x14] sm:$0xf]
  %v55 = vld [vmem:[%s1 + $0x18] sm:$0xf]
  %v56 = vld [vmem:[%s1 + $0x1c] sm:$0xf]
  %v57 = vld [vmem:[%s1 + $0x20] sm:$0xf]
  %v58 = vld [vmem:[%s1 + $0x24] sm:$0xf]
  %v59 = vld [vmem:[%s1 + $0x28] sm:$0xf]
  %v60 = vld [vmem:[%s1 + $0x2c] sm:$0xf]
  %v61 = vld [vmem:[%s1 + $0x30] sm:$0xf]
  %v62 = vld [vmem:[%s1 + $0x34] sm:$0xf]
  %v63 = vld [vmem:[%s1 + $0x38] sm:$0xf]
  %v64 = vld [vmem:[%s1 + $0x3c] sm:$0xf]
  %v81 = vunpack.c.l.b16 %v49
  %v82 = vunpack.c.l.b16 %v50
  %v83 = vunpack.c.l.b16 %v51
  %v84 = vunpack.c.l.b16 %v52
  %v85 = vunpack.c.l.b16 %v53
  %v86 = vunpack.c.l.b16 %v54
  %v87 = vunpack.c.l.b16 %v55
  %v88 = vunpack.c.l.b16 %v56
  %v89 = vunpack.c.l.b16 %v57
  %v90 = vunpack.c.l.b16 %v58
  %v91 = vunpack.c.l.b16 %v59
  %v92 = vunpack.c.l.b16 %v60
  %v93 = vunpack.c.l.b16 %v61
  %v94 = vunpack.c.l.b16 %v62
  %v95 = vunpack.c.l.b16 %v63
  %v96 = vunpack.c.l.b16 %v64
  %v97 = vpack.c.b16 %v82, %v81
  %v98 = vpack.c.b16 %v84, %v83
  %v99 = vpack.c.b16 %v86, %v85
  %v100 = vpack.c.b16 %v88, %v87
  %v101 = vpack.c.b16 %v90, %v89
  %v102 = vpack.c.b16 %v92, %v91
  %v103 = vpack.c.b16 %v94, %v93
  %v104 = vpack.c.b16 %v96, %v95
  %113 = vmatprep.subr.bf16.mxu0 0
  %114 = vmatpush1.bf16.msra.mxu0 %v97
  %115 = vmatprep.subr.bf16.mxu0 0
  %116 = vmatpush1.bf16.msra.mxu0 %v98
  %117 = vmatprep.subr.bf16.mxu0 0
  %118 = vmatpush1.bf16.msra.mxu0 %v99
  %119 = vmatprep.subr.bf16.mxu0 0
  %120 = vmatpush1.bf16.msra.mxu0 %v100
  %121 = vmatprep.subr.bf16.mxu0 0
  %122 = vmatpush1.bf16.msra.mxu0 %v101
  %123 = vmatprep.subr.bf16.mxu0 0
  %124 = vmatpush1.bf16.msra.mxu0 %v102
  %125 = vmatprep.subr.bf16.mxu0 0
  %126 = vmatpush1.bf16.msra.mxu0 %v103
  %127 = vmatprep.subr.bf16.mxu0 0
  %128 = vmatpush1.bf16.msra.mxu0 %v104
  %129 = vmatprep.subr.bf16.mxu0 0
  %130 = vmatpush1.bf16.msra.mxu0 0
  %131 = vmatprep.subr.bf16.mxu0 0
  %132 = vmatpush1.bf16.msra.mxu0 0
  %133 = vmatprep.subr.bf16.mxu0 0
  %134 = vmatpush1.bf16.msra.mxu0 0
  %135 = vmatprep.subr.bf16.mxu0 0
  %136 = vmatpush1.bf16.msra.mxu0 0
  %137 = vmatprep.subr.bf16.mxu0 0
  %138 = vmatpush1.bf16.msra.mxu0 0
  %139 = vmatprep.subr.bf16.mxu0 0
  %140 = vmatpush1.bf16.msra.mxu0 0
  %141 = vmatprep.subr.bf16.mxu0 0
  %142 = vmatpush1.bf16.msra.mxu0 0
  %143 = vmatprep.subr.bf16.mxu0 0
  %144 = vmatpush1.bf16.msra.mxu0 0
  %145 = vmatprep.mubr.bf16.mxu0 0
  %146 = vmatmul.mubr.bf16.gmra.mrb[0].mxu0 %v46
  %v147 = vpop.f32.mrb[0].mxu0
  %v148 = vadd.f32 0.0, %v147
  %v149 = vpop.f32.mrb[0].mxu0
  %v150 = vpop.f32.mrb[0].mxu0
  %v151 = vadd.f32 0.0, %v150
  %v152 = vpop.f32.mrb[0].mxu0
  %153 = vmatprep.mubr.bf16.mxu0 0
  %154 = vmatmul.mubr.bf16.gmra.mrb[0].mxu0 %v47
  %v155 = vpop.f32.mrb[0].mxu0
  %v156 = vadd.f32 0.0, %v155
  %v157 = vpop.f32.mrb[0].mxu0
  %v158 = vpop.f32.mrb[0].mxu0
  %v159 = vadd.f32 0.0, %v158
  %v160 = vpop.f32.mrb[0].mxu0
  %161 = vmatprep.mubr.bf16.mxu0 0
  %162 = vmatmul.mubr.bf16.gmra.mrb[0].mxu0 %v48
  %v163 = vpop.f32.mrb[0].mxu0
  %v164 = vadd.f32 0.0, %v163
  %v165 = vpop.f32.mrb[0].mxu0
  %v166 = vpop.f32.mrb[0].mxu0
  %v167 = vpop.f32.mrb[0].mxu0
  %168 = vdwg.mxu0
  %v169 = vadd.f32 %v41, %v148
  %v170 = vadd.f32 %v42, %v151
  %v171 = vadd.f32 %v43, %v156
  %v172 = vadd.f32 %v44, %v159
  %v173 = vadd.f32 %v45, %v164
  %vm174 = vcmask 261120
  %175 = vst.msk [vmem:[#allocation2] sm:$0xff] %vm174, %v169
  %176 = vst.msk [vmem:[#allocation2 + $0x8] sm:$0xff] %vm174, %v170
  %177 = vst.msk [vmem:[#allocation2 + $0x10] sm:$0xff] %vm174, %v171
  %178 = vst.msk [vmem:[#allocation2 + $0x18] sm:$0xff] %vm174, %v172
  %vm179 = vcmask 254976
  %180 = vst.msk [vmem:[#allocation2 + $0x20] sm:$0x3] %vm179, %v173
  // Predicated region
  $region22: #{vit_context_forward.29} parent=0 // pred_check
    %p181 = pneg %p23
  $region23: #{vit_context_forward.29} parent=0 // pred_check_branch
    %183 = sbr.rel (%p181) target = $region25
  $region24: #{vit_context_forward.29} parent=0 // pred_region
    %v184 = vld [vmem:[#allocation2] sm:$0xff]
    %v185 = vld [vmem:[#allocation2 + $0x8] sm:$0xff]
    %v186 = vld [vmem:[#allocation2 + $0x10] sm:$0xff]
    %v187 = vld [vmem:[#allocation2 + $0x18] sm:$0xff]
    %v188 = vld [vmem:[#allocation2 + $0x20] sm:$0x3]
    %v189 = vld [vmem:[%s3] sm:$0xff]
    %v190 = vld [vmem:[%s3 + $0x8] sm:$0xff]
    %v191 = vld [vmem:[%s3 + $0x10] sm:$0xff]
    %v192 = vld [vmem:[%s3 + $0x18] sm:$0xff]
    %v193 = vld [vmem:[%s3 + $0x20] sm:$0x3]
    %v194 = vadd.f32 %v184, %v189
    %v195 = vadd.f32 %v185, %v190
    %v196 = vadd.f32 %v186, %v191
    %v197 = vadd.f32 %v187, %v192
    %v198 = vadd.f32 %v188, %v193
    %199 = vst.msk [vmem:[%s4] sm:$0xff] %vm174, %v194
    %200 = vst.msk [vmem:[%s4 + $0x8] sm:$0xff] %vm174, %v195
    %201 = vst.msk [vmem:[%s4 + $0x10] sm:$0xff] %vm174, %v196
    %202 = vst.msk [vmem:[%s4 + $0x18] sm:$0xff] %vm174, %v197
    %203 = vst.msk [vmem:[%s4 + $0x20] sm:$0x3] %vm179, %v198
  $region25: #{vit_context_forward.29} parent=0 // pred_fallthru
    _
  // Predicated region
  $region26: #{vit_context_forward.29} parent=0 // pred_check
    _
  $region27: #{vit_context_forward.29} parent=0 // pred_check_branch
    %205 = sbr.rel (0) target = $region29
  $region28: #{vit_context_forward.29} parent=0 // pred_region
    _
  $region29: #{vit_context_forward.29} parent=0 // pred_fallthru
    _
  // Predicated region
  $region30: #{vit_context_forward.29} parent=0 // pred_check
    _
  $region31: #{vit_context_forward.29} parent=0 // pred_check_branch
    %207 = sbr.rel (0) target = $region33
  $region32: #{vit_context_forward.29} parent=0 // pred_region
    _
  $region33: #{vit_context_forward.29} parent=0 // pred_fallthru
    _

// kernel: vit_context_forward.26
$region0: #{vit_context_forward.26}
  #allocation0 [shape = 'u32[]', space=smem, size = 0x4, offset = 0x4, fixed_abs, tag = 'smem constant byte address 0x4 - core index']
  #allocation1 [shape = 'u32[144,128]{1,0:T(1,128)}', space=vmem, size = 0x12000, scoped, tag = 'internal scratch']
  %s0 = inlined_call_operand.vmem [shape: f32[2,12,17,8], index: 0, kind: input, shape index: {}]
  %s1 = inlined_call_operand.vmem [shape: f32[2,4,17,8], index: 1, kind: output, shape index: {}]
  %s2 = sld [smem:[#allocation0]]
  $region37: #{vit_context_forward.26} parent=0
    _
  %s4 = ssub.s32 1, %s2
  %s5 = scalar_select 0, %s4, %s2
  loop: start=0, step=1, limit=4
  $region2: #{vit_context_forward.26} parent=0 // loop_pre_header
    _
  $region3: #{vit_context_forward.26} parent=0 // loop_header
    %s7 = sphi 0, %s11
    %p8 = scmp.ge.s32.totalorder %s7, 4
    %s17 = sphi 0, %s19
    %s20 = sphi 0, %s17
    %s21 = sphi 0, %s20
    %s37 = sphi 0, %s21
    %s43 = sphi 0, %s45
    %s46 = sphi 0, %s43
    %s47 = sphi 0, %s46
    %s63 = sphi 0, %s47
  $region4: #{vit_context_forward.26} parent=0 // loop_header_branch
    %10 = sbr.rel (%p8) target = $region8
  $region5: #{vit_context_forward.26} parent=0 // loop_body
    %s12 = ssub.s32 %s7, 1
    %s13 = ssub.s32 %s7, 2
    %s14 = sadd.s32 %s7, 1
    %s15 = ssub.s32 %s7, %s14
    %p16 = scmp.eq.s32.totalorder %s15, 0
    %s18 = sadd.s32 %s17, 1
    %s19 = scalar_select %p16, %s17, %s18
    %p22 = pneg %p16
    %p23 = scmp.eq.s32.totalorder %s7, 1
    %p24 = por %p22, %p23
    %p25 = scmp.ne.s32.totalorder %s17, %s20
    %p26 = scmp.eq.s32.totalorder %s7, 0
    %p27 = por %p25, %p26
    %p28 = scmp.ne.s32.totalorder %s17, %s20
    %p29 = scmp.eq.s32.totalorder %s12, 1
    %p30 = por %p28, %p29
    %p31 = scmp.ne.s32.totalorder %s20, %s21
    %p32 = scmp.eq.s32.totalorder %s12, 0
    %p33 = por %p31, %p32
    %p34 = scmp.ne.s32.totalorder %s20, %s21
    %p35 = scmp.eq.s32.totalorder %s13, 1
    %p36 = por %p34, %p35
    %p38 = scmp.ne.s32.totalorder %s21, %s37
    %p39 = scmp.eq.s32.totalorder %s13, 0
    %p40 = por %p38, %p39
    %s41 = ssub.s32 %s7, %s14
    %p42 = scmp.eq.s32.totalorder %s41, 0
    %s44 = sadd.s32 %s43, 1
    %s45 = scalar_select %p42, %s43, %s44
    %p48 = pneg %p42
    %p49 = scmp.eq.s32.totalorder %s7, 1
    %p50 = por %p48, %p49
    %p51 = scmp.ne.s32.totalorder %s43, %s46
    %p52 = scmp.eq.s32.totalorder %s7, 0
    %p53 = por %p51, %p52
    %p54 = scmp.ne.s32.totalorder %s43, %s46
    %p55 = scmp.eq.s32.totalorder %s12, 1
    %p56 = por %p54, %p55
    %p57 = scmp.ne.s32.totalorder %s46, %s47
    %p58 = scmp.eq.s32.totalorder %s12, 0
    %p59 = por %p57, %p58
    %p60 = scmp.ne.s32.totalorder %s46, %s47
    %p61 = scmp.eq.s32.totalorder %s13, 1
    %p62 = por %p60, %p61
    %p64 = scmp.ne.s32.totalorder %s47, %s63
    %p65 = scmp.eq.s32.totalorder %s13, 0
    %p66 = por %p64, %p65
    %p67 = scmp.le.s32.totalorder 1, %s7
    %p68 = scmp.lt.s32.totalorder %s7, 3
    %p69 = pnand %p67, %p68
    %p70 = pneg %p69
    // Predicated region
    $region9: #{vit_context_forward.26} parent=5 // pred_check
      _
    $region10: #{vit_context_forward.26} parent=5 // pred_check_branch
      %72 = sbr.rel (%p69) target = $region12
    $region11: #{vit_context_forward.26} parent=5 // pred_region
      %s73 = ssub.s32 %s7, 1
    $region12: #{vit_context_forward.26} parent=5 // pred_fallthru
      _
    %p74 = scmp.lt.s32.totalorder %s7, 2
    // Predicated region
    $region13: #{vit_context_forward.26} parent=5 // pred_check
      %p75 = pneg %p74
    $region14: #{vit_context_forward.26} parent=5 // pred_check_branch
      %77 = sbr.rel (%p75) target = $region16
    $region15: #{vit_context_forward.26} parent=5 // pred_region
      // Predicated region
      $region17: #{vit_context_forward.26} parent=15 // pred_check
        %p78 = pneg %p27
      $region18: #{vit_context_forward.26} parent=15 // pred_check_branch
        %80 = sbr.rel (%p78) target = $region20
      $region19: #{vit_context_forward.26} parent=15 // pred_region
        %p81 = scmp.lt.s32.totalorder %s7, 1
        %s82 = scalar_select %p81, %s7, 1
        %s83 = smul.addr %s82, 36
        %s84 = smul.addr %s83, 8
        %s85 = scalar_lea.vmem %s0, %s84
      $region20: #{vit_context_forward.26} parent=15 // pred_fallthru
        _
    $region16: #{vit_context_forward.26} parent=5 // pred_fallthru
      _
    %p86 = scmp.le.s32.totalorder 1, %s7
    %p87 = scmp.lt.s32.totalorder %s7, 3
    %p88 = pnand %p86, %p87
    %p89 = pneg %p88
    // Predicated region
    $region21: #{vit_context_forward.26} parent=5 // pred_check
      _
    $region22: #{vit_context_forward.26} parent=5 // pred_check_branch
      %91 = sbr.rel (%p88) target = $region24
    $region23: #{vit_context_forward.26} parent=5 // pred_region
      %s92 = ssub.s32 %s7, 1
      %p93 = scmp.lt.s32.totalorder %s12, 1
      %s94 = scalar_select %p93, %s12, 1
      %s95 = smul.addr %s94, 36
      %s96 = smul.addr %s95, 8
      %s97 = scalar_lea.vmem %s0, %s96
      %p98 = pneg %p33
      %p99 = pneg %p30
      %p100 = pneg %p59
      %p101 = pneg %p56
      %p102 = scmp.lt.s32.totalorder %s12, 1
      %s103 = scalar_select %p102, %s12, 1
      %s104 = smul.addr %s103, 12
      %s105 = smul.addr %s104, 8
      %s106 = scalar_lea.vmem %s1, %s105
      %p107 = scmp.lt.s32.totalorder %s12, 1
      %s108 = scalar_select %p107, %s12, 1
      %s109 = smul.addr %s108, 36
      %s110 = smul.addr %s109, 8
      %s111 = scalar_lea.vmem %s0, %s110
      %p112 = scmp.lt.s32.totalorder %s12, 1
      %s113 = scalar_select %p112, %s12, 1
      %s114 = smul.addr %s113, 12
      %s115 = smul.addr %s114, 8
      %s116 = scalar_lea.vmem %s1, %s115
      %v118 = vld [vmem:[%s111] sm:$0xff]
      %v119 = vld [vmem:[%s111 + $0x8] sm:$0xff]
      %v120 = vld [vmem:[%s111 + $0x10] sm:$0x1]
      %v121 = vld [vmem:[%s111 + $0x18] sm:$0xff]
      %v122 = vld [vmem:[%s111 + $0x20] sm:$0xff]
      %v123 = vld [vmem:[%s111 + $0x28] sm:$0x1]
      %v124 = vld [vmem:[%s111 + $0x30] sm:$0xff]
      %v125 = vld [vmem:[%s111 + $0x38] sm:$0xff]
      %v126 = vld [vmem:[%s111 + $0x40] sm:$0x1]
      %v127 = vld [vmem:[%s111 + $0x48] sm:$0xff]
      %v128 = vld [vmem:[%s111 + $0x50] sm:$0xff]
      %v129 = vld [vmem:[%s111 + $0x58] sm:$0x1]
      %v130 = vld [vmem:[%s111 + $0x60] sm:$0xff]
      %v131 = vld [vmem:[%s111 + $0x68] sm:$0xff]
      %v132 = vld [vmem:[%s111 + $0x70] sm:$0x1]
      %v133 = vld [vmem:[%s111 + $0x78] sm:$0xff]
      %v134 = vld [vmem:[%s111 + $0x80] sm:$0xff]
      %v135 = vld [vmem:[%s111 + $0x88] sm:$0x1]
      %v136 = vld [vmem:[%s111 + $0x90] sm:$0xff]
      %v137 = vld [vmem:[%s111 + $0x98] sm:$0xff]
      %v138 = vld [vmem:[%s111 + $0xa0] sm:$0x1]
      %v139 = vld [vmem:[%s111 + $0xa8] sm:$0xff]
      %v140 = vld [vmem:[%s111 + $0xb0] sm:$0xff]
      %v141 = vld [vmem:[%s111 + $0xb8] sm:$0x1]
      %v142 = vld [vmem:[%s111 + $0xc0] sm:$0xff]
      %v143 = vld [vmem:[%s111 + $0xc8] sm:$0xff]
      %v144 = vld [vmem:[%s111 + $0xd0] sm:$0x1]
      %v145 = vld [vmem:[%s111 + $0xd8] sm:$0xff]
      %v146 = vld [vmem:[%s111 + $0xe0] sm:$0xff]
      %v147 = vld [vmem:[%s111 + $0xe8] sm:$0x1]
      %v148 = vld [vmem:[%s111 + $0xf0] sm:$0xff]
      %v149 = vld [vmem:[%s111 + $0xf8] sm:$0xff]
      %v150 = vld [vmem:[%s111 + $0x100] sm:$0x1]
      %v151 = vld [vmem:[%s111 + $0x108] sm:$0xff]
      %v152 = vld [vmem:[%s111 + $0x110] sm:$0xff]
      %v153 = vld [vmem:[%s111 + $0x118] sm:$0x1]
      %v154 = vpack.c.bf16 %v119, %v118
      %v155 = vpack.c.bf16 %v120, %v120
      %v156 = vpack.c.bf16 %v122, %v121
      %v157 = vpack.c.bf16 %v123, %v123
      %v158 = vpack.c.bf16 %v125, %v124
      %v159 = vpack.c.bf16 %v126, %v126
      %v160 = vpack.c.bf16 %v128, %v127
      %v161 = vpack.c.bf16 %v129, %v129
      %v162 = vpack.c.bf16 %v131, %v130
      %v163 = vpack.c.bf16 %v132, %v132
      %v164 = vpack.c.bf16 %v134, %v133
      %v165 = vpack.c.bf16 %v135, %v135
      %v166 = vpack.c.bf16 %v137, %v136
      %v167 = vpack.c.bf16 %v138, %v138
      %v168 = vpack.c.bf16 %v140, %v139
      %v169 = vpack.c.bf16 %v141, %v141
      %v170 = vpack.c.bf16 %v143, %v142
      %v171 = vpack.c.bf16 %v144, %v144
      %v172 = vpack.c.bf16 %v146, %v145
      %v173 = vpack.c.bf16 %v147, %v147
      %v174 = vpack.c.bf16 %v149, %v148
      %v175 = vpack.c.bf16 %v150, %v150
      %v176 = vpack.c.bf16 %v152, %v151
      %v177 = vpack.c.bf16 %v153, %v153
      %vm178 = vcmask 64512
      %v180 = vsel %vm178, %v154, 0
      %v183 = vsel %vm178, %v155, 0
      %v186 = vsel %vm178, %v162, 0
      %v189 = vsel %vm178, %v163, 0
      %191 = vmatprep.subr.bf16.mxu0 0
      %192 = vmatpush1.bf16.xpose.msra.mxu0 %v186
      %193 = vmatprep.subr.bf16.mxu0 0
      %194 = vmatpush1.bf16.xpose.msra.mxu0 %v189
      %195 = vmatprep.subr.bf16.mxu0 0
      %196 = vmatpush1.bf16.xpose.msra.mxu0 0
      %197 = vmatprep.subr.bf16.mxu0 0
      %198 = vmatpush1.bf16.xpose.msra.mxu0 0
      %199 = vmatprep.subr.bf16.mxu0 0
      %200 = vmatpush1.bf16.xpose.msra.mxu0 0
      %201 = vmatprep.subr.bf16.mxu0 0
      %202 = vmatpush1.bf16.xpose.msra.mxu0 0
      %203 = vmatprep.subr.bf16.mxu0 0
      %204 = vmatpush1.bf16.xpose.msra.mxu0 0
      %205 = vmatprep.subr.bf16.mxu0 0
      %206 = vmatpush1.bf16.xpose.msra.mxu0 0
      %207 = vmatprep.subr.bf16.mxu0 0
      %208 = vmatpush1.bf16.xpose.msra.mxu0 0
      %209 = vmatprep.subr.bf16.mxu0 0
      %210 = vmatpush1.bf16.xpose.msra.mxu0 0
      %211 = vmatprep.subr.bf16.mxu0 0
      %212 = vmatpush1.bf16.xpose.msra.mxu0 0
      %213 = vmatprep.subr.bf16.mxu0 0
      %214 = vmatpush1.bf16.xpose.msra.mxu0 0
      %215 = vmatprep.subr.bf16.mxu0 0
      %216 = vmatpush1.bf16.xpose.msra.mxu0 0
      %217 = vmatprep.subr.bf16.mxu0 0
      %218 = vmatpush1.bf16.xpose.msra.mxu0 0
      %219 = vmatprep.subr.bf16.mxu0 0
      %220 = vmatpush1.bf16.xpose.msra.mxu0 0
      %221 = vmatprep.subr.bf16.mxu0 0
      %222 = vmatpush1.bf16.xpose.msra.mxu0 0
      %223 = vmatprep.mubr.bf16.mxu0 0
      %224 = vmatmul.mubr.bf16.gmra.mrb[0].mxu0 %v180
      %v225 = vpop.f32.mrb[0].mxu0
      %v226 = vadd.f32 0.0, %v225
      %v227 = vpop.f32.mrb[0].mxu0
      %v228 = vpop.f32.mrb[0].mxu0
      %v229 = vadd.f32 0.0, %v228
      %v230 = vpop.f32.mrb[0].mxu0
      %231 = vmatprep.mubr.bf16.mxu0 0
      %232 = vmatmul.mubr.bf16.gmra.mrb[0].mxu0 %v183
      %v233 = vpop.f32.mrb[0].mxu0
      %v234 = vadd.f32 0.0, %v233
      %v235 = vpop.f32.mrb[0].mxu0
      %v236 = vpop.f32.mrb[0].mxu0
      %v237 = vpop.f32.mrb[0].mxu0
      %238 = vdwg.mxu0
      %v240 = vsel %vm178, %v156, 0
      %v243 = vsel %vm178, %v157, 0
      %v246 = vsel %vm178, %v164, 0
      %v249 = vsel %vm178, %v165, 0
      %251 = vmatprep.subr.bf16.mxu0 0
      %252 = vmatpush1.bf16.xpose.msra.mxu0 %v246
      %253 = vmatprep.subr.bf16.mxu0 0
      %254 = vmatpush1.bf16.xpose.msra.mxu0 %v249
      %255 = vmatprep.subr.bf16.mxu0 0
      %256 = vmatpush1.bf16.xpose.msra.mxu0 0
      %257 = vmatprep.subr.bf16.mxu0 0
      %258 = vmatpush1.bf16.xpose.msra.mxu0 0
      %259 = vmatprep.subr.bf16.mxu0 0
      %260 = vmatpush1.bf16.xpose.msra.mxu0 0
      %261 = vmatprep.subr.bf16.mxu0 0
      %262 = vmatpush1.bf16.xpose.msra.mxu0 0
      %263 = vmatprep.subr.bf16.mxu0 0
      %264 = vmatpush1.bf16.xpose.msra.mxu0 0
      %265 = vmatprep.subr.bf16.mxu0 0
      %266 = vmatpush1.bf16.xpose.msra.mxu0 0
      %267 = vmatprep.subr.bf16.mxu0 0
      %268 = vmatpush1.bf16.xpose.msra.mxu0 0
      %269 = vmatprep.subr.bf16.mxu0 0
      %270 = vmatpush1.bf16.xpose.msra.mxu0 0
      %271 = vmatprep.subr.bf16.mxu0 0
      %272 = vmatpush1.bf16.xpose.msra.mxu0 0
      %273 = vmatprep.subr.bf16.mxu0 0
      %274 = vmatpush1.bf16.xpose.msra.mxu0 0
      %275 = vmatprep.subr.bf16.mxu0 0
      %276 = vmatpush1.bf16.xpose.msra.mxu0 0
      %277 = vmatprep.subr.bf16.mxu0 0
      %278 = vmatpush1.bf16.xpose.msra.mxu0 0
      %279 = vmatprep.subr.bf16.mxu0 0
      %280 = vmatpush1.bf16.xpose.msra.mxu0 0
      %281 = vmatprep.subr.bf16.mxu0 0
      %282 = vmatpush1.bf16.xpose.msra.mxu0 0
      %283 = vmatprep.mubr.bf16.mxu0 0
      %284 = vmatmul.mubr.bf16.gmra.mrb[0].mxu0 %v240
      %v285 = vpop.f32.mrb[0].mxu0
      %v286 = vadd.f32 0.0, %v285
      %v287 = vpop.f32.mrb[0].mxu0
      %v288 = vpop.f32.mrb[0].mxu0
      %v289 = vadd.f32 0.0, %v288
      %v290 = vpop.f32.mrb[0].mxu0
      %291 = vmatprep.mubr.bf16.mxu0 0
      %292 = vmatmul.mubr.bf16.gmra.mrb[0].mxu0 %v243
      %v293 = vpop.f32.mrb[0].mxu0
      %v294 = vadd.f32 0.0, %v293
      %v295 = vpop.f32.mrb[0].mxu0
      %v296 = vpop.f32.mrb[0].mxu0
      %v297 = vpop.f32.mrb[0].mxu0
      %298 = vdwg.mxu0
      %v300 = vsel %vm178, %v158, 0
      %v303 = vsel %vm178, %v159, 0
      %v306 = vsel %vm178, %v166, 0
      %v309 = vsel %vm178, %v167, 0
      %311 = vmatprep.subr.bf16.mxu0 0
      %312 = vmatpush1.bf16.xpose.msra.mxu0 %v306
      %313 = vmatprep.subr.bf16.mxu0 0
      %314 = vmatpush1.bf16.xpose.msra.mxu0 %v309
      %315 = vmatprep.subr.bf16.mxu0 0
      %316 = vmatpush1.bf16.xpose.msra.mxu0 0
      %317 = vmatprep.subr.bf16.mxu0 0
      %318 = vmatpush1.bf16.xpose.msra.mxu0 0
      %319 = vmatprep.subr.bf16.mxu0 0
      %320 = vmatpush1.bf16.xpose.msra.mxu0 0
      %321 = vmatprep.subr.bf16.mxu0 0
      %322 = vmatpush1.bf16.xpose.msra.mxu0 0
      %323 = vmatprep.subr.bf16.mxu0 0
      %324 = vmatpush1.bf16.xpose.msra.mxu0 0
      %325 = vmatprep.subr.bf16.mxu0 0
      %326 = vmatpush1.bf16.xpose.msra.mxu0 0
      %327 = vmatprep.subr.bf16.mxu0 0
      %328 = vmatpush1.bf16.xpose.msra.mxu0 0
      %329 = vmatprep.subr.bf16.mxu0 0
      %330 = vmatpush1.bf16.xpose.msra.mxu0 0
      %331 = vmatprep.subr.bf16.mxu0 0
      %332 = vmatpush1.bf16.xpose.msra.mxu0 0
      %333 = vmatprep.subr.bf16.mxu0 0
      %334 = vmatpush1.bf16.xpose.msra.mxu0 0
      %335 = vmatprep.subr.bf16.mxu0 0
      %336 = vmatpush1.bf16.xpose.msra.mxu0 0
      %337 = vmatprep.subr.bf16.mxu0 0
      %338 = vmatpush1.bf16.xpose.msra.mxu0 0
      %339 = vmatprep.subr.bf16.mxu0 0
      %340 = vmatpush1.bf16.xpose.msra.mxu0 0
      %341 = vmatprep.subr.bf16.mxu0 0
      %342 = vmatpush1.bf16.xpose.msra.mxu0 0
      %343 = vmatprep.mubr.bf16.mxu0 0
      %344 = vmatmul.mubr.bf16.gmra.mrb[0].mxu0 %v300
      %v345 = vpop.f32.mrb[0].mxu0
      %v346 = vadd.f32 0.0, %v345
      %v347 = vpop.f32.mrb[0].mxu0
      %v348 = vpop.f32.mrb[0].mxu0
      %v349 = vadd.f32 0.0, %v348
      %v350 = vpop.f32.mrb[0].mxu0
      %351 = vmatprep.mubr.bf16.mxu0 0
      %352 = vmatmul.mubr.bf16.gmra.mrb[0].mxu0 %v303
      %v353 = vpop.f32.mrb[0].mxu0
      %v354 = vadd.f32 0.0, %v353
      %v355 = vpop.f32.mrb[0].mxu0
      %v356 = vpop.f32.mrb[0].mxu0
      %v357 = vpop.f32.mrb[0].mxu0
      %358 = vdwg.mxu0
      %v360 = vsel %vm178, %v160, 0
      %v363 = vsel %vm178, %v161, 0
      %v366 = vsel %vm178, %v168, 0
      %v369 = vsel %vm178, %v169, 0
      %371 = vmatprep.subr.bf16.mxu0 0
      %372 = vmatpush1.bf16.xpose.msra.mxu0 %v366
      %373 = vmatprep.subr.bf16.mxu0 0
      %374 = vmatpush1.bf16.xpose.msra.mxu0 %v369
      %375 = vmatprep.subr.bf16.mxu0 0
      %376 = vmatpush1.bf16.xpose.msra.mxu0 0
      %377 = vmatprep.subr.bf16.mxu0 0
      %378 = vmatpush1.bf16.xpose.msra.mxu0 0
      %379 = vmatprep.subr.bf16.mxu0 0
      %380 = vmatpush1.bf16.xpose.msra.mxu0 0
      %381 = vmatprep.subr.bf16.mxu0 0
      %382 = vmatpush1.bf16.xpose.msra.mxu0 0
      %383 = vmatprep.subr.bf16.mxu0 0
      %384 = vmatpush1.bf16.xpose.msra.mxu0 0
      %385 = vmatprep.subr.bf16.mxu0 0
      %386 = vmatpush1.bf16.xpose.msra.mxu0 0
      %387 = vmatprep.subr.bf16.mxu0 0
      %388 = vmatpush1.bf16.xpose.msra.mxu0 0
      %389 = vmatprep.subr.bf16.mxu0 0
      %390 = vmatpush1.bf16.xpose.msra.mxu0 0
      %391 = vmatprep.subr.bf16.mxu0 0
      %392 = vmatpush1.bf16.xpose.msra.mxu0 0
      %393 = vmatprep.subr.bf16.mxu0 0
      %394 = vmatpush1.bf16.xpose.msra.mxu0 0
      %395 = vmatprep.subr.bf16.mxu0 0
      %396 = vmatpush1.bf16.xpose.msra.mxu0 0
      %397 = vmatprep.subr.bf16.mxu0 0
      %398 = vmatpush1.bf16.xpose.msra.mxu0 0
      %399 = vmatprep.subr.bf16.mxu0 0
      %400 = vmatpush1.bf16.xpose.msra.mxu0 0
      %401 = vmatprep.subr.bf16.mxu0 0
      %402 = vmatpush1.bf16.xpose.msra.mxu0 0
      %403 = vmatprep.mubr.bf16.mxu0 0
      %404 = vmatmul.mubr.bf16.gmra.mrb[0].mxu0 %v360
      %v405 = vpop.f32.mrb[0].mxu0
      %v406 = vadd.f32 0.0, %v405
      %v407 = vpop.f32.mrb[0].mxu0
      %v408 = vpop.f32.mrb[0].mxu0
      %v409 = vadd.f32 0.0, %v408
      %v410 = vpop.f32.mrb[0].mxu0
      %411 = vmatprep.mubr.bf16.mxu0 0
      %412 = vmatmul.mubr.bf16.gmra.mrb[0].mxu0 %v363
      %v413 = vpop.f32.mrb[0].mxu0
      %v414 = vadd.f32 0.0, %v413
      %v415 = vpop.f32.mrb[0].mxu0
      %v416 = vpop.f32.mrb[0].mxu0
      %v417 = vpop.f32.mrb[0].mxu0
      %418 = vdwg.mxu0
      %vm419 = vcmask 138240
      %v420 = vsel %vm419, %v226, -inf
      %421 = vmax.xlane.f32.xlu0 %v420
      %v422 = vpop.xlane.xlu0 %421
      %v423 = vsel %vm419, %v229, -inf
      %424 = vmax.xlane.f32.xlu0 %v423
      %v425 = vpop.xlane.xlu0 %424
      %vm426 = vcmask 131072
      %v427 = vsel %vm426, %v234, -inf
      %428 = vmax.xlane.f32.xlu0 %v427
      %v429 = vpop.xlane.xlu0 %428
      %v430 = vsel %vm419, %v286, -inf
      %431 = vmax.xlane.f32.xlu0 %v430
      %v432 = vpop.xlane.xlu0 %431
      %v433 = vsel %vm419, %v289, -inf
      %434 = vmax.xlane.f32.xlu0 %v433
      %v435 = vpop.xlane.xlu0 %434
      %v436 = vsel %vm426, %v294, -inf
      %437 = vmax.xlane.f32.xlu0 %v436
      %v438 = vpop.xlane.xlu0 %437
      %v439 = vsel %vm419, %v346, -inf
      %440 = vmax.xlane.f32.xlu0 %v439
      %v441 = vpop.xlane.xlu0 %440
      %v442 = vsel %vm419, %v349, -inf
      %443 = vmax.xlane.f32.xlu0 %v442
      %v444 = vpop.xlane.xlu0 %443
      %v445 = vsel %vm426, %v354, -inf
      %446 = vmax.xlane.f32.xlu0 %v445
      %v447 = vpop.xlane.xlu0 %446
      %v448 = vsel %vm419, %v406, -inf
      %449 = vmax.xlane.f32.xlu0 %v448
      %v450 = vpop.xlane.xlu0 %449
      %v451 = vsel %vm419, %v409, -inf
      %452 = vmax.xlane.f32.xlu0 %v451
      %v453 = vpop.xlane.xlu0 %452
      %v454 = vsel %vm426, %v414, -inf
      %455 = vmax.xlane.f32.xlu0 %v454
      %v456 = vpop.xlane.xlu0 %455
      %v457 = vsub.f32 %v226, %v422
      %v458 = vsub.f32 %v229, %v425
      %v459 = vsub.f32 %v234, %v429
      %v460 = vsub.f32 %v286, %v432
      %v461 = vsub.f32 %v289, %v435
      %v462 = vsub.f32 %v294, %v438
      %v463 = vsub.f32 %v346, %v441
      %v464 = vsub.f32 %v349, %v444
      %v465 = vsub.f32 %v354, %v447
      %v466 = vsub.f32 %v406, %v450
      %v467 = vsub.f32 %v409, %v453
      %v468 = vsub.f32 %v414, %v456
      %v469 = vmul.f32 %v457, 1.442695
      %v470 = vpow.pop %v469
      %v471 = vmul.f32 %v458, 1.442695
      %v472 = vpow.pop %v471
      %v473 = vmul.f32 %v459, 1.442695
      %v474 = vpow.pop %v473
      %v475 = vmul.f32 %v460, 1.442695
      %v476 = vpow.pop %v475
      %v477 = vmul.f32 %v461, 1.442695
      %v478 = vpow.pop %v477
      %v479 = vmul.f32 %v462, 1.442695
      %v480 = vpow.pop %v479
      %v481 = vmul.f32 %v463, 1.442695
      %v482 = vpow.pop %v481
      %v483 = vmul.f32 %v464, 1.442695
      %v484 = vpow.pop %v483
      %v485 = vmul.f32 %v465, 1.442695
      %v486 = vpow.pop %v485
      %v487 = vmul.f32 %v466, 1.442695
      %v488 = vpow.pop %v487
      %v489 = vmul.f32 %v467, 1.442695
      %v490 = vpow.pop %v489
      %v491 = vmul.f32 %v468, 1.442695
      %v492 = vpow.pop %v491
      %v493 = vsel %vm419, %v470, 0.0
      %494 = vadd.xlane.f32.xlu0 %v493
      %v495 = vpop.xlane.xlu0 %494
      %v496 = vsel %vm419, %v472, 0.0
      %497 = vadd.xlane.f32.xlu0 %v496
      %v498 = vpop.xlane.xlu0 %497
      %v499 = vsel %vm426, %v474, 0.0
      %500 = vadd.xlane.f32.xlu0 %v499
      %v501 = vpop.xlane.xlu0 %500
      %v502 = vsel %vm419, %v476, 0.0
      %503 = vadd.xlane.f32.xlu0 %v502
      %v504 = vpop.xlane.xlu0 %503
      %v505 = vsel %vm419, %v478, 0.0
      %506 = vadd.xlane.f32.xlu0 %v505
      %v507 = vpop.xlane.xlu0 %506
      %v508 = vsel %vm426, %v480, 0.0
      %509 = vadd.xlane.f32.xlu0 %v508
      %v510 = vpop.xlane.xlu0 %509
      %v511 = vsel %vm419, %v482, 0.0
      %512 = vadd.xlane.f32.xlu0 %v511
      %v513 = vpop.xlane.xlu0 %512
      %v514 = vsel %vm419, %v484, 0.0
      %515 = vadd.xlane.f32.xlu0 %v514
      %v516 = vpop.xlane.xlu0 %515
      %v517 = vsel %vm426, %v486, 0.0
      %518 = vadd.xlane.f32.xlu0 %v517
      %v519 = vpop.xlane.xlu0 %518
      %v520 = vsel %vm419, %v488, 0.0
      %521 = vadd.xlane.f32.xlu0 %v520
      %v522 = vpop.xlane.xlu0 %521
      %v523 = vsel %vm419, %v490, 0.0
      %524 = vadd.xlane.f32.xlu0 %v523
      %v525 = vpop.xlane.xlu0 %524
      %v526 = vsel %vm426, %v492, 0.0
      %527 = vadd.xlane.f32.xlu0 %v526
      %v528 = vpop.xlane.xlu0 %527
      %v529 = vrcp.pop %v495
      %v530 = vrcp.pop %v498
      %v531 = vrcp.pop %v501
      %v532 = vrcp.pop %v504
      %v533 = vrcp.pop %v507
      %v534 = vrcp.pop %v510
      %v535 = vrcp.pop %v513
      %v536 = vrcp.pop %v516
      %v537 = vrcp.pop %v519
      %v538 = vrcp.pop %v522
      %v539 = vrcp.pop %v525
      %v540 = vrcp.pop %v528
      %v541 = vmul.f32 %v470, %v529
      %v542 = vmul.f32 %v472, %v530
      %v543 = vmul.f32 %v474, %v531
      %v544 = vmul.f32 %v476, %v532
      %v545 = vmul.f32 %v478, %v533
      %v546 = vmul.f32 %v480, %v534
      %v547 = vmul.f32 %v482, %v535
      %v548 = vmul.f32 %v484, %v536
      %v549 = vmul.f32 %v486, %v537
      %v550 = vmul.f32 %v488, %v538
      %v551 = vmul.f32 %v490, %v539
      %v552 = vmul.f32 %v492, %v540
      %v553 = vpack.c.bf16 %v542, %v541
      %v554 = vpack.c.bf16 %v543, %v543
      %v555 = vpack.c.bf16 %v545, %v544
      %v556 = vpack.c.bf16 %v546, %v546
      %v557 = vpack.c.bf16 %v548, %v547
      %v558 = vpack.c.bf16 %v549, %v549
      %v559 = vpack.c.bf16 %v551, %v550
      %v560 = vpack.c.bf16 %v552, %v552
      %v562 = vsel %vm419, %v553, 0
      %v565 = vsel %vm419, %v554, 0
      %vm567 = vcmask 1040384
      %v568 = vsel 0, 4294967295, 65535
      %v569 = vsel %vm567, %v568, 0
      %v571 = vand.u32 %v171, %v569
      %573 = vmatprep.subr.bf16.mxu0 0
      %574 = vmatpush1.bf16.msra.mxu0 %v170
      %575 = vmatprep.subr.bf16.mxu0 0
      %576 = vmatpush1.bf16.msra.mxu0 %v571
      %577 = vmatprep.subr.bf16.mxu0 0
      %578 = vmatpush1.bf16.msra.mxu0 0
      %579 = vmatprep.subr.bf16.mxu0 0
      %580 = vmatpush1.bf16.msra.mxu0 0
      %581 = vmatprep.subr.bf16.mxu0 0
      %582 = vmatpush1.bf16.msra.mxu0 0
      %583 = vmatprep.subr.bf16.mxu0 0
      %584 = vmatpush1.bf16.msra.mxu0 0
      %585 = vmatprep.subr.bf16.mxu0 0
      %586 = vmatpush1.bf16.msra.mxu0 0
      %587 = vmatprep.subr.bf16.mxu0 0
      %588 = vmatpush1.bf16.msra.mxu0 0
      %589 = vmatprep.subr.bf16.mxu0 0
      %590 = vmatpush1.bf16.msra.mxu0 0
      %591 = vmatprep.subr.bf16.mxu0 0
      %592 = vmatpush1.bf16.msra.mxu0 0
      %593 = vmatprep.subr.bf16.mxu0 0
      %594 = vmatpush1.bf16.msra.mxu0 0
      %595 = vmatprep.subr.bf16.mxu0 0
      %596 = vmatpush1.bf16.msra.mxu0 0
      %597 = vmatprep.subr.bf16.mxu0 0
      %598 = vmatpush1.bf16.msra.mxu0 0
      %599 = vmatprep.subr.bf16.mxu0 0
      %600 = vmatpush1.bf16.msra.mxu0 0
      %601 = vmatprep.subr.bf16.mxu0 0
      %602 = vmatpush1.bf16.msra.mxu0 0
      %603 = vmatprep.subr.bf16.mxu0 0
      %604 = vmatpush1.bf16.msra.mxu0 0
      %605 = vmatprep.mubr.bf16.mxu0 0
      %606 = vmatmul.mubr.bf16.gmra.mrb[0].mxu0 %v562
      %v607 = vpop.f32.mrb[0].mxu0
      %v608 = vadd.f32 0.0, %v607
      %v609 = vpop.f32.mrb[0].mxu0
      %v610 = vpop.f32.mrb[0].mxu0
      %v611 = vadd.f32 0.0, %v610
      %v612 = vpop.f32.mrb[0].mxu0
      %613 = vmatprep.mubr.bf16.mxu0 0
      %614 = vmatmul.mubr.bf16.gmra.mrb[0].mxu0 %v565
      %v615 = vpop.f32.mrb[0].mxu0
      %v616 = vadd.f32 0.0, %v615
      %v617 = vpop.f32.mrb[0].mxu0
      %v618 = vpop.f32.mrb[0].mxu0
      %v619 = vpop.f32.mrb[0].mxu0
      %620 = vdwg.mxu0
      %v622 = vsel %vm419, %v555, 0
      %v625 = vsel %vm419, %v556, 0
      %v628 = vand.u32 %v173, %v569
      %630 = vmatprep.subr.bf16.mxu0 0
      %631 = vmatpush1.bf16.msra.mxu0 %v172
      %632 = vmatprep.subr.bf16.mxu0 0
      %633 = vmatpush1.bf16.msra.mxu0 %v628
      %634 = vmatprep.subr.bf16.mxu0 0
      %635 = vmatpush1.bf16.msra.mxu0 0
      %636 = vmatprep.subr.bf16.mxu0 0
      %637 = vmatpush1.bf16.msra.mxu0 0
      %638 = vmatprep.subr.bf16.mxu0 0
      %639 = vmatpush1.bf16.msra.mxu0 0
      %640 = vmatprep.subr.bf16.mxu0 0
      %641 = vmatpush1.bf16.msra.mxu0 0
      %642 = vmatprep.subr.bf16.mxu0 0
      %643 = vmatpush1.bf16.msra.mxu0 0
      %644 = vmatprep.subr.bf16.mxu0 0
      %645 = vmatpush1.bf16.msra.mxu0 0
      %646 = vmatprep.subr.bf16.mxu0 0
      %647 = vmatpush1.bf16.msra.mxu0 0
      %648 = vmatprep.subr.bf16.mxu0 0
      %649 = vmatpush1.bf16.msra.mxu0 0
      %650 = vmatprep.subr.bf16.mxu0 0
      %651 = vmatpush1.bf16.msra.mxu0 0
      %652 = vmatprep.subr.bf16.mxu0 0
      %653 = vmatpush1.bf16.msra.mxu0 0
      %654 = vmatprep.subr.bf16.mxu0 0
      %655 = vmatpush1.bf16.msra.mxu0 0
      %656 = vmatprep.subr.bf16.mxu0 0
      %657 = vmatpush1.bf16.msra.mxu0 0
      %658 = vmatprep.subr.bf16.mxu0 0
      %659 = vmatpush1.bf16.msra.mxu0 0
      %660 = vmatprep.subr.bf16.mxu0 0
      %661 = vmatpush1.bf16.msra.mxu0 0
      %662 = vmatprep.mubr.bf16.mxu0 0
      %663 = vmatmul.mubr.bf16.gmra.mrb[0].mxu0 %v622
      %v664 = vpop.f32.mrb[0].mxu0
      %v665 = vadd.f32 0.0, %v664
      %v666 = vpop.f32.mrb[0].mxu0
      %v667 = vpop.f32.mrb[0].mxu0
      %v668 = vadd.f32 0.0, %v667
      %v669 = vpop.f32.mrb[0].mxu0
      %670 = vmatprep.mubr.bf16.mxu0 0
      %671 = vmatmul.mubr.bf16.gmra.mrb[0].mxu0 %v625
      %v672 = vpop.f32.mrb[0].mxu0
      %v673 = vadd.f32 0.0, %v672
      %v674 = vpop.f32.mrb[0].mxu0
      %v675 = vpop.f32.mrb[0].mxu0
      %v676 = vpop.f32.mrb[0].mxu0
      %677 = vdwg.mxu0
      %v679 = vsel %vm419, %v557, 0
      %v682 = vsel %vm419, %v558, 0
      %v685 = vand.u32 %v175, %v569
      %687 = vmatprep.subr.bf16.mxu0 0
      %688 = vmatpush1.bf16.msra.mxu0 %v174
      %689 = vmatprep.subr.bf16.mxu0 0
      %690 = vmatpush1.bf16.msra.mxu0 %v685
      %691 = vmatprep.subr.bf16.mxu0 0
      %692 = vmatpush1.bf16.msra.mxu0 0
      %693 = vmatprep.subr.bf16.mxu0 0
      %694 = vmatpush1.bf16.msra.mxu0 0
      %695 = vmatprep.subr.bf16.mxu0 0
      %696 = vmatpush1.bf16.msra.mxu0 0
      %697 = vmatprep.subr.bf16.mxu0 0
      %698 = vmatpush1.bf16.msra.mxu0 0
      %699 = vmatprep.subr.bf16.mxu0 0
      %700 = vmatpush1.bf16.msra.mxu0 0
      %701 = vmatprep.subr.bf16.mxu0 0
      %702 = vmatpush1.bf16.msra.mxu0 0
      %703 = vmatprep.subr.bf16.mxu0 0
      %704 = vmatpush1.bf16.msra.mxu0 0
      %705 = vmatprep.subr.bf16.mxu0 0
      %706 = vmatpush1.bf16.msra.mxu0 0
      %707 = vmatprep.subr.bf16.mxu0 0
      %708 = vmatpush1.bf16.msra.mxu0 0
      %709 = vmatprep.subr.bf16.mxu0 0
      %710 = vmatpush1.bf16.msra.mxu0 0
      %711 = vmatprep.subr.bf16.mxu0 0
      %712 = vmatpush1.bf16.msra.mxu0 0
      %713 = vmatprep.subr.bf16.mxu0 0
      %714 = vmatpush1.bf16.msra.mxu0 0
      %715 = vmatprep.subr.bf16.mxu0 0
      %716 = vmatpush1.bf16.msra.mxu0 0
      %717 = vmatprep.subr.bf16.mxu0 0
      %718 = vmatpush1.bf16.msra.mxu0 0
      %719 = vmatprep.mubr.bf16.mxu0 0
      %720 = vmatmul.mubr.bf16.gmra.mrb[0].mxu0 %v679
      %v721 = vpop.f32.mrb[0].mxu0
      %v722 = vadd.f32 0.0, %v721
      %v723 = vpop.f32.mrb[0].mxu0
      %v724 = vpop.f32.mrb[0].mxu0
      %v725 = vadd.f32 0.0, %v724
      %v726 = vpop.f32.mrb[0].mxu0
      %727 = vmatprep.mubr.bf16.mxu0 0
      %728 = vmatmul.mubr.bf16.gmra.mrb[0].mxu0 %v682
      %v729 = vpop.f32.mrb[0].mxu0
      %v730 = vadd.f32 0.0, %v729
      %v731 = vpop.f32.mrb[0].mxu0
      %v732 = vpop.f32.mrb[0].mxu0
      %v733 = vpop.f32.mrb[0].mxu0
      %734 = vdwg.mxu0
      %v736 = vsel %vm419, %v559, 0
      %v739 = vsel %vm419, %v560, 0
      %v742 = vand.u32 %v177, %v569
      %744 = vmatprep.subr.bf16.mxu0 0
      %745 = vmatpush1.bf16.msra.mxu0 %v176
      %746 = vmatprep.subr.bf16.mxu0 0
      %747 = vmatpush1.bf16.msra.mxu0 %v742
      %748 = vmatprep.subr.bf16.mxu0 0
      %749 = vmatpush1.bf16.msra.mxu0 0
      %750 = vmatprep.subr.bf16.mxu0 0
      %751 = vmatpush1.bf16.msra.mxu0 0
      %752 = vmatprep.subr.bf16.mxu0 0
      %753 = vmatpush1.bf16.msra.mxu0 0
      %754 = vmatprep.subr.bf16.mxu0 0
      %755 = vmatpush1.bf16.msra.mxu0 0
      %756 = vmatprep.subr.bf16.mxu0 0
      %757 = vmatpush1.bf16.msra.mxu0 0
      %758 = vmatprep.subr.bf16.mxu0 0
      %759 = vmatpush1.bf16.msra.mxu0 0
      %760 = vmatprep.subr.bf16.mxu0 0
      %761 = vmatpush1.bf16.msra.mxu0 0
      %762 = vmatprep.subr.bf16.mxu0 0
      %763 = vmatpush1.bf16.msra.mxu0 0
      %764 = vmatprep.subr.bf16.mxu0 0
      %765 = vmatpush1.bf16.msra.mxu0 0
      %766 = vmatprep.subr.bf16.mxu0 0
      %767 = vmatpush1.bf16.msra.mxu0 0
      %768 = vmatprep.subr.bf16.mxu0 0
      %769 = vmatpush1.bf16.msra.mxu0 0
      %770 = vmatprep.subr.bf16.mxu0 0
      %771 = vmatpush1.bf16.msra.mxu0 0
      %772 = vmatprep.subr.bf16.mxu0 0
      %773 = vmatpush1.bf16.msra.mxu0 0
      %774 = vmatprep.subr.bf16.mxu0 0
      %775 = vmatpush1.bf16.msra.mxu0 0
      %776 = vmatprep.mubr.bf16.mxu0 0
      %777 = vmatmul.mubr.bf16.gmra.mrb[0].mxu0 %v736
      %v778 = vpop.f32.mrb[0].mxu0
      %v779 = vadd.f32 0.0, %v778
      %v780 = vpop.f32.mrb[0].mxu0
      %v781 = vpop.f32.mrb[0].mxu0
      %v782 = vadd.f32 0.0, %v781
      %v783 = vpop.f32.mrb[0].mxu0
      %784 = vmatprep.mubr.bf16.mxu0 0
      %785 = vmatmul.mubr.bf16.gmra.mrb[0].mxu0 %v739
      %v786 = vpop.f32.mrb[0].mxu0
      %v787 = vadd.f32 0.0, %v786
      %v788 = vpop.f32.mrb[0].mxu0
      %v789 = vpop.f32.mrb[0].mxu0
      %v790 = vpop.f32.mrb[0].mxu0
      %791 = vdwg.mxu0
      %792 = vst.msk [vmem:[%s116] sm:$0xff] %vm178, %v608
      %793 = vst.msk [vmem:[%s116 + $0x8] sm:$0xff] %vm178, %v611
      %vm794 = vcmask 57344
      %795 = vst.msk [vmem:[%s116 + $0x10] sm:$0x1] %vm794, %v616
      %796 = vst.msk [vmem:[%s116 + $0x18] sm:$0xff] %vm178, %v665
      %797 = vst.msk [vmem:[%s116 + $0x20] sm:$0xff] %vm178, %v668
      %798 = vst.msk [vmem:[%s116 + $0x28] sm:$0x1] %vm794, %v673
      %799 = vst.msk [vmem:[%s116 + $0x30] sm:$0xff] %vm178, %v722
      %800 = vst.msk [vmem:[%s116 + $0x38] sm:$0xff] %vm178, %v725
      %801 = vst.msk [vmem:[%s116 + $0x40] sm:$0x1] %vm794, %v730
      %802 = vst.msk [vmem:[%s116 + $0x48] sm:$0xff] %vm178, %v779
      %803 = vst.msk [vmem:[%s116 + $0x50] sm:$0xff] %vm178, %v782
      %804 = vst.msk [vmem:[%s116 + $0x58] sm:$0x1] %vm794, %v787
      %p805 = scmp.lt.s32.totalorder %s12, 1
      %s806 = scalar_select %p805, %s12, 1
      %s807 = smul.addr %s806, 12
      %s808 = smul.addr %s807, 8
      %s809 = scalar_lea.vmem %s1, %s808
      // Predicated region
      $region25: #{vit_context_forward.26} parent=23 // pred_check
        %p810 = pneg %p56
      $region26: #{vit_context_forward.26} parent=23 // pred_check_branch
        %812 = sbr.rel (%p810) target = $region28
      $region27: #{vit_context_forward.26} parent=23 // pred_region
        _
      $region28: #{vit_context_forward.26} parent=23 // pred_fallthru
        _
    $region24: #{vit_context_forward.26} parent=5 // pred_fallthru
      _
    %p813 = scmp.le.s32.totalorder 2, %s7
    // Predicated region
    $region29: #{vit_context_forward.26} parent=5 // pred_check
      %p814 = pneg %p813
    $region30: #{vit_context_forward.26} parent=5 // pred_check_branch
      %816 = sbr.rel (%p814) target = $region32
    $region31: #{vit_context_forward.26} parent=5 // pred_region
      %s817 = ssub.s32 %s7, 2
      // Predicated region
      $region33: #{vit_context_forward.26} parent=31 // pred_check
        %p818 = pneg %p62
      $region34: #{vit_context_forward.26} parent=31 // pred_check_branch
        %820 = sbr.rel (%p818) target = $region36
      $region35: #{vit_context_forward.26} parent=31 // pred_region
        %p821 = scmp.lt.s32.totalorder %s13, 1
        %s822 = scalar_select %p821, %s13, 1
        %s823 = smul.addr %s822, 12
        %s824 = smul.addr %s823, 8
        %s825 = scalar_lea.vmem %s1, %s824
      $region36: #{vit_context_forward.26} parent=31 // pred_fallthru
        _
    $region32: #{vit_context_forward.26} parent=5 // pred_fallthru
      _
  $region6: #{vit_context_forward.26} parent=0 // loop_footer
    %s11 = sadd.s32 1, %s7
  $region7: #{vit_context_forward.26} parent=0 // loop_footer_branch
    %6 = sbr.rel target = $region3
  $region8: #{vit_context_forward.26} parent=0 // loop_exit
    _

// kernel: vit_context_forward.39
$region0: #{vit_context_forward.39}
  #allocation0 [shape = 'u32[]', space=smem, size = 0x4, offset = 0x4, fixed_abs, tag = 'smem constant byte address 0x4 - core index']
  #allocation1 [shape = 'u32[144,128]{1,0:T(1,128)}', space=vmem, size = 0x12000, scoped, tag = 'internal scratch']
  #allocation2 [shape = 'f32[2,10]{1,0:T(2,128)}', space=vmem, size = 0x400, scoped, tag = 'scratch operand']
  %s0 = inlined_call_operand.vmem [shape: f32[2,32], index: 0, kind: input, shape index: {}]
  %s1 = inlined_call_operand.vmem [shape: f32[1,32], index: 1, kind: input, shape index: {}]
  %s2 = inlined_call_operand.vmem [shape: f32[1,32], index: 2, kind: input, shape index: {}]
  %s3 = inlined_call_operand.vmem [shape: bf16[32,10], index: 3, kind: input, shape index: {}]
  %s4 = inlined_call_operand.vmem [shape: f32[1,10], index: 4, kind: input, shape index: {}]
  %s5 = inlined_call_operand.hbm [shape: f32[2,10], index: 5, kind: output, shape index: {}]
  %s6 = sld [smem:[#allocation0]]
  $region38: #{vit_context_forward.39} parent=0
    _
  %s8 = ssub.s32 1, %s6
  %s9 = scalar_select 0, %s8, %s6
  $region1: #{vit_context_forward.39} parent=0
    #allocation3 [shape = 'u8[1024]{0}', space=vmem, size = 0x400, scoped, tag = 'output window, operand 0, single buffered']
    #allocation4 [shape = 's32[1]{0}', space=sflag, size = 0x4, scoped, tag = 'scoped memory for vit_context_forward.39']
    %10 = vsyncpa [#allocation4], 0
    // Predicated region
    $region2: #{vit_context_forward.39} parent=1 // pred_check
      _
    $region3: #{vit_context_forward.39} parent=1 // pred_check_branch
      %12 = sbr.rel (0) target = $region5
    $region4: #{vit_context_forward.39} parent=1 // pred_region
      _
    $region5: #{vit_context_forward.39} parent=1 // pred_fallthru
      _
    // Predicated region
    $region6: #{vit_context_forward.39} parent=1 // pred_check
      _
    $region7: #{vit_context_forward.39} parent=1 // pred_check_branch
      %14 = sbr.rel (0) target = $region9
    $region8: #{vit_context_forward.39} parent=1 // pred_region
      _
    $region9: #{vit_context_forward.39} parent=1 // pred_fallthru
      _
    // Predicated region
    $region10: #{vit_context_forward.39} parent=1 // pred_check
      _
    $region11: #{vit_context_forward.39} parent=1 // pred_check_branch
      %16 = sbr.rel (0) target = $region13
    $region12: #{vit_context_forward.39} parent=1 // pred_region
      _
    $region13: #{vit_context_forward.39} parent=1 // pred_fallthru
      _
    // Predicated region
    $region14: #{vit_context_forward.39} parent=1 // pred_check
      _
    $region15: #{vit_context_forward.39} parent=1 // pred_check_branch
      %18 = sbr.rel (0) target = $region17
    $region16: #{vit_context_forward.39} parent=1 // pred_region
      _
    $region17: #{vit_context_forward.39} parent=1 // pred_fallthru
      _
    // Predicated region
    $region18: #{vit_context_forward.39} parent=1 // pred_check
      _
    $region19: #{vit_context_forward.39} parent=1 // pred_check_branch
      %20 = sbr.rel (0) target = $region21
    $region20: #{vit_context_forward.39} parent=1 // pred_region
      _
    $region21: #{vit_context_forward.39} parent=1 // pred_fallthru
      _
    %v22 = vld [vmem:[%s0] sm:$0x3]
    %vm23 = vcmask 254976
    %v24 = vsel %vm23, %v22, 0.0
    %25 = vadd.xlane.f32.xlu0 %v24
    %v26 = vpop.xlane.xlu0 %25
    %v27 = vrcp.pop 32.0
    %v28 = vmul.f32 %v26, %v27
    %v29 = vsub.f32 %v22, %v28
    %v30 = vmul.f32 %v29, %v29
    %v31 = vsel %vm23, %v30, 0.0
    %32 = vadd.xlane.f32.xlu0 %v31
    %v33 = vpop.xlane.xlu0 %32
    %v34 = vmul.f32 %v33, %v27
    %v35 = vadd.f32 %v34, 1e-05
    %v36 = vrsqrt.pop %v35
    %v37 = vmul.f32 %v29, %v36
    %v38 = vld [vmem:[%s1] sm:$0x1]
    %v40 = vlaneseq
    %v41 = vshrl.u32 %v40, 7
    %v42 = vsub.s32 0, %v41
    %v43 = vrot.slane %v38, %v42
    %v45 = vmul.f32 %v37, %v43
    %v46 = vld [vmem:[%s2] sm:$0x1]
    %v48 = vlaneseq
    %v49 = vshrl.u32 %v48, 7
    %v50 = vsub.s32 0, %v49
    %v51 = vrot.slane %v46, %v50
    %v53 = vadd.f32 %v45, %v51
    %p54 = scmp.eq.s32.totalorder 0, 0
    // Predicated region
    $region22: #{vit_context_forward.39} parent=1 // pred_check
      %p55 = pneg %p54
    $region23: #{vit_context_forward.39} parent=1 // pred_check_branch
      %57 = sbr.rel (%p55) target = $region25
    $region24: #{vit_context_forward.39} parent=1 // pred_region
      %v58 = vld [vmem:[%s4] sm:$0x1]
      %v60 = vlaneseq
      %v61 = vshrl.u32 %v60, 7
      %v62 = vsub.s32 0, %v61
      %v63 = vrot.slane %v58, %v62
      %vm65 = vcmask 74752
      %66 = vst.msk [vmem:[#allocation2] sm:$0x3] %vm65, %v63
    $region25: #{vit_context_forward.39} parent=1 // pred_fallthru
      _
    %v67 = vld [vmem:[#allocation2] sm:$0x3]
    %v68 = vpack.c.bf16 %v53, %v53
    %v69 = vld [vmem:[%s3] sm:$0xf]
    %v70 = vld [vmem:[%s3 + $0x4] sm:$0xf]
    %v71 = vld [vmem:[%s3 + $0x8] sm:$0xf]
    %v72 = vld [vmem:[%s3 + $0xc] sm:$0xf]
    %v77 = vunpack.c.l.b16 %v69
    %v78 = vunpack.c.l.b16 %v70
    %v79 = vunpack.c.l.b16 %v71
    %v80 = vunpack.c.l.b16 %v72
    %v81 = vpack.c.b16 %v78, %v77
    %v82 = vpack.c.b16 %v80, %v79
    %vm85 = vcmask 261120
    %v87 = vsel %vm85, %v68, 0
    %89 = vmatprep.subr.bf16.mxu0 0
    %90 = vmatpush1.bf16.msra.mxu0 %v81
    %91 = vmatprep.subr.bf16.mxu0 0
    %92 = vmatpush1.bf16.msra.mxu0 %v82
    %93 = vmatprep.subr.bf16.mxu0 0
    %94 = vmatpush1.bf16.msra.mxu0 0
    %95 = vmatprep.subr.bf16.mxu0 0
    %96 = vmatpush1.bf16.msra.mxu0 0
    %97 = vmatprep.subr.bf16.mxu0 0
    %98 = vmatpush1.bf16.msra.mxu0 0
    %99 = vmatprep.subr.bf16.mxu0 0
    %100 = vmatpush1.bf16.msra.mxu0 0
    %101 = vmatprep.subr.bf16.mxu0 0
    %102 = vmatpush1.bf16.msra.mxu0 0
    %103 = vmatprep.subr.bf16.mxu0 0
    %104 = vmatpush1.bf16.msra.mxu0 0
    %105 = vmatprep.subr.bf16.mxu0 0
    %106 = vmatpush1.bf16.msra.mxu0 0
    %107 = vmatprep.subr.bf16.mxu0 0
    %108 = vmatpush1.bf16.msra.mxu0 0
    %109 = vmatprep.subr.bf16.mxu0 0
    %110 = vmatpush1.bf16.msra.mxu0 0
    %111 = vmatprep.subr.bf16.mxu0 0
    %112 = vmatpush1.bf16.msra.mxu0 0
    %113 = vmatprep.subr.bf16.mxu0 0
    %114 = vmatpush1.bf16.msra.mxu0 0
    %115 = vmatprep.subr.bf16.mxu0 0
    %116 = vmatpush1.bf16.msra.mxu0 0
    %117 = vmatprep.subr.bf16.mxu0 0
    %118 = vmatpush1.bf16.msra.mxu0 0
    %119 = vmatprep.subr.bf16.mxu0 0
    %120 = vmatpush1.bf16.msra.mxu0 0
    %121 = vmatprep.mubr.bf16.mxu0 0
    %122 = vmatmul.mubr.bf16.gmra.mrb[0].mxu0 %v87
    %v123 = vpop.f32.mrb[0].mxu0
    %v124 = vadd.f32 0.0, %v123
    %v125 = vpop.f32.mrb[0].mxu0
    %v126 = vpop.f32.mrb[0].mxu0
    %v127 = vpop.f32.mrb[0].mxu0
    %128 = vdwg.mxu0
    %v129 = vadd.f32 %v67, %v124
    %vm130 = vcmask 74752
    %131 = vst.msk [vmem:[#allocation2] sm:$0x3] %vm130, %v129
    // Predicated region
    $region26: #{vit_context_forward.39} parent=1 // pred_check
      %p132 = pneg %p54
    $region27: #{vit_context_forward.39} parent=1 // pred_check_branch
      %134 = sbr.rel (%p132) target = $region29
    $region28: #{vit_context_forward.39} parent=1 // pred_region
      %v135 = vld [vmem:[#allocation2] sm:$0x3]
      %136 = vst.msk [vmem:[#allocation3] sm:$0x3] %vm130, %v135
    $region29: #{vit_context_forward.39} parent=1 // pred_fallthru
      _
    // Predicated region
    $region30: #{vit_context_forward.39} parent=1 // pred_check
      _
    $region31: #{vit_context_forward.39} parent=1 // pred_check_branch
      %138 = sbr.rel (0) target = $region33
    $region32: #{vit_context_forward.39} parent=1 // pred_region
      %s140 = ssub.s32 32, 32
      %141 = vsyncadd [#allocation4], %s140
      %s143 = sshll.u32 [#allocation3], 4
      %s144 = int_to_ptr.vmem [resolvable:$true] %s143
      %146 = dma.vmem_to_hbm [thread:$0]  %s144, 32, %s5, [#allocation4]
    $region33: #{vit_context_forward.39} parent=1 // pred_fallthru
      _
    // Predicated region
    $region34: #{vit_context_forward.39} parent=1 // pred_check
      _
    $region35: #{vit_context_forward.39} parent=1 // pred_check_branch
      %148 = sbr.rel (0) target = $region37
    $region36: #{vit_context_forward.39} parent=1 // pred_region
      %149 = dma.done [#allocation4], 32
    $region37: #{vit_context_forward.39} parent=1 // pred_fallthru
      _
    %150 = vsyncpa [#allocation4], 1

</llo_original>
